<compile_context>
chip_gen: v7x
topology: tpu7x:2x2x1
jax: 0.10.0
libtpu: 0.0.40
codegen_flags: <defaults>
</compile_context>

<pallas_src>
import jax
import jax.numpy as jnp
import numpy as np
from jax import lax
from jax.experimental import pallas as pl
from jax.experimental.pallas import tpu as pltpu


# ----------------------------------------------------------------------------
# Kernel: 2-layer GRU recurrence + linear head.
# ----------------------------------------------------------------------------
def gru_recurrence_kernel(xp_ref, whbd_ref, wi1_ref, misc_ref, out_ref):
    """Refs:
      xp_ref   : (T, B, 3G) f32  — layer-0 input-side gate pre-acts, biased.
      whbd_ref : (2G, 6G)  bf16  — blockdiag(Wh0, Wh1), gate-padded columns.
      wi1_ref  : (G, 3G)   bf16  — layer-1 input-side weights, gate-padded.
      misc_ref : (4, 3G)   f32   — rows: b0h, b1x, b1h, [wlin | blin | 0].
      out_ref  : (B, G)    f32   — head output broadcast across lanes.
    """
    T, B, G3 = xp_ref.shape
    G = G3 // 3

    # Small params, hoisted out of the time loop.
    b0h = misc_ref[0:1, :]            # [0 | 0 | b_hn]   layer 0      (1, 3G)
    b1x = misc_ref[1:2, :]            # [b_ir+b_hr | b_iz+b_hz | b_in] layer 1
    b1h = misc_ref[2:3, :]            # [0 | 0 | b_hn]   layer 1
    wlin = misc_ref[3:4, :G]          # linear head row (zero-padded) (1, G)
    blin = misc_ref[3:4, G:G + 1]     # linear head bias              (1, 1)

    def sigmoid(x):
        # Single EUP push (tanh) instead of exp + reciprocal.
        return 0.5 * jnp.tanh(0.5 * x) + 0.5

    def cell(gi, gh, h):
        # gi/gh: (B, 3G) biased gate pre-activations, gate blocks are
        # 128-lane aligned so every slice below is a full-vreg VPU op.
        rz = sigmoid(gi[:, :2 * G] + gh[:, :2 * G])   # fused r,z sigmoid
        r = rz[:, :G]
        z = rz[:, G:]
        n = jnp.tanh(gi[:, 2 * G:] + r * gh[:, 2 * G:])
        return (1.0 - z) * n + z * h

    def body(t, hs):
        # hs: (B, 2G) f32 = [h0 | h1] from the previous timestep.
        # Both layers' hidden-side projections in ONE block-diagonal matmul
        # (they depend only on the previous step's states).
        gh_all = jnp.dot(hs.astype(jnp.bfloat16), whbd_ref[...],
                         preferred_element_type=jnp.float32)        # (B, 6G)
        gh0 = gh_all[:, :3 * G] + b0h
        gh1 = gh_all[:, 3 * G:] + b1h
        h0 = cell(xp_ref[t], gh0, hs[:, :G])                        # layer 0
        gi1 = jnp.dot(h0.astype(jnp.bfloat16), wi1_ref[...],
                      preferred_element_type=jnp.float32) + b1x
        h1 = cell(gi1, gh1, hs[:, G:])                              # layer 1
        return jnp.concatenate([h0, h1], axis=1)

    hs0 = jnp.zeros((B, 2 * G), jnp.float32)
    # T is static and small -> full unroll so both layers' chains interleave.
    # TODO(synk): cap the unroll (e.g. unroll=4) if T grows large.
    hs = lax.fori_loop(0, T, body, hs0, unroll=True)

    # Linear head as a VPU/XLU reduction (padded h1 columns and padded wlin
    # entries are zero), written as a lane-dense (B, 128) slab.
    h1 = hs[:, G:]
    y = jnp.sum(h1 * wlin, axis=-1, keepdims=True) + blin            # (B, 1)
    out_ref[...] = jnp.broadcast_to(y, (B, G))


# ----------------------------------------------------------------------------
# Parameter init (PyTorch-style) and packing.
# ----------------------------------------------------------------------------
def init_params(key, input_size, hidden_size):
    """Deterministic PyTorch-style init: U(-1/sqrt(H), 1/sqrt(H))."""
    H = hidden_size
    k = 1.0 / np.sqrt(H)

    def u(kk, shape):
        return jax.random.uniform(kk, shape, jnp.float32, -k, k)

    keys = jax.random.split(key, 10)
    return {
        # (weight_ih, weight_hh, bias_ih, bias_hh) — gate order [r, z, n]
        "l0": (u(keys[0], (3 * H, input_size)), u(keys[1], (3 * H, H)),
               u(keys[2], (3 * H,)), u(keys[3], (3 * H,))),
        "l1": (u(keys[4], (3 * H, H)), u(keys[5], (3 * H, H)),
               u(keys[6], (3 * H,)), u(keys[7], (3 * H,))),
        "lin_w": u(keys[8], (1, H)),
        "lin_b": u(keys[9], (1,)),
    }


def _pad_gate_cols(w3h, H, G):
    """(rows, 3H) with gate columns [r|z|n] -> (rows, 3G), zero-padded gates."""
    r, z, n = jnp.split(w3h, 3, axis=1)
    pad = lambda a: jnp.pad(a, ((0, 0), (0, G - H)))
    return jnp.concatenate([pad(r), pad(z), pad(n)], axis=1)


def _layer_mats(wi, wh, bi, bh, H, G):
    """Fuse PyTorch per-gate params into gate-padded slabs.

      gi = x @ W_i + bx      bx = [b_ir+b_hr | b_iz+b_hz | b_in]
      gh = h @ W_h + bh_row  bh_row = [0 | 0 | b_hn]
    All gate blocks padded to G (=128) lanes with zeros.
    """
    wi_t = _pad_gate_cols(jnp.asarray(wi, jnp.float32).T, H, G)   # (in, 3G)
    wh_t = _pad_gate_cols(jnp.asarray(wh, jnp.float32).T, H, G)   # (H, 3G)
    wh_t = jnp.pad(wh_t, ((0, G - H), (0, 0)))                    # (G, 3G)
    bi_r, bi_z, bi_n = jnp.split(jnp.asarray(bi, jnp.float32), 3)
    bh_r, bh_z, bh_n = jnp.split(jnp.asarray(bh, jnp.float32), 3)
    pad1 = lambda a: jnp.pad(a, (0, G - H))
    bx = jnp.concatenate([pad1(bi_r + bh_r), pad1(bi_z + bh_z), pad1(bi_n)])
    bh_row = jnp.concatenate([jnp.zeros((2 * G,), jnp.float32), pad1(bh_n)])
    return wi_t, wh_t, bx, bh_row


# ----------------------------------------------------------------------------
# Wrapper
# ----------------------------------------------------------------------------
def gru_model_forward(x, params, hidden_size):
    """x: (B, T, I) batch_first float32, like the PyTorch module."""
    B, T, I = x.shape
    H = hidden_size
    G = ((H + 127) // 128) * 128          # gate block padded to lane tiles
    B_pad = max(8, ((B + 7) // 8) * 8)    # full sublane group

    wi0_t, wh0_t, b0x, b0h = _layer_mats(*params["l0"], H, G)   # wi0: (I, 3G)
    wi1_t, wh1_t, b1x, b1h = _layer_mats(*params["l1"], H, G)   # wi1: (H, 3G)
    wi1_t = jnp.pad(wi1_t, ((0, G - H), (0, 0)))                # (G, 3G)

    # Block-diagonal hidden-side weights covering both layers (bf16 operands).
    wh_bd = jnp.zeros((2 * G, 6 * G), jnp.float32)
    wh_bd = wh_bd.at[:G, :3 * G].set(wh0_t)
    wh_bd = wh_bd.at[G:, 3 * G:].set(wh1_t)
    wh_bd = wh_bd.astype(jnp.bfloat16)
    wi1_bf = wi1_t.astype(jnp.bfloat16)

    # Misc slab: bias rows + linear head, one VMEM input.
    wlin_row = jnp.pad(params["lin_w"].astype(jnp.float32)[0], (0, G - H))
    misc = jnp.zeros((4, 3 * G), jnp.float32)
    misc = misc.at[0].set(b0h)
    misc = misc.at[1].set(b1x)
    misc = misc.at[2].set(b1h)
    misc = misc.at[3, :G].set(wlin_row)
    misc = misc.at[3, G].set(params["lin_b"].astype(jnp.float32)[0])

    # Layer-0 input projection for ALL timesteps in the wrapper (off the
    # critical path, keeps the lane-sparse x reshape out of the kernel).
    x_tm = jnp.transpose(x, (1, 0, 2)).astype(jnp.float32)        # (T, B, I)
    if B_pad != B:
        x_tm = jnp.pad(x_tm, ((0, 0), (0, B_pad - B), (0, 0)))
    xproj0 = jnp.einsum("tbi,ig->tbg", x_tm, wi0_t) + b0x         # (T,Bp,3G)

    args = (xproj0, wh_bd, wi1_bf, misc)
    in_specs = [pl.BlockSpec(memory_space=pltpu.MemorySpace.VMEM)
                for _ in args]

    out = pl.pallas_call(
        gru_recurrence_kernel,
        out_shape=jax.ShapeDtypeStruct((B_pad, G), jnp.float32),
        in_specs=in_specs,
        out_specs=pl.BlockSpec(memory_space=pltpu.MemorySpace.VMEM),
    )(*args)
    return out[:B, :1]


# ----------------------------------------------------------------------------
# Pure-JAX f32 reference (faithful to the PyTorch module) for verification.
# ----------------------------------------------------------------------------
def reference_forward(x, params):
    def run_layer(inp, wi, wh, bi, bh):
        B, T, _ = inp.shape
        H = wh.shape[1]
        h = jnp.zeros((B, H), jnp.float32)
        outs = []
        for t in range(T):
            gi = inp[:, t, :] @ wi.T + bi
            gh = h @ wh.T + bh
            i_r, i_z, i_n = jnp.split(gi, 3, axis=1)
            h_r, h_z, h_n = jnp.split(gh, 3, axis=1)
            r = jax.nn.sigmoid(i_r + h_r)
            z = jax.nn.sigmoid(i_z + h_z)
            n = jnp.tanh(i_n + r * h_n)
            h = (1.0 - z) * n + z * h
            outs.append(h)
        return jnp.stack(outs, axis=1)

    out0 = run_layer(x, *params["l0"])
    out1 = run_layer(out0, *params["l1"])
    return out1[:, -1, :] @ params["lin_w"].T + params["lin_b"]


if __name__ == "__main__":
    # Small shapes consistent with the module (input_size/hidden_size kept
    # TPU-friendly; identical semantics to the PyTorch forward).
    batch, seq_len, input_size, hidden_size = 2, 8, 4, 32

    key = jax.random.PRNGKey(0)
    kx, kp = jax.random.split(key)
    x = jax.random.normal(kx, (batch, seq_len, input_size), jnp.float32)
    params = init_params(kp, input_size, hidden_size)

    out = gru_model_forward(x, params, hidden_size)
    out = jax.block_until_ready(out)

    ref = reference_forward(x, params)
    assert out.shape == (batch, 1), out.shape
    # Tolerance loosened vs the pure-f32 version: MXU operands are bf16
    # (accumulation and all elementwise math remain f32).
    np.testing.assert_allclose(np.asarray(out), np.asarray(ref),
                               rtol=3e-2, atol=3e-2)
    print("KERNEL_OK")
</pallas_src>

<mosaic_0001>
module attributes {stable_mosaic.version = 11 : i64} {
  func.func @gru_recurrence_kernel(%arg0: memref<8x8x384xf32, #tpu.memory_space<vmem>>, %arg1: memref<256x768xbf16, #tpu.memory_space<vmem>>, %arg2: memref<128x384xbf16, #tpu.memory_space<vmem>>, %arg3: memref<4x384xf32, #tpu.memory_space<vmem>>, %arg4: memref<8x128xf32, #tpu.memory_space<vmem>>) attributes {dimension_semantics = [], scalar_prefetch = 0 : i64, scratch_operands = 0 : i64, tpu.core_type = #tpu.core_type<tc>} {
    %c0 = arith.constant 0 : index
    %c0_0 = arith.constant 0 : index
    %0 = vector.load %arg3[%c0, %c0_0] : memref<4x384xf32, #tpu.memory_space<vmem>>, vector<1x384xf32>
    %c1 = arith.constant 1 : index
    %c0_1 = arith.constant 0 : index
    %1 = vector.load %arg3[%c1, %c0_1] : memref<4x384xf32, #tpu.memory_space<vmem>>, vector<1x384xf32>
    %c2 = arith.constant 2 : index
    %c0_2 = arith.constant 0 : index
    %2 = vector.load %arg3[%c2, %c0_2] : memref<4x384xf32, #tpu.memory_space<vmem>>, vector<1x384xf32>
    %c3 = arith.constant 3 : index
    %c0_3 = arith.constant 0 : index
    %3 = vector.load %arg3[%c3, %c0_3] : memref<4x384xf32, #tpu.memory_space<vmem>>, vector<1x128xf32>
    %c3_4 = arith.constant 3 : index
    %c128 = arith.constant 128 : index
    %4 = vector.load %arg3[%c3_4, %c128] : memref<4x384xf32, #tpu.memory_space<vmem>>, vector<1x1xf32>
    %cst = arith.constant 0.000000e+00 : f32
    %5 = vector.broadcast %cst : f32 to vector<8x256xf32>
    %c0_i32 = arith.constant 0 : i32
    %6 = arith.truncf %5 : vector<8x256xf32> to vector<8x256xbf16>
    %c0_5 = arith.constant 0 : index
    %c0_6 = arith.constant 0 : index
    %7 = vector.load %arg1[%c0_5, %c0_6] : memref<256x768xbf16, #tpu.memory_space<vmem>>, vector<256x768xbf16>
    %cst_7 = arith.constant dense<0.000000e+00> : vector<8x768xf32>
    %8 = tpu.matmul %6, %7, %cst_7 {dimension_numbers = #tpu.dot_dimension_numbers<[1], [0], [0], [1], [0, 0, 1, 1], [], []>} : vector<8x256xbf16>, vector<256x768xbf16>, vector<8x768xf32> -> vector<8x768xf32>
    %9 = vector.extract_strided_slice %8 {offsets = [0, 0], sizes = [8, 384], strides = [1, 1]} : vector<8x768xf32> to vector<8x384xf32>
    %10 = vector.broadcast %0 : vector<1x384xf32> to vector<8x384xf32>
    %11 = arith.addf %9, %10 : vector<8x384xf32>
    %12 = vector.extract_strided_slice %8 {offsets = [0, 384], sizes = [8, 384], strides = [1, 1]} : vector<8x768xf32> to vector<8x384xf32>
    %13 = vector.broadcast %2 : vector<1x384xf32> to vector<8x384xf32>
    %14 = arith.addf %12, %13 : vector<8x384xf32>
    %15 = arith.index_cast %c0_i32 : i32 to index
    %c0_8 = arith.constant 0 : index
    %c0_9 = arith.constant 0 : index
    %16 = vector.load %arg0[%15, %c0_8, %c0_9] : memref<8x8x384xf32, #tpu.memory_space<vmem>>, vector<1x8x384xf32>
    %17 = vector.shape_cast %16 : vector<1x8x384xf32> to vector<8x384xf32>
    %18 = vector.extract_strided_slice %5 {offsets = [0, 0], sizes = [8, 128], strides = [1, 1]} : vector<8x256xf32> to vector<8x128xf32>
    %19 = vector.extract_strided_slice %17 {offsets = [0, 0], sizes = [8, 256], strides = [1, 1]} : vector<8x384xf32> to vector<8x256xf32>
    %20 = vector.extract_strided_slice %11 {offsets = [0, 0], sizes = [8, 256], strides = [1, 1]} : vector<8x384xf32> to vector<8x256xf32>
    %21 = arith.addf %19, %20 : vector<8x256xf32>
    %cst_10 = arith.constant 5.000000e-01 : f32
    %22 = vector.broadcast %cst_10 : f32 to vector<8x256xf32>
    %23 = arith.mulf %22, %21 : vector<8x256xf32>
    %24 = math.tanh %23 : vector<8x256xf32>
    %cst_11 = arith.constant 5.000000e-01 : f32
    %25 = vector.broadcast %cst_11 : f32 to vector<8x256xf32>
    %26 = arith.mulf %25, %24 : vector<8x256xf32>
    %cst_12 = arith.constant 5.000000e-01 : f32
    %27 = vector.broadcast %cst_12 : f32 to vector<8x256xf32>
    %28 = arith.addf %26, %27 : vector<8x256xf32>
    %29 = vector.extract_strided_slice %28 {offsets = [0, 0], sizes = [8, 128], strides = [1, 1]} : vector<8x256xf32> to vector<8x128xf32>
    %30 = vector.extract_strided_slice %28 {offsets = [0, 128], sizes = [8, 128], strides = [1, 1]} : vector<8x256xf32> to vector<8x128xf32>
    %31 = vector.extract_strided_slice %17 {offsets = [0, 256], sizes = [8, 128], strides = [1, 1]} : vector<8x384xf32> to vector<8x128xf32>
    %32 = vector.extract_strided_slice %11 {offsets = [0, 256], sizes = [8, 128], strides = [1, 1]} : vector<8x384xf32> to vector<8x128xf32>
    %33 = arith.mulf %29, %32 : vector<8x128xf32>
    %34 = arith.addf %31, %33 : vector<8x128xf32>
    %35 = math.tanh %34 : vector<8x128xf32>
    %cst_13 = arith.constant 1.000000e+00 : f32
    %36 = vector.broadcast %cst_13 : f32 to vector<8x128xf32>
    %37 = arith.subf %36, %30 : vector<8x128xf32>
    %38 = arith.mulf %37, %35 : vector<8x128xf32>
    %39 = arith.mulf %30, %18 : vector<8x128xf32>
    %40 = arith.addf %38, %39 : vector<8x128xf32>
    %41 = arith.truncf %40 : vector<8x128xf32> to vector<8x128xbf16>
    %c0_14 = arith.constant 0 : index
    %c0_15 = arith.constant 0 : index
    %42 = vector.load %arg2[%c0_14, %c0_15] : memref<128x384xbf16, #tpu.memory_space<vmem>>, vector<128x384xbf16>
    %cst_16 = arith.constant dense<0.000000e+00> : vector<8x384xf32>
    %43 = tpu.matmul %41, %42, %cst_16 {dimension_numbers = #tpu.dot_dimension_numbers<[1], [0], [0], [1], [0, 0, 1, 1], [], []>} : vector<8x128xbf16>, vector<128x384xbf16>, vector<8x384xf32> -> vector<8x384xf32>
    %44 = vector.broadcast %1 : vector<1x384xf32> to vector<8x384xf32>
    %45 = arith.addf %43, %44 : vector<8x384xf32>
    %46 = vector.extract_strided_slice %5 {offsets = [0, 128], sizes = [8, 128], strides = [1, 1]} : vector<8x256xf32> to vector<8x128xf32>
    %47 = vector.extract_strided_slice %45 {offsets = [0, 0], sizes = [8, 256], strides = [1, 1]} : vector<8x384xf32> to vector<8x256xf32>
    %48 = vector.extract_strided_slice %14 {offsets = [0, 0], sizes = [8, 256], strides = [1, 1]} : vector<8x384xf32> to vector<8x256xf32>
    %49 = arith.addf %47, %48 : vector<8x256xf32>
    %cst_17 = arith.constant 5.000000e-01 : f32
    %50 = vector.broadcast %cst_17 : f32 to vector<8x256xf32>
    %51 = arith.mulf %50, %49 : vector<8x256xf32>
    %52 = math.tanh %51 : vector<8x256xf32>
    %cst_18 = arith.constant 5.000000e-01 : f32
    %53 = vector.broadcast %cst_18 : f32 to vector<8x256xf32>
    %54 = arith.mulf %53, %52 : vector<8x256xf32>
    %cst_19 = arith.constant 5.000000e-01 : f32
    %55 = vector.broadcast %cst_19 : f32 to vector<8x256xf32>
    %56 = arith.addf %54, %55 : vector<8x256xf32>
    %57 = vector.extract_strided_slice %56 {offsets = [0, 0], sizes = [8, 128], strides = [1, 1]} : vector<8x256xf32> to vector<8x128xf32>
    %58 = vector.extract_strided_slice %56 {offsets = [0, 128], sizes = [8, 128], strides = [1, 1]} : vector<8x256xf32> to vector<8x128xf32>
    %59 = vector.extract_strided_slice %45 {offsets = [0, 256], sizes = [8, 128], strides = [1, 1]} : vector<8x384xf32> to vector<8x128xf32>
    %60 = vector.extract_strided_slice %14 {offsets = [0, 256], sizes = [8, 128], strides = [1, 1]} : vector<8x384xf32> to vector<8x128xf32>
    %61 = arith.mulf %57, %60 : vector<8x128xf32>
    %62 = arith.addf %59, %61 : vector<8x128xf32>
    %63 = math.tanh %62 : vector<8x128xf32>
    %cst_20 = arith.constant 1.000000e+00 : f32
    %64 = vector.broadcast %cst_20 : f32 to vector<8x128xf32>
    %65 = arith.subf %64, %58 : vector<8x128xf32>
    %66 = arith.mulf %65, %63 : vector<8x128xf32>
    %67 = arith.mulf %58, %46 : vector<8x128xf32>
    %68 = arith.addf %66, %67 : vector<8x128xf32>
    %69 = tpu.concatenate %40, %68 in 1 : vector<8x128xf32>, vector<8x128xf32> -> vector<8x256xf32>
    %c1_i32 = arith.constant 1 : i32
    %70 = arith.truncf %69 : vector<8x256xf32> to vector<8x256xbf16>
    %c0_21 = arith.constant 0 : index
    %c0_22 = arith.constant 0 : index
    %71 = vector.load %arg1[%c0_21, %c0_22] : memref<256x768xbf16, #tpu.memory_space<vmem>>, vector<256x768xbf16>
    %cst_23 = arith.constant dense<0.000000e+00> : vector<8x768xf32>
    %72 = tpu.matmul %70, %71, %cst_23 {dimension_numbers = #tpu.dot_dimension_numbers<[1], [0], [0], [1], [0, 0, 1, 1], [], []>} : vector<8x256xbf16>, vector<256x768xbf16>, vector<8x768xf32> -> vector<8x768xf32>
    %73 = vector.extract_strided_slice %72 {offsets = [0, 0], sizes = [8, 384], strides = [1, 1]} : vector<8x768xf32> to vector<8x384xf32>
    %74 = vector.broadcast %0 : vector<1x384xf32> to vector<8x384xf32>
    %75 = arith.addf %73, %74 : vector<8x384xf32>
    %76 = vector.extract_strided_slice %72 {offsets = [0, 384], sizes = [8, 384], strides = [1, 1]} : vector<8x768xf32> to vector<8x384xf32>
    %77 = vector.broadcast %2 : vector<1x384xf32> to vector<8x384xf32>
    %78 = arith.addf %76, %77 : vector<8x384xf32>
    %79 = arith.index_cast %c1_i32 : i32 to index
    %c0_24 = arith.constant 0 : index
    %c0_25 = arith.constant 0 : index
    %80 = vector.load %arg0[%79, %c0_24, %c0_25] : memref<8x8x384xf32, #tpu.memory_space<vmem>>, vector<1x8x384xf32>
    %81 = vector.shape_cast %80 : vector<1x8x384xf32> to vector<8x384xf32>
    %82 = vector.extract_strided_slice %69 {offsets = [0, 0], sizes = [8, 128], strides = [1, 1]} : vector<8x256xf32> to vector<8x128xf32>
    %83 = vector.extract_strided_slice %81 {offsets = [0, 0], sizes = [8, 256], strides = [1, 1]} : vector<8x384xf32> to vector<8x256xf32>
    %84 = vector.extract_strided_slice %75 {offsets = [0, 0], sizes = [8, 256], strides = [1, 1]} : vector<8x384xf32> to vector<8x256xf32>
    %85 = arith.addf %83, %84 : vector<8x256xf32>
    %cst_26 = arith.constant 5.000000e-01 : f32
    %86 = vector.broadcast %cst_26 : f32 to vector<8x256xf32>
    %87 = arith.mulf %86, %85 : vector<8x256xf32>
    %88 = math.tanh %87 : vector<8x256xf32>
    %cst_27 = arith.constant 5.000000e-01 : f32
    %89 = vector.broadcast %cst_27 : f32 to vector<8x256xf32>
    %90 = arith.mulf %89, %88 : vector<8x256xf32>
    %cst_28 = arith.constant 5.000000e-01 : f32
    %91 = vector.broadcast %cst_28 : f32 to vector<8x256xf32>
    %92 = arith.addf %90, %91 : vector<8x256xf32>
    %93 = vector.extract_strided_slice %92 {offsets = [0, 0], sizes = [8, 128], strides = [1, 1]} : vector<8x256xf32> to vector<8x128xf32>
    %94 = vector.extract_strided_slice %92 {offsets = [0, 128], sizes = [8, 128], strides = [1, 1]} : vector<8x256xf32> to vector<8x128xf32>
    %95 = vector.extract_strided_slice %81 {offsets = [0, 256], sizes = [8, 128], strides = [1, 1]} : vector<8x384xf32> to vector<8x128xf32>
    %96 = vector.extract_strided_slice %75 {offsets = [0, 256], sizes = [8, 128], strides = [1, 1]} : vector<8x384xf32> to vector<8x128xf32>
    %97 = arith.mulf %93, %96 : vector<8x128xf32>
    %98 = arith.addf %95, %97 : vector<8x128xf32>
    %99 = math.tanh %98 : vector<8x128xf32>
    %cst_29 = arith.constant 1.000000e+00 : f32
    %100 = vector.broadcast %cst_29 : f32 to vector<8x128xf32>
    %101 = arith.subf %100, %94 : vector<8x128xf32>
    %102 = arith.mulf %101, %99 : vector<8x128xf32>
    %103 = arith.mulf %94, %82 : vector<8x128xf32>
    %104 = arith.addf %102, %103 : vector<8x128xf32>
    %105 = arith.truncf %104 : vector<8x128xf32> to vector<8x128xbf16>
    %c0_30 = arith.constant 0 : index
    %c0_31 = arith.constant 0 : index
    %106 = vector.load %arg2[%c0_30, %c0_31] : memref<128x384xbf16, #tpu.memory_space<vmem>>, vector<128x384xbf16>
    %cst_32 = arith.constant dense<0.000000e+00> : vector<8x384xf32>
    %107 = tpu.matmul %105, %106, %cst_32 {dimension_numbers = #tpu.dot_dimension_numbers<[1], [0], [0], [1], [0, 0, 1, 1], [], []>} : vector<8x128xbf16>, vector<128x384xbf16>, vector<8x384xf32> -> vector<8x384xf32>
    %108 = vector.broadcast %1 : vector<1x384xf32> to vector<8x384xf32>
    %109 = arith.addf %107, %108 : vector<8x384xf32>
    %110 = vector.extract_strided_slice %69 {offsets = [0, 128], sizes = [8, 128], strides = [1, 1]} : vector<8x256xf32> to vector<8x128xf32>
    %111 = vector.extract_strided_slice %109 {offsets = [0, 0], sizes = [8, 256], strides = [1, 1]} : vector<8x384xf32> to vector<8x256xf32>
    %112 = vector.extract_strided_slice %78 {offsets = [0, 0], sizes = [8, 256], strides = [1, 1]} : vector<8x384xf32> to vector<8x256xf32>
    %113 = arith.addf %111, %112 : vector<8x256xf32>
    %cst_33 = arith.constant 5.000000e-01 : f32
    %114 = vector.broadcast %cst_33 : f32 to vector<8x256xf32>
    %115 = arith.mulf %114, %113 : vector<8x256xf32>
    %116 = math.tanh %115 : vector<8x256xf32>
    %cst_34 = arith.constant 5.000000e-01 : f32
    %117 = vector.broadcast %cst_34 : f32 to vector<8x256xf32>
    %118 = arith.mulf %117, %116 : vector<8x256xf32>
    %cst_35 = arith.constant 5.000000e-01 : f32
    %119 = vector.broadcast %cst_35 : f32 to vector<8x256xf32>
    %120 = arith.addf %118, %119 : vector<8x256xf32>
    %121 = vector.extract_strided_slice %120 {offsets = [0, 0], sizes = [8, 128], strides = [1, 1]} : vector<8x256xf32> to vector<8x128xf32>
    %122 = vector.extract_strided_slice %120 {offsets = [0, 128], sizes = [8, 128], strides = [1, 1]} : vector<8x256xf32> to vector<8x128xf32>
    %123 = vector.extract_strided_slice %109 {offsets = [0, 256], sizes = [8, 128], strides = [1, 1]} : vector<8x384xf32> to vector<8x128xf32>
    %124 = vector.extract_strided_slice %78 {offsets = [0, 256], sizes = [8, 128], strides = [1, 1]} : vector<8x384xf32> to vector<8x128xf32>
    %125 = arith.mulf %121, %124 : vector<8x128xf32>
    %126 = arith.addf %123, %125 : vector<8x128xf32>
    %127 = math.tanh %126 : vector<8x128xf32>
    %cst_36 = arith.constant 1.000000e+00 : f32
    %128 = vector.broadcast %cst_36 : f32 to vector<8x128xf32>
    %129 = arith.subf %128, %122 : vector<8x128xf32>
    %130 = arith.mulf %129, %127 : vector<8x128xf32>
    %131 = arith.mulf %122, %110 : vector<8x128xf32>
    %132 = arith.addf %130, %131 : vector<8x128xf32>
    %133 = tpu.concatenate %104, %132 in 1 : vector<8x128xf32>, vector<8x128xf32> -> vector<8x256xf32>
    %c2_i32 = arith.constant 2 : i32
    %134 = arith.truncf %133 : vector<8x256xf32> to vector<8x256xbf16>
    %c0_37 = arith.constant 0 : index
    %c0_38 = arith.constant 0 : index
    %135 = vector.load %arg1[%c0_37, %c0_38] : memref<256x768xbf16, #tpu.memory_space<vmem>>, vector<256x768xbf16>
    %cst_39 = arith.constant dense<0.000000e+00> : vector<8x768xf32>
    %136 = tpu.matmul %134, %135, %cst_39 {dimension_numbers = #tpu.dot_dimension_numbers<[1], [0], [0], [1], [0, 0, 1, 1], [], []>} : vector<8x256xbf16>, vector<256x768xbf16>, vector<8x768xf32> -> vector<8x768xf32>
    %137 = vector.extract_strided_slice %136 {offsets = [0, 0], sizes = [8, 384], strides = [1, 1]} : vector<8x768xf32> to vector<8x384xf32>
    %138 = vector.broadcast %0 : vector<1x384xf32> to vector<8x384xf32>
    %139 = arith.addf %137, %138 : vector<8x384xf32>
    %140 = vector.extract_strided_slice %136 {offsets = [0, 384], sizes = [8, 384], strides = [1, 1]} : vector<8x768xf32> to vector<8x384xf32>
    %141 = vector.broadcast %2 : vector<1x384xf32> to vector<8x384xf32>
    %142 = arith.addf %140, %141 : vector<8x384xf32>
    %143 = arith.index_cast %c2_i32 : i32 to index
    %c0_40 = arith.constant 0 : index
    %c0_41 = arith.constant 0 : index
    %144 = vector.load %arg0[%143, %c0_40, %c0_41] : memref<8x8x384xf32, #tpu.memory_space<vmem>>, vector<1x8x384xf32>
    %145 = vector.shape_cast %144 : vector<1x8x384xf32> to vector<8x384xf32>
    %146 = vector.extract_strided_slice %133 {offsets = [0, 0], sizes = [8, 128], strides = [1, 1]} : vector<8x256xf32> to vector<8x128xf32>
    %147 = vector.extract_strided_slice %145 {offsets = [0, 0], sizes = [8, 256], strides = [1, 1]} : vector<8x384xf32> to vector<8x256xf32>
    %148 = vector.extract_strided_slice %139 {offsets = [0, 0], sizes = [8, 256], strides = [1, 1]} : vector<8x384xf32> to vector<8x256xf32>
    %149 = arith.addf %147, %148 : vector<8x256xf32>
    %cst_42 = arith.constant 5.000000e-01 : f32
    %150 = vector.broadcast %cst_42 : f32 to vector<8x256xf32>
    %151 = arith.mulf %150, %149 : vector<8x256xf32>
    %152 = math.tanh %151 : vector<8x256xf32>
    %cst_43 = arith.constant 5.000000e-01 : f32
    %153 = vector.broadcast %cst_43 : f32 to vector<8x256xf32>
    %154 = arith.mulf %153, %152 : vector<8x256xf32>
    %cst_44 = arith.constant 5.000000e-01 : f32
    %155 = vector.broadcast %cst_44 : f32 to vector<8x256xf32>
    %156 = arith.addf %154, %155 : vector<8x256xf32>
    %157 = vector.extract_strided_slice %156 {offsets = [0, 0], sizes = [8, 128], strides = [1, 1]} : vector<8x256xf32> to vector<8x128xf32>
    %158 = vector.extract_strided_slice %156 {offsets = [0, 128], sizes = [8, 128], strides = [1, 1]} : vector<8x256xf32> to vector<8x128xf32>
    %159 = vector.extract_strided_slice %145 {offsets = [0, 256], sizes = [8, 128], strides = [1, 1]} : vector<8x384xf32> to vector<8x128xf32>
    %160 = vector.extract_strided_slice %139 {offsets = [0, 256], sizes = [8, 128], strides = [1, 1]} : vector<8x384xf32> to vector<8x128xf32>
    %161 = arith.mulf %157, %160 : vector<8x128xf32>
    %162 = arith.addf %159, %161 : vector<8x128xf32>
    %163 = math.tanh %162 : vector<8x128xf32>
    %cst_45 = arith.constant 1.000000e+00 : f32
    %164 = vector.broadcast %cst_45 : f32 to vector<8x128xf32>
    %165 = arith.subf %164, %158 : vector<8x128xf32>
    %166 = arith.mulf %165, %163 : vector<8x128xf32>
    %167 = arith.mulf %158, %146 : vector<8x128xf32>
    %168 = arith.addf %166, %167 : vector<8x128xf32>
    %169 = arith.truncf %168 : vector<8x128xf32> to vector<8x128xbf16>
    %c0_46 = arith.constant 0 : index
    %c0_47 = arith.constant 0 : index
    %170 = vector.load %arg2[%c0_46, %c0_47] : memref<128x384xbf16, #tpu.memory_space<vmem>>, vector<128x384xbf16>
    %cst_48 = arith.constant dense<0.000000e+00> : vector<8x384xf32>
    %171 = tpu.matmul %169, %170, %cst_48 {dimension_numbers = #tpu.dot_dimension_numbers<[1], [0], [0], [1], [0, 0, 1, 1], [], []>} : vector<8x128xbf16>, vector<128x384xbf16>, vector<8x384xf32> -> vector<8x384xf32>
    %172 = vector.broadcast %1 : vector<1x384xf32> to vector<8x384xf32>
    %173 = arith.addf %171, %172 : vector<8x384xf32>
    %174 = vector.extract_strided_slice %133 {offsets = [0, 128], sizes = [8, 128], strides = [1, 1]} : vector<8x256xf32> to vector<8x128xf32>
    %175 = vector.extract_strided_slice %173 {offsets = [0, 0], sizes = [8, 256], strides = [1, 1]} : vector<8x384xf32> to vector<8x256xf32>
    %176 = vector.extract_strided_slice %142 {offsets = [0, 0], sizes = [8, 256], strides = [1, 1]} : vector<8x384xf32> to vector<8x256xf32>
    %177 = arith.addf %175, %176 : vector<8x256xf32>
    %cst_49 = arith.constant 5.000000e-01 : f32
    %178 = vector.broadcast %cst_49 : f32 to vector<8x256xf32>
    %179 = arith.mulf %178, %177 : vector<8x256xf32>
    %180 = math.tanh %179 : vector<8x256xf32>
    %cst_50 = arith.constant 5.000000e-01 : f32
    %181 = vector.broadcast %cst_50 : f32 to vector<8x256xf32>
    %182 = arith.mulf %181, %180 : vector<8x256xf32>
    %cst_51 = arith.constant 5.000000e-01 : f32
    %183 = vector.broadcast %cst_51 : f32 to vector<8x256xf32>
    %184 = arith.addf %182, %183 : vector<8x256xf32>
    %185 = vector.extract_strided_slice %184 {offsets = [0, 0], sizes = [8, 128], strides = [1, 1]} : vector<8x256xf32> to vector<8x128xf32>
    %186 = vector.extract_strided_slice %184 {offsets = [0, 128], sizes = [8, 128], strides = [1, 1]} : vector<8x256xf32> to vector<8x128xf32>
    %187 = vector.extract_strided_slice %173 {offsets = [0, 256], sizes = [8, 128], strides = [1, 1]} : vector<8x384xf32> to vector<8x128xf32>
    %188 = vector.extract_strided_slice %142 {offsets = [0, 256], sizes = [8, 128], strides = [1, 1]} : vector<8x384xf32> to vector<8x128xf32>
    %189 = arith.mulf %185, %188 : vector<8x128xf32>
    %190 = arith.addf %187, %189 : vector<8x128xf32>
    %191 = math.tanh %190 : vector<8x128xf32>
    %cst_52 = arith.constant 1.000000e+00 : f32
    %192 = vector.broadcast %cst_52 : f32 to vector<8x128xf32>
    %193 = arith.subf %192, %186 : vector<8x128xf32>
    %194 = arith.mulf %193, %191 : vector<8x128xf32>
    %195 = arith.mulf %186, %174 : vector<8x128xf32>
    %196 = arith.addf %194, %195 : vector<8x128xf32>
    %197 = tpu.concatenate %168, %196 in 1 : vector<8x128xf32>, vector<8x128xf32> -> vector<8x256xf32>
    %c3_i32 = arith.constant 3 : i32
    %198 = arith.truncf %197 : vector<8x256xf32> to vector<8x256xbf16>
    %c0_53 = arith.constant 0 : index
    %c0_54 = arith.constant 0 : index
    %199 = vector.load %arg1[%c0_53, %c0_54] : memref<256x768xbf16, #tpu.memory_space<vmem>>, vector<256x768xbf16>
    %cst_55 = arith.constant dense<0.000000e+00> : vector<8x768xf32>
    %200 = tpu.matmul %198, %199, %cst_55 {dimension_numbers = #tpu.dot_dimension_numbers<[1], [0], [0], [1], [0, 0, 1, 1], [], []>} : vector<8x256xbf16>, vector<256x768xbf16>, vector<8x768xf32> -> vector<8x768xf32>
    %201 = vector.extract_strided_slice %200 {offsets = [0, 0], sizes = [8, 384], strides = [1, 1]} : vector<8x768xf32> to vector<8x384xf32>
    %202 = vector.broadcast %0 : vector<1x384xf32> to vector<8x384xf32>
    %203 = arith.addf %201, %202 : vector<8x384xf32>
    %204 = vector.extract_strided_slice %200 {offsets = [0, 384], sizes = [8, 384], strides = [1, 1]} : vector<8x768xf32> to vector<8x384xf32>
    %205 = vector.broadcast %2 : vector<1x384xf32> to vector<8x384xf32>
    %206 = arith.addf %204, %205 : vector<8x384xf32>
    %207 = arith.index_cast %c3_i32 : i32 to index
    %c0_56 = arith.constant 0 : index
    %c0_57 = arith.constant 0 : index
    %208 = vector.load %arg0[%207, %c0_56, %c0_57] : memref<8x8x384xf32, #tpu.memory_space<vmem>>, vector<1x8x384xf32>
    %209 = vector.shape_cast %208 : vector<1x8x384xf32> to vector<8x384xf32>
    %210 = vector.extract_strided_slice %197 {offsets = [0, 0], sizes = [8, 128], strides = [1, 1]} : vector<8x256xf32> to vector<8x128xf32>
    %211 = vector.extract_strided_slice %209 {offsets = [0, 0], sizes = [8, 256], strides = [1, 1]} : vector<8x384xf32> to vector<8x256xf32>
    %212 = vector.extract_strided_slice %203 {offsets = [0, 0], sizes = [8, 256], strides = [1, 1]} : vector<8x384xf32> to vector<8x256xf32>
    %213 = arith.addf %211, %212 : vector<8x256xf32>
    %cst_58 = arith.constant 5.000000e-01 : f32
    %214 = vector.broadcast %cst_58 : f32 to vector<8x256xf32>
    %215 = arith.mulf %214, %213 : vector<8x256xf32>
    %216 = math.tanh %215 : vector<8x256xf32>
    %cst_59 = arith.constant 5.000000e-01 : f32
    %217 = vector.broadcast %cst_59 : f32 to vector<8x256xf32>
    %218 = arith.mulf %217, %216 : vector<8x256xf32>
    %cst_60 = arith.constant 5.000000e-01 : f32
    %219 = vector.broadcast %cst_60 : f32 to vector<8x256xf32>
    %220 = arith.addf %218, %219 : vector<8x256xf32>
    %221 = vector.extract_strided_slice %220 {offsets = [0, 0], sizes = [8, 128], strides = [1, 1]} : vector<8x256xf32> to vector<8x128xf32>
    %222 = vector.extract_strided_slice %220 {offsets = [0, 128], sizes = [8, 128], strides = [1, 1]} : vector<8x256xf32> to vector<8x128xf32>
    %223 = vector.extract_strided_slice %209 {offsets = [0, 256], sizes = [8, 128], strides = [1, 1]} : vector<8x384xf32> to vector<8x128xf32>
    %224 = vector.extract_strided_slice %203 {offsets = [0, 256], sizes = [8, 128], strides = [1, 1]} : vector<8x384xf32> to vector<8x128xf32>
    %225 = arith.mulf %221, %224 : vector<8x128xf32>
    %226 = arith.addf %223, %225 : vector<8x128xf32>
    %227 = math.tanh %226 : vector<8x128xf32>
    %cst_61 = arith.constant 1.000000e+00 : f32
    %228 = vector.broadcast %cst_61 : f32 to vector<8x128xf32>
    %229 = arith.subf %228, %222 : vector<8x128xf32>
    %230 = arith.mulf %229, %227 : vector<8x128xf32>
    %231 = arith.mulf %222, %210 : vector<8x128xf32>
    %232 = arith.addf %230, %231 : vector<8x128xf32>
    %233 = arith.truncf %232 : vector<8x128xf32> to vector<8x128xbf16>
    %c0_62 = arith.constant 0 : index
    %c0_63 = arith.constant 0 : index
    %234 = vector.load %arg2[%c0_62, %c0_63] : memref<128x384xbf16, #tpu.memory_space<vmem>>, vector<128x384xbf16>
    %cst_64 = arith.constant dense<0.000000e+00> : vector<8x384xf32>
    %235 = tpu.matmul %233, %234, %cst_64 {dimension_numbers = #tpu.dot_dimension_numbers<[1], [0], [0], [1], [0, 0, 1, 1], [], []>} : vector<8x128xbf16>, vector<128x384xbf16>, vector<8x384xf32> -> vector<8x384xf32>
    %236 = vector.broadcast %1 : vector<1x384xf32> to vector<8x384xf32>
    %237 = arith.addf %235, %236 : vector<8x384xf32>
    %238 = vector.extract_strided_slice %197 {offsets = [0, 128], sizes = [8, 128], strides = [1, 1]} : vector<8x256xf32> to vector<8x128xf32>
    %239 = vector.extract_strided_slice %237 {offsets = [0, 0], sizes = [8, 256], strides = [1, 1]} : vector<8x384xf32> to vector<8x256xf32>
    %240 = vector.extract_strided_slice %206 {offsets = [0, 0], sizes = [8, 256], strides = [1, 1]} : vector<8x384xf32> to vector<8x256xf32>
    %241 = arith.addf %239, %240 : vector<8x256xf32>
    %cst_65 = arith.constant 5.000000e-01 : f32
    %242 = vector.broadcast %cst_65 : f32 to vector<8x256xf32>
    %243 = arith.mulf %242, %241 : vector<8x256xf32>
    %244 = math.tanh %243 : vector<8x256xf32>
    %cst_66 = arith.constant 5.000000e-01 : f32
    %245 = vector.broadcast %cst_66 : f32 to vector<8x256xf32>
    %246 = arith.mulf %245, %244 : vector<8x256xf32>
    %cst_67 = arith.constant 5.000000e-01 : f32
    %247 = vector.broadcast %cst_67 : f32 to vector<8x256xf32>
    %248 = arith.addf %246, %247 : vector<8x256xf32>
    %249 = vector.extract_strided_slice %248 {offsets = [0, 0], sizes = [8, 128], strides = [1, 1]} : vector<8x256xf32> to vector<8x128xf32>
    %250 = vector.extract_strided_slice %248 {offsets = [0, 128], sizes = [8, 128], strides = [1, 1]} : vector<8x256xf32> to vector<8x128xf32>
    %251 = vector.extract_strided_slice %237 {offsets = [0, 256], sizes = [8, 128], strides = [1, 1]} : vector<8x384xf32> to vector<8x128xf32>
    %252 = vector.extract_strided_slice %206 {offsets = [0, 256], sizes = [8, 128], strides = [1, 1]} : vector<8x384xf32> to vector<8x128xf32>
    %253 = arith.mulf %249, %252 : vector<8x128xf32>
    %254 = arith.addf %251, %253 : vector<8x128xf32>
    %255 = math.tanh %254 : vector<8x128xf32>
    %cst_68 = arith.constant 1.000000e+00 : f32
    %256 = vector.broadcast %cst_68 : f32 to vector<8x128xf32>
    %257 = arith.subf %256, %250 : vector<8x128xf32>
    %258 = arith.mulf %257, %255 : vector<8x128xf32>
    %259 = arith.mulf %250, %238 : vector<8x128xf32>
    %260 = arith.addf %258, %259 : vector<8x128xf32>
    %261 = tpu.concatenate %232, %260 in 1 : vector<8x128xf32>, vector<8x128xf32> -> vector<8x256xf32>
    %c4_i32 = arith.constant 4 : i32
    %262 = arith.truncf %261 : vector<8x256xf32> to vector<8x256xbf16>
    %c0_69 = arith.constant 0 : index
    %c0_70 = arith.constant 0 : index
    %263 = vector.load %arg1[%c0_69, %c0_70] : memref<256x768xbf16, #tpu.memory_space<vmem>>, vector<256x768xbf16>
    %cst_71 = arith.constant dense<0.000000e+00> : vector<8x768xf32>
    %264 = tpu.matmul %262, %263, %cst_71 {dimension_numbers = #tpu.dot_dimension_numbers<[1], [0], [0], [1], [0, 0, 1, 1], [], []>} : vector<8x256xbf16>, vector<256x768xbf16>, vector<8x768xf32> -> vector<8x768xf32>
    %265 = vector.extract_strided_slice %264 {offsets = [0, 0], sizes = [8, 384], strides = [1, 1]} : vector<8x768xf32> to vector<8x384xf32>
    %266 = vector.broadcast %0 : vector<1x384xf32> to vector<8x384xf32>
    %267 = arith.addf %265, %266 : vector<8x384xf32>
    %268 = vector.extract_strided_slice %264 {offsets = [0, 384], sizes = [8, 384], strides = [1, 1]} : vector<8x768xf32> to vector<8x384xf32>
    %269 = vector.broadcast %2 : vector<1x384xf32> to vector<8x384xf32>
    %270 = arith.addf %268, %269 : vector<8x384xf32>
    %271 = arith.index_cast %c4_i32 : i32 to index
    %c0_72 = arith.constant 0 : index
    %c0_73 = arith.constant 0 : index
    %272 = vector.load %arg0[%271, %c0_72, %c0_73] : memref<8x8x384xf32, #tpu.memory_space<vmem>>, vector<1x8x384xf32>
    %273 = vector.shape_cast %272 : vector<1x8x384xf32> to vector<8x384xf32>
    %274 = vector.extract_strided_slice %261 {offsets = [0, 0], sizes = [8, 128], strides = [1, 1]} : vector<8x256xf32> to vector<8x128xf32>
    %275 = vector.extract_strided_slice %273 {offsets = [0, 0], sizes = [8, 256], strides = [1, 1]} : vector<8x384xf32> to vector<8x256xf32>
    %276 = vector.extract_strided_slice %267 {offsets = [0, 0], sizes = [8, 256], strides = [1, 1]} : vector<8x384xf32> to vector<8x256xf32>
    %277 = arith.addf %275, %276 : vector<8x256xf32>
    %cst_74 = arith.constant 5.000000e-01 : f32
    %278 = vector.broadcast %cst_74 : f32 to vector<8x256xf32>
    %279 = arith.mulf %278, %277 : vector<8x256xf32>
    %280 = math.tanh %279 : vector<8x256xf32>
    %cst_75 = arith.constant 5.000000e-01 : f32
    %281 = vector.broadcast %cst_75 : f32 to vector<8x256xf32>
    %282 = arith.mulf %281, %280 : vector<8x256xf32>
    %cst_76 = arith.constant 5.000000e-01 : f32
    %283 = vector.broadcast %cst_76 : f32 to vector<8x256xf32>
    %284 = arith.addf %282, %283 : vector<8x256xf32>
    %285 = vector.extract_strided_slice %284 {offsets = [0, 0], sizes = [8, 128], strides = [1, 1]} : vector<8x256xf32> to vector<8x128xf32>
    %286 = vector.extract_strided_slice %284 {offsets = [0, 128], sizes = [8, 128], strides = [1, 1]} : vector<8x256xf32> to vector<8x128xf32>
    %287 = vector.extract_strided_slice %273 {offsets = [0, 256], sizes = [8, 128], strides = [1, 1]} : vector<8x384xf32> to vector<8x128xf32>
    %288 = vector.extract_strided_slice %267 {offsets = [0, 256], sizes = [8, 128], strides = [1, 1]} : vector<8x384xf32> to vector<8x128xf32>
    %289 = arith.mulf %285, %288 : vector<8x128xf32>
    %290 = arith.addf %287, %289 : vector<8x128xf32>
    %291 = math.tanh %290 : vector<8x128xf32>
    %cst_77 = arith.constant 1.000000e+00 : f32
    %292 = vector.broadcast %cst_77 : f32 to vector<8x128xf32>
    %293 = arith.subf %292, %286 : vector<8x128xf32>
    %294 = arith.mulf %293, %291 : vector<8x128xf32>
    %295 = arith.mulf %286, %274 : vector<8x128xf32>
    %296 = arith.addf %294, %295 : vector<8x128xf32>
    %297 = arith.truncf %296 : vector<8x128xf32> to vector<8x128xbf16>
    %c0_78 = arith.constant 0 : index
    %c0_79 = arith.constant 0 : index
    %298 = vector.load %arg2[%c0_78, %c0_79] : memref<128x384xbf16, #tpu.memory_space<vmem>>, vector<128x384xbf16>
    %cst_80 = arith.constant dense<0.000000e+00> : vector<8x384xf32>
    %299 = tpu.matmul %297, %298, %cst_80 {dimension_numbers = #tpu.dot_dimension_numbers<[1], [0], [0], [1], [0, 0, 1, 1], [], []>} : vector<8x128xbf16>, vector<128x384xbf16>, vector<8x384xf32> -> vector<8x384xf32>
    %300 = vector.broadcast %1 : vector<1x384xf32> to vector<8x384xf32>
    %301 = arith.addf %299, %300 : vector<8x384xf32>
    %302 = vector.extract_strided_slice %261 {offsets = [0, 128], sizes = [8, 128], strides = [1, 1]} : vector<8x256xf32> to vector<8x128xf32>
    %303 = vector.extract_strided_slice %301 {offsets = [0, 0], sizes = [8, 256], strides = [1, 1]} : vector<8x384xf32> to vector<8x256xf32>
    %304 = vector.extract_strided_slice %270 {offsets = [0, 0], sizes = [8, 256], strides = [1, 1]} : vector<8x384xf32> to vector<8x256xf32>
    %305 = arith.addf %303, %304 : vector<8x256xf32>
    %cst_81 = arith.constant 5.000000e-01 : f32
    %306 = vector.broadcast %cst_81 : f32 to vector<8x256xf32>
    %307 = arith.mulf %306, %305 : vector<8x256xf32>
    %308 = math.tanh %307 : vector<8x256xf32>
    %cst_82 = arith.constant 5.000000e-01 : f32
    %309 = vector.broadcast %cst_82 : f32 to vector<8x256xf32>
    %310 = arith.mulf %309, %308 : vector<8x256xf32>
    %cst_83 = arith.constant 5.000000e-01 : f32
    %311 = vector.broadcast %cst_83 : f32 to vector<8x256xf32>
    %312 = arith.addf %310, %311 : vector<8x256xf32>
    %313 = vector.extract_strided_slice %312 {offsets = [0, 0], sizes = [8, 128], strides = [1, 1]} : vector<8x256xf32> to vector<8x128xf32>
    %314 = vector.extract_strided_slice %312 {offsets = [0, 128], sizes = [8, 128], strides = [1, 1]} : vector<8x256xf32> to vector<8x128xf32>
    %315 = vector.extract_strided_slice %301 {offsets = [0, 256], sizes = [8, 128], strides = [1, 1]} : vector<8x384xf32> to vector<8x128xf32>
    %316 = vector.extract_strided_slice %270 {offsets = [0, 256], sizes = [8, 128], strides = [1, 1]} : vector<8x384xf32> to vector<8x128xf32>
    %317 = arith.mulf %313, %316 : vector<8x128xf32>
    %318 = arith.addf %315, %317 : vector<8x128xf32>
    %319 = math.tanh %318 : vector<8x128xf32>
    %cst_84 = arith.constant 1.000000e+00 : f32
    %320 = vector.broadcast %cst_84 : f32 to vector<8x128xf32>
    %321 = arith.subf %320, %314 : vector<8x128xf32>
    %322 = arith.mulf %321, %319 : vector<8x128xf32>
    %323 = arith.mulf %314, %302 : vector<8x128xf32>
    %324 = arith.addf %322, %323 : vector<8x128xf32>
    %325 = tpu.concatenate %296, %324 in 1 : vector<8x128xf32>, vector<8x128xf32> -> vector<8x256xf32>
    %c5_i32 = arith.constant 5 : i32
    %326 = arith.truncf %325 : vector<8x256xf32> to vector<8x256xbf16>
    %c0_85 = arith.constant 0 : index
    %c0_86 = arith.constant 0 : index
    %327 = vector.load %arg1[%c0_85, %c0_86] : memref<256x768xbf16, #tpu.memory_space<vmem>>, vector<256x768xbf16>
    %cst_87 = arith.constant dense<0.000000e+00> : vector<8x768xf32>
    %328 = tpu.matmul %326, %327, %cst_87 {dimension_numbers = #tpu.dot_dimension_numbers<[1], [0], [0], [1], [0, 0, 1, 1], [], []>} : vector<8x256xbf16>, vector<256x768xbf16>, vector<8x768xf32> -> vector<8x768xf32>
    %329 = vector.extract_strided_slice %328 {offsets = [0, 0], sizes = [8, 384], strides = [1, 1]} : vector<8x768xf32> to vector<8x384xf32>
    %330 = vector.broadcast %0 : vector<1x384xf32> to vector<8x384xf32>
    %331 = arith.addf %329, %330 : vector<8x384xf32>
    %332 = vector.extract_strided_slice %328 {offsets = [0, 384], sizes = [8, 384], strides = [1, 1]} : vector<8x768xf32> to vector<8x384xf32>
    %333 = vector.broadcast %2 : vector<1x384xf32> to vector<8x384xf32>
    %334 = arith.addf %332, %333 : vector<8x384xf32>
    %335 = arith.index_cast %c5_i32 : i32 to index
    %c0_88 = arith.constant 0 : index
    %c0_89 = arith.constant 0 : index
    %336 = vector.load %arg0[%335, %c0_88, %c0_89] : memref<8x8x384xf32, #tpu.memory_space<vmem>>, vector<1x8x384xf32>
    %337 = vector.shape_cast %336 : vector<1x8x384xf32> to vector<8x384xf32>
    %338 = vector.extract_strided_slice %325 {offsets = [0, 0], sizes = [8, 128], strides = [1, 1]} : vector<8x256xf32> to vector<8x128xf32>
    %339 = vector.extract_strided_slice %337 {offsets = [0, 0], sizes = [8, 256], strides = [1, 1]} : vector<8x384xf32> to vector<8x256xf32>
    %340 = vector.extract_strided_slice %331 {offsets = [0, 0], sizes = [8, 256], strides = [1, 1]} : vector<8x384xf32> to vector<8x256xf32>
    %341 = arith.addf %339, %340 : vector<8x256xf32>
    %cst_90 = arith.constant 5.000000e-01 : f32
    %342 = vector.broadcast %cst_90 : f32 to vector<8x256xf32>
    %343 = arith.mulf %342, %341 : vector<8x256xf32>
    %344 = math.tanh %343 : vector<8x256xf32>
    %cst_91 = arith.constant 5.000000e-01 : f32
    %345 = vector.broadcast %cst_91 : f32 to vector<8x256xf32>
    %346 = arith.mulf %345, %344 : vector<8x256xf32>
    %cst_92 = arith.constant 5.000000e-01 : f32
    %347 = vector.broadcast %cst_92 : f32 to vector<8x256xf32>
    %348 = arith.addf %346, %347 : vector<8x256xf32>
    %349 = vector.extract_strided_slice %348 {offsets = [0, 0], sizes = [8, 128], strides = [1, 1]} : vector<8x256xf32> to vector<8x128xf32>
    %350 = vector.extract_strided_slice %348 {offsets = [0, 128], sizes = [8, 128], strides = [1, 1]} : vector<8x256xf32> to vector<8x128xf32>
    %351 = vector.extract_strided_slice %337 {offsets = [0, 256], sizes = [8, 128], strides = [1, 1]} : vector<8x384xf32> to vector<8x128xf32>
    %352 = vector.extract_strided_slice %331 {offsets = [0, 256], sizes = [8, 128], strides = [1, 1]} : vector<8x384xf32> to vector<8x128xf32>
    %353 = arith.mulf %349, %352 : vector<8x128xf32>
    %354 = arith.addf %351, %353 : vector<8x128xf32>
    %355 = math.tanh %354 : vector<8x128xf32>
    %cst_93 = arith.constant 1.000000e+00 : f32
    %356 = vector.broadcast %cst_93 : f32 to vector<8x128xf32>
    %357 = arith.subf %356, %350 : vector<8x128xf32>
    %358 = arith.mulf %357, %355 : vector<8x128xf32>
    %359 = arith.mulf %350, %338 : vector<8x128xf32>
    %360 = arith.addf %358, %359 : vector<8x128xf32>
    %361 = arith.truncf %360 : vector<8x128xf32> to vector<8x128xbf16>
    %c0_94 = arith.constant 0 : index
    %c0_95 = arith.constant 0 : index
    %362 = vector.load %arg2[%c0_94, %c0_95] : memref<128x384xbf16, #tpu.memory_space<vmem>>, vector<128x384xbf16>
    %cst_96 = arith.constant dense<0.000000e+00> : vector<8x384xf32>
    %363 = tpu.matmul %361, %362, %cst_96 {dimension_numbers = #tpu.dot_dimension_numbers<[1], [0], [0], [1], [0, 0, 1, 1], [], []>} : vector<8x128xbf16>, vector<128x384xbf16>, vector<8x384xf32> -> vector<8x384xf32>
    %364 = vector.broadcast %1 : vector<1x384xf32> to vector<8x384xf32>
    %365 = arith.addf %363, %364 : vector<8x384xf32>
    %366 = vector.extract_strided_slice %325 {offsets = [0, 128], sizes = [8, 128], strides = [1, 1]} : vector<8x256xf32> to vector<8x128xf32>
    %367 = vector.extract_strided_slice %365 {offsets = [0, 0], sizes = [8, 256], strides = [1, 1]} : vector<8x384xf32> to vector<8x256xf32>
    %368 = vector.extract_strided_slice %334 {offsets = [0, 0], sizes = [8, 256], strides = [1, 1]} : vector<8x384xf32> to vector<8x256xf32>
    %369 = arith.addf %367, %368 : vector<8x256xf32>
    %cst_97 = arith.constant 5.000000e-01 : f32
    %370 = vector.broadcast %cst_97 : f32 to vector<8x256xf32>
    %371 = arith.mulf %370, %369 : vector<8x256xf32>
    %372 = math.tanh %371 : vector<8x256xf32>
    %cst_98 = arith.constant 5.000000e-01 : f32
    %373 = vector.broadcast %cst_98 : f32 to vector<8x256xf32>
    %374 = arith.mulf %373, %372 : vector<8x256xf32>
    %cst_99 = arith.constant 5.000000e-01 : f32
    %375 = vector.broadcast %cst_99 : f32 to vector<8x256xf32>
    %376 = arith.addf %374, %375 : vector<8x256xf32>
    %377 = vector.extract_strided_slice %376 {offsets = [0, 0], sizes = [8, 128], strides = [1, 1]} : vector<8x256xf32> to vector<8x128xf32>
    %378 = vector.extract_strided_slice %376 {offsets = [0, 128], sizes = [8, 128], strides = [1, 1]} : vector<8x256xf32> to vector<8x128xf32>
    %379 = vector.extract_strided_slice %365 {offsets = [0, 256], sizes = [8, 128], strides = [1, 1]} : vector<8x384xf32> to vector<8x128xf32>
    %380 = vector.extract_strided_slice %334 {offsets = [0, 256], sizes = [8, 128], strides = [1, 1]} : vector<8x384xf32> to vector<8x128xf32>
    %381 = arith.mulf %377, %380 : vector<8x128xf32>
    %382 = arith.addf %379, %381 : vector<8x128xf32>
    %383 = math.tanh %382 : vector<8x128xf32>
    %cst_100 = arith.constant 1.000000e+00 : f32
    %384 = vector.broadcast %cst_100 : f32 to vector<8x128xf32>
    %385 = arith.subf %384, %378 : vector<8x128xf32>
    %386 = arith.mulf %385, %383 : vector<8x128xf32>
    %387 = arith.mulf %378, %366 : vector<8x128xf32>
    %388 = arith.addf %386, %387 : vector<8x128xf32>
    %389 = tpu.concatenate %360, %388 in 1 : vector<8x128xf32>, vector<8x128xf32> -> vector<8x256xf32>
    %c6_i32 = arith.constant 6 : i32
    %390 = arith.truncf %389 : vector<8x256xf32> to vector<8x256xbf16>
    %c0_101 = arith.constant 0 : index
    %c0_102 = arith.constant 0 : index
    %391 = vector.load %arg1[%c0_101, %c0_102] : memref<256x768xbf16, #tpu.memory_space<vmem>>, vector<256x768xbf16>
    %cst_103 = arith.constant dense<0.000000e+00> : vector<8x768xf32>
    %392 = tpu.matmul %390, %391, %cst_103 {dimension_numbers = #tpu.dot_dimension_numbers<[1], [0], [0], [1], [0, 0, 1, 1], [], []>} : vector<8x256xbf16>, vector<256x768xbf16>, vector<8x768xf32> -> vector<8x768xf32>
    %393 = vector.extract_strided_slice %392 {offsets = [0, 0], sizes = [8, 384], strides = [1, 1]} : vector<8x768xf32> to vector<8x384xf32>
    %394 = vector.broadcast %0 : vector<1x384xf32> to vector<8x384xf32>
    %395 = arith.addf %393, %394 : vector<8x384xf32>
    %396 = vector.extract_strided_slice %392 {offsets = [0, 384], sizes = [8, 384], strides = [1, 1]} : vector<8x768xf32> to vector<8x384xf32>
    %397 = vector.broadcast %2 : vector<1x384xf32> to vector<8x384xf32>
    %398 = arith.addf %396, %397 : vector<8x384xf32>
    %399 = arith.index_cast %c6_i32 : i32 to index
    %c0_104 = arith.constant 0 : index
    %c0_105 = arith.constant 0 : index
    %400 = vector.load %arg0[%399, %c0_104, %c0_105] : memref<8x8x384xf32, #tpu.memory_space<vmem>>, vector<1x8x384xf32>
    %401 = vector.shape_cast %400 : vector<1x8x384xf32> to vector<8x384xf32>
    %402 = vector.extract_strided_slice %389 {offsets = [0, 0], sizes = [8, 128], strides = [1, 1]} : vector<8x256xf32> to vector<8x128xf32>
    %403 = vector.extract_strided_slice %401 {offsets = [0, 0], sizes = [8, 256], strides = [1, 1]} : vector<8x384xf32> to vector<8x256xf32>
    %404 = vector.extract_strided_slice %395 {offsets = [0, 0], sizes = [8, 256], strides = [1, 1]} : vector<8x384xf32> to vector<8x256xf32>
    %405 = arith.addf %403, %404 : vector<8x256xf32>
    %cst_106 = arith.constant 5.000000e-01 : f32
    %406 = vector.broadcast %cst_106 : f32 to vector<8x256xf32>
    %407 = arith.mulf %406, %405 : vector<8x256xf32>
    %408 = math.tanh %407 : vector<8x256xf32>
    %cst_107 = arith.constant 5.000000e-01 : f32
    %409 = vector.broadcast %cst_107 : f32 to vector<8x256xf32>
    %410 = arith.mulf %409, %408 : vector<8x256xf32>
    %cst_108 = arith.constant 5.000000e-01 : f32
    %411 = vector.broadcast %cst_108 : f32 to vector<8x256xf32>
    %412 = arith.addf %410, %411 : vector<8x256xf32>
    %413 = vector.extract_strided_slice %412 {offsets = [0, 0], sizes = [8, 128], strides = [1, 1]} : vector<8x256xf32> to vector<8x128xf32>
    %414 = vector.extract_strided_slice %412 {offsets = [0, 128], sizes = [8, 128], strides = [1, 1]} : vector<8x256xf32> to vector<8x128xf32>
    %415 = vector.extract_strided_slice %401 {offsets = [0, 256], sizes = [8, 128], strides = [1, 1]} : vector<8x384xf32> to vector<8x128xf32>
    %416 = vector.extract_strided_slice %395 {offsets = [0, 256], sizes = [8, 128], strides = [1, 1]} : vector<8x384xf32> to vector<8x128xf32>
    %417 = arith.mulf %413, %416 : vector<8x128xf32>
    %418 = arith.addf %415, %417 : vector<8x128xf32>
    %419 = math.tanh %418 : vector<8x128xf32>
    %cst_109 = arith.constant 1.000000e+00 : f32
    %420 = vector.broadcast %cst_109 : f32 to vector<8x128xf32>
    %421 = arith.subf %420, %414 : vector<8x128xf32>
    %422 = arith.mulf %421, %419 : vector<8x128xf32>
    %423 = arith.mulf %414, %402 : vector<8x128xf32>
    %424 = arith.addf %422, %423 : vector<8x128xf32>
    %425 = arith.truncf %424 : vector<8x128xf32> to vector<8x128xbf16>
    %c0_110 = arith.constant 0 : index
    %c0_111 = arith.constant 0 : index
    %426 = vector.load %arg2[%c0_110, %c0_111] : memref<128x384xbf16, #tpu.memory_space<vmem>>, vector<128x384xbf16>
    %cst_112 = arith.constant dense<0.000000e+00> : vector<8x384xf32>
    %427 = tpu.matmul %425, %426, %cst_112 {dimension_numbers = #tpu.dot_dimension_numbers<[1], [0], [0], [1], [0, 0, 1, 1], [], []>} : vector<8x128xbf16>, vector<128x384xbf16>, vector<8x384xf32> -> vector<8x384xf32>
    %428 = vector.broadcast %1 : vector<1x384xf32> to vector<8x384xf32>
    %429 = arith.addf %427, %428 : vector<8x384xf32>
    %430 = vector.extract_strided_slice %389 {offsets = [0, 128], sizes = [8, 128], strides = [1, 1]} : vector<8x256xf32> to vector<8x128xf32>
    %431 = vector.extract_strided_slice %429 {offsets = [0, 0], sizes = [8, 256], strides = [1, 1]} : vector<8x384xf32> to vector<8x256xf32>
    %432 = vector.extract_strided_slice %398 {offsets = [0, 0], sizes = [8, 256], strides = [1, 1]} : vector<8x384xf32> to vector<8x256xf32>
    %433 = arith.addf %431, %432 : vector<8x256xf32>
    %cst_113 = arith.constant 5.000000e-01 : f32
    %434 = vector.broadcast %cst_113 : f32 to vector<8x256xf32>
    %435 = arith.mulf %434, %433 : vector<8x256xf32>
    %436 = math.tanh %435 : vector<8x256xf32>
    %cst_114 = arith.constant 5.000000e-01 : f32
    %437 = vector.broadcast %cst_114 : f32 to vector<8x256xf32>
    %438 = arith.mulf %437, %436 : vector<8x256xf32>
    %cst_115 = arith.constant 5.000000e-01 : f32
    %439 = vector.broadcast %cst_115 : f32 to vector<8x256xf32>
    %440 = arith.addf %438, %439 : vector<8x256xf32>
    %441 = vector.extract_strided_slice %440 {offsets = [0, 0], sizes = [8, 128], strides = [1, 1]} : vector<8x256xf32> to vector<8x128xf32>
    %442 = vector.extract_strided_slice %440 {offsets = [0, 128], sizes = [8, 128], strides = [1, 1]} : vector<8x256xf32> to vector<8x128xf32>
    %443 = vector.extract_strided_slice %429 {offsets = [0, 256], sizes = [8, 128], strides = [1, 1]} : vector<8x384xf32> to vector<8x128xf32>
    %444 = vector.extract_strided_slice %398 {offsets = [0, 256], sizes = [8, 128], strides = [1, 1]} : vector<8x384xf32> to vector<8x128xf32>
    %445 = arith.mulf %441, %444 : vector<8x128xf32>
    %446 = arith.addf %443, %445 : vector<8x128xf32>
    %447 = math.tanh %446 : vector<8x128xf32>
    %cst_116 = arith.constant 1.000000e+00 : f32
    %448 = vector.broadcast %cst_116 : f32 to vector<8x128xf32>
    %449 = arith.subf %448, %442 : vector<8x128xf32>
    %450 = arith.mulf %449, %447 : vector<8x128xf32>
    %451 = arith.mulf %442, %430 : vector<8x128xf32>
    %452 = arith.addf %450, %451 : vector<8x128xf32>
    %453 = tpu.concatenate %424, %452 in 1 : vector<8x128xf32>, vector<8x128xf32> -> vector<8x256xf32>
    %c7_i32 = arith.constant 7 : i32
    %454 = arith.truncf %453 : vector<8x256xf32> to vector<8x256xbf16>
    %c0_117 = arith.constant 0 : index
    %c0_118 = arith.constant 0 : index
    %455 = vector.load %arg1[%c0_117, %c0_118] : memref<256x768xbf16, #tpu.memory_space<vmem>>, vector<256x768xbf16>
    %cst_119 = arith.constant dense<0.000000e+00> : vector<8x768xf32>
    %456 = tpu.matmul %454, %455, %cst_119 {dimension_numbers = #tpu.dot_dimension_numbers<[1], [0], [0], [1], [0, 0, 1, 1], [], []>} : vector<8x256xbf16>, vector<256x768xbf16>, vector<8x768xf32> -> vector<8x768xf32>
    %457 = vector.extract_strided_slice %456 {offsets = [0, 0], sizes = [8, 384], strides = [1, 1]} : vector<8x768xf32> to vector<8x384xf32>
    %458 = vector.broadcast %0 : vector<1x384xf32> to vector<8x384xf32>
    %459 = arith.addf %457, %458 : vector<8x384xf32>
    %460 = vector.extract_strided_slice %456 {offsets = [0, 384], sizes = [8, 384], strides = [1, 1]} : vector<8x768xf32> to vector<8x384xf32>
    %461 = vector.broadcast %2 : vector<1x384xf32> to vector<8x384xf32>
    %462 = arith.addf %460, %461 : vector<8x384xf32>
    %463 = arith.index_cast %c7_i32 : i32 to index
    %c0_120 = arith.constant 0 : index
    %c0_121 = arith.constant 0 : index
    %464 = vector.load %arg0[%463, %c0_120, %c0_121] : memref<8x8x384xf32, #tpu.memory_space<vmem>>, vector<1x8x384xf32>
    %465 = vector.shape_cast %464 : vector<1x8x384xf32> to vector<8x384xf32>
    %466 = vector.extract_strided_slice %453 {offsets = [0, 0], sizes = [8, 128], strides = [1, 1]} : vector<8x256xf32> to vector<8x128xf32>
    %467 = vector.extract_strided_slice %465 {offsets = [0, 0], sizes = [8, 256], strides = [1, 1]} : vector<8x384xf32> to vector<8x256xf32>
    %468 = vector.extract_strided_slice %459 {offsets = [0, 0], sizes = [8, 256], strides = [1, 1]} : vector<8x384xf32> to vector<8x256xf32>
    %469 = arith.addf %467, %468 : vector<8x256xf32>
    %cst_122 = arith.constant 5.000000e-01 : f32
    %470 = vector.broadcast %cst_122 : f32 to vector<8x256xf32>
    %471 = arith.mulf %470, %469 : vector<8x256xf32>
    %472 = math.tanh %471 : vector<8x256xf32>
    %cst_123 = arith.constant 5.000000e-01 : f32
    %473 = vector.broadcast %cst_123 : f32 to vector<8x256xf32>
    %474 = arith.mulf %473, %472 : vector<8x256xf32>
    %cst_124 = arith.constant 5.000000e-01 : f32
    %475 = vector.broadcast %cst_124 : f32 to vector<8x256xf32>
    %476 = arith.addf %474, %475 : vector<8x256xf32>
    %477 = vector.extract_strided_slice %476 {offsets = [0, 0], sizes = [8, 128], strides = [1, 1]} : vector<8x256xf32> to vector<8x128xf32>
    %478 = vector.extract_strided_slice %476 {offsets = [0, 128], sizes = [8, 128], strides = [1, 1]} : vector<8x256xf32> to vector<8x128xf32>
    %479 = vector.extract_strided_slice %465 {offsets = [0, 256], sizes = [8, 128], strides = [1, 1]} : vector<8x384xf32> to vector<8x128xf32>
    %480 = vector.extract_strided_slice %459 {offsets = [0, 256], sizes = [8, 128], strides = [1, 1]} : vector<8x384xf32> to vector<8x128xf32>
    %481 = arith.mulf %477, %480 : vector<8x128xf32>
    %482 = arith.addf %479, %481 : vector<8x128xf32>
    %483 = math.tanh %482 : vector<8x128xf32>
    %cst_125 = arith.constant 1.000000e+00 : f32
    %484 = vector.broadcast %cst_125 : f32 to vector<8x128xf32>
    %485 = arith.subf %484, %478 : vector<8x128xf32>
    %486 = arith.mulf %485, %483 : vector<8x128xf32>
    %487 = arith.mulf %478, %466 : vector<8x128xf32>
    %488 = arith.addf %486, %487 : vector<8x128xf32>
    %489 = arith.truncf %488 : vector<8x128xf32> to vector<8x128xbf16>
    %c0_126 = arith.constant 0 : index
    %c0_127 = arith.constant 0 : index
    %490 = vector.load %arg2[%c0_126, %c0_127] : memref<128x384xbf16, #tpu.memory_space<vmem>>, vector<128x384xbf16>
    %cst_128 = arith.constant dense<0.000000e+00> : vector<8x384xf32>
    %491 = tpu.matmul %489, %490, %cst_128 {dimension_numbers = #tpu.dot_dimension_numbers<[1], [0], [0], [1], [0, 0, 1, 1], [], []>} : vector<8x128xbf16>, vector<128x384xbf16>, vector<8x384xf32> -> vector<8x384xf32>
    %492 = vector.broadcast %1 : vector<1x384xf32> to vector<8x384xf32>
    %493 = arith.addf %491, %492 : vector<8x384xf32>
    %494 = vector.extract_strided_slice %453 {offsets = [0, 128], sizes = [8, 128], strides = [1, 1]} : vector<8x256xf32> to vector<8x128xf32>
    %495 = vector.extract_strided_slice %493 {offsets = [0, 0], sizes = [8, 256], strides = [1, 1]} : vector<8x384xf32> to vector<8x256xf32>
    %496 = vector.extract_strided_slice %462 {offsets = [0, 0], sizes = [8, 256], strides = [1, 1]} : vector<8x384xf32> to vector<8x256xf32>
    %497 = arith.addf %495, %496 : vector<8x256xf32>
    %cst_129 = arith.constant 5.000000e-01 : f32
    %498 = vector.broadcast %cst_129 : f32 to vector<8x256xf32>
    %499 = arith.mulf %498, %497 : vector<8x256xf32>
    %500 = math.tanh %499 : vector<8x256xf32>
    %cst_130 = arith.constant 5.000000e-01 : f32
    %501 = vector.broadcast %cst_130 : f32 to vector<8x256xf32>
    %502 = arith.mulf %501, %500 : vector<8x256xf32>
    %cst_131 = arith.constant 5.000000e-01 : f32
    %503 = vector.broadcast %cst_131 : f32 to vector<8x256xf32>
    %504 = arith.addf %502, %503 : vector<8x256xf32>
    %505 = vector.extract_strided_slice %504 {offsets = [0, 0], sizes = [8, 128], strides = [1, 1]} : vector<8x256xf32> to vector<8x128xf32>
    %506 = vector.extract_strided_slice %504 {offsets = [0, 128], sizes = [8, 128], strides = [1, 1]} : vector<8x256xf32> to vector<8x128xf32>
    %507 = vector.extract_strided_slice %493 {offsets = [0, 256], sizes = [8, 128], strides = [1, 1]} : vector<8x384xf32> to vector<8x128xf32>
    %508 = vector.extract_strided_slice %462 {offsets = [0, 256], sizes = [8, 128], strides = [1, 1]} : vector<8x384xf32> to vector<8x128xf32>
    %509 = arith.mulf %505, %508 : vector<8x128xf32>
    %510 = arith.addf %507, %509 : vector<8x128xf32>
    %511 = math.tanh %510 : vector<8x128xf32>
    %cst_132 = arith.constant 1.000000e+00 : f32
    %512 = vector.broadcast %cst_132 : f32 to vector<8x128xf32>
    %513 = arith.subf %512, %506 : vector<8x128xf32>
    %514 = arith.mulf %513, %511 : vector<8x128xf32>
    %515 = arith.mulf %506, %494 : vector<8x128xf32>
    %516 = arith.addf %514, %515 : vector<8x128xf32>
    %517 = tpu.concatenate %488, %516 in 1 : vector<8x128xf32>, vector<8x128xf32> -> vector<8x256xf32>
    %c8_i32 = arith.constant 8 : i32
    %518 = vector.extract_strided_slice %517 {offsets = [0, 128], sizes = [8, 128], strides = [1, 1]} : vector<8x256xf32> to vector<8x128xf32>
    %519 = vector.broadcast %3 : vector<1x128xf32> to vector<8x128xf32>
    %520 = arith.mulf %518, %519 : vector<8x128xf32>
    %cst_133 = arith.constant dense<0.000000e+00> : vector<8xf32>
    %521 = vector.multi_reduction <add>, %520, %cst_133 [1] : vector<8x128xf32> to vector<8xf32>
    %522 = vector.shape_cast %521 : vector<8xf32> to vector<8x1xf32>
    %523 = vector.broadcast %4 : vector<1x1xf32> to vector<8x1xf32>
    %524 = arith.addf %522, %523 : vector<8x1xf32>
    %525 = vector.shape_cast %524 : vector<8x1xf32> to vector<8x1xf32>
    %526 = vector.broadcast %525 : vector<8x1xf32> to vector<8x128xf32>
    %c0_134 = arith.constant 0 : index
    %c0_135 = arith.constant 0 : index
    %527 = vector.load %arg4[%c0_134, %c0_135] : memref<8x128xf32, #tpu.memory_space<vmem>>, vector<8x128xf32>
    tpu.vector_store %arg4[%c0_134, %c0_135], %526 {strides = array<i32>} : memref<8x128xf32, #tpu.memory_space<vmem>>, vector<8x128xf32>,
    return
  }
}

</mosaic_0001>

<llo_original>
// kernel: tpu_custom_call.1
$region0: #{tpu_custom_call.1}
  #allocation0 [shape = 'u32[]', space=smem, size = 0x4, offset = 0x4, fixed_abs, tag = 'smem constant byte address 0x4 - core index']
  #allocation1 [shape = 'u32[144,128]{1,0:T(1,128)}', space=vmem, size = 0x12000, scoped, tag = 'internal scratch']
  %s0 = inlined_call_operand.hbm [shape: f32[8,8,384], index: 0, kind: input, shape index: {}]
  %s1 = inlined_call_operand.hbm [shape: bf16[256,768], index: 1, kind: input, shape index: {}]
  %s2 = inlined_call_operand.hbm [shape: bf16[128,384], index: 2, kind: input, shape index: {}]
  %s3 = inlined_call_operand.hbm [shape: f32[4,384], index: 3, kind: input, shape index: {}]
  %s4 = inlined_call_operand.hbm [shape: f32[8,128], index: 4, kind: output, shape index: {}]
  %s5 = sld [smem:[#allocation0]]
  $region42: #{tpu_custom_call.1} parent=0
    _
  %s7 = ssub.s32 1, %s5
  %s8 = scalar_select 0, %s7, %s5
  $region1: #{tpu_custom_call.1} parent=0
    #allocation2 [shape = 'u8[98304]{0}', space=vmem, size = 0x18000, scoped, tag = 'input window, operand 0, single buffered']
    #allocation3 [shape = 's32[1]{0}', space=sflag, size = 0x4, scoped, tag = 'scoped memory for tpu_custom_call.1']
    #allocation4 [shape = 's32[1]{0}', space=sflag, size = 0x4, scoped, tag = 'scoped memory for tpu_custom_call.1']
    #allocation5 [shape = 'u8[393216]{0}', space=vmem, size = 0x60000, scoped, tag = 'input window, operand 1, single buffered']
    #allocation6 [shape = 's32[1]{0}', space=sflag, size = 0x4, scoped, tag = 'scoped memory for tpu_custom_call.1']
    #allocation7 [shape = 'u8[98304]{0}', space=vmem, size = 0x18000, scoped, tag = 'input window, operand 2, single buffered']
    #allocation8 [shape = 'u8[6144]{0}', space=vmem, size = 0x1800, scoped, tag = 'input window, operand 3, single buffered']
    #allocation9 [shape = 's32[1]{0}', space=sflag, size = 0x4, scoped, tag = 'scoped memory for tpu_custom_call.1']
    #allocation10 [shape = 'u8[4096]{0}', space=vmem, size = 0x1000, scoped, tag = 'output window, operand 0, single buffered']
    %9 = vsyncpa [#allocation3], 0
    %10 = vsyncpa [#allocation6], 0
    %11 = vsyncpa [#allocation9], 0
    %12 = vsyncpa [#allocation4], 0
    // Predicated region
    $region2: #{tpu_custom_call.1} parent=1 // pred_check
      _
    $region3: #{tpu_custom_call.1} parent=1 // pred_check_branch
      %14 = sbr.rel (0) target = $region5
    $region4: #{tpu_custom_call.1} parent=1 // pred_region
      %s16 = ssub.s32 3072, 3072
      %17 = vsyncadd [#allocation3], %s16
      %s18 = sshll.u32 [#allocation2], 4
      %s19 = int_to_ptr.vmem [resolvable:$true] %s18
      %24 = dma.hbm_to_vmem [thread:$0]  %s0, 3072, %s19, [#allocation3], 384, 384, 24
    $region5: #{tpu_custom_call.1} parent=1 // pred_fallthru
      _
    // Predicated region
    $region6: #{tpu_custom_call.1} parent=1 // pred_check
      _
    $region7: #{tpu_custom_call.1} parent=1 // pred_check_branch
      %26 = sbr.rel (0) target = $region9
    $region8: #{tpu_custom_call.1} parent=1 // pred_region
      %s28 = ssub.s32 12288, 12288
      %29 = vsyncadd [#allocation6], %s28
      %s30 = sshll.u32 [#allocation5], 4
      %s31 = int_to_ptr.vmem [resolvable:$true] %s30
      %36 = dma.hbm_to_vmem [thread:$0]  %s1, 12288, %s31, [#allocation6], 384, 384, 24
    $region9: #{tpu_custom_call.1} parent=1 // pred_fallthru
      _
    // Predicated region
    $region10: #{tpu_custom_call.1} parent=1 // pred_check
      _
    $region11: #{tpu_custom_call.1} parent=1 // pred_check_branch
      %38 = sbr.rel (0) target = $region13
    $region12: #{tpu_custom_call.1} parent=1 // pred_region
      %s40 = ssub.s32 3072, 3072
      %41 = vsyncadd [#allocation6], %s40
      %s42 = sshll.u32 [#allocation7], 4
      %s43 = int_to_ptr.vmem [resolvable:$true] %s42
      %48 = dma.hbm_to_vmem [thread:$0]  %s2, 3072, %s43, [#allocation6], 192, 192, 12
    $region13: #{tpu_custom_call.1} parent=1 // pred_fallthru
      _
    // Predicated region
    $region14: #{tpu_custom_call.1} parent=1 // pred_check
      _
    $region15: #{tpu_custom_call.1} parent=1 // pred_check_branch
      %50 = sbr.rel (0) target = $region17
    $region16: #{tpu_custom_call.1} parent=1 // pred_region
      %s52 = ssub.s32 192, 192
      %53 = vsyncadd [#allocation9], %s52
      %s55 = sshll.u32 [#allocation8], 4
      %s56 = int_to_ptr.vmem [resolvable:$true] %s55
      %58 = dma.hbm_to_vmem [thread:$0]  %s3, 192, %s56, [#allocation9]
    $region17: #{tpu_custom_call.1} parent=1 // pred_fallthru
      _
    // Predicated region
    $region18: #{tpu_custom_call.1} parent=1 // pred_check
      _
    $region19: #{tpu_custom_call.1} parent=1 // pred_check_branch
      %60 = sbr.rel (0) target = $region21
    $region20: #{tpu_custom_call.1} parent=1 // pred_region
      %61 = dma.done [#allocation3], 3072
    $region21: #{tpu_custom_call.1} parent=1 // pred_fallthru
      _
    // Predicated region
    $region22: #{tpu_custom_call.1} parent=1 // pred_check
      _
    $region23: #{tpu_custom_call.1} parent=1 // pred_check_branch
      %63 = sbr.rel (0) target = $region25
    $region24: #{tpu_custom_call.1} parent=1 // pred_region
      %64 = dma.done [#allocation6], 12288
    $region25: #{tpu_custom_call.1} parent=1 // pred_fallthru
      _
    // Predicated region
    $region26: #{tpu_custom_call.1} parent=1 // pred_check
      _
    $region27: #{tpu_custom_call.1} parent=1 // pred_check_branch
      %66 = sbr.rel (0) target = $region29
    $region28: #{tpu_custom_call.1} parent=1 // pred_region
      %67 = dma.done [#allocation6], 3072
    $region29: #{tpu_custom_call.1} parent=1 // pred_fallthru
      _
    // Predicated region
    $region30: #{tpu_custom_call.1} parent=1 // pred_check
      _
    $region31: #{tpu_custom_call.1} parent=1 // pred_check_branch
      %69 = sbr.rel (0) target = $region33
    $region32: #{tpu_custom_call.1} parent=1 // pred_region
      %70 = dma.done [#allocation9], 192
    $region33: #{tpu_custom_call.1} parent=1 // pred_fallthru
      _
    %v72 = vld [vmem:[#allocation8] ss:$4 sm:$0x7]
    %s73 = scalar_lea.vmem [#allocation8], 1
    %v74 = vld [vmem:[%s73] ss:$4 sm:$0x7]
    %s75 = scalar_lea.vmem [#allocation8], 2
    %v76 = vld [vmem:[%s75] ss:$4 sm:$0x7]
    %v77 = vld [vmem:[#allocation8 + $0x3] sm:$0x1]
    %v78 = vld [vmem:[#allocation8 + $0x7] sm:$0x1]
    %v79 = vld [vmem:[#allocation5] sm:$0xff]
    %v80 = vld [vmem:[#allocation5 + $0x8] sm:$0xff]
    %v81 = vld [vmem:[#allocation5 + $0x10] sm:$0xff]
    %v82 = vld [vmem:[#allocation5 + $0x18] sm:$0xff]
    %v83 = vld [vmem:[#allocation5 + $0x20] sm:$0xff]
    %v84 = vld [vmem:[#allocation5 + $0x28] sm:$0xff]
    %v85 = vld [vmem:[#allocation5 + $0x30] sm:$0xff]
    %v86 = vld [vmem:[#allocation5 + $0x38] sm:$0xff]
    %v87 = vld [vmem:[#allocation5 + $0x40] sm:$0xff]
    %v88 = vld [vmem:[#allocation5 + $0x48] sm:$0xff]
    %v89 = vld [vmem:[#allocation5 + $0x50] sm:$0xff]
    %v90 = vld [vmem:[#allocation5 + $0x58] sm:$0xff]
    %v91 = vld [vmem:[#allocation5 + $0x60] sm:$0xff]
    %v92 = vld [vmem:[#allocation5 + $0x68] sm:$0xff]
    %v93 = vld [vmem:[#allocation5 + $0x70] sm:$0xff]
    %v94 = vld [vmem:[#allocation5 + $0x78] sm:$0xff]
    %v95 = vld [vmem:[#allocation5 + $0x80] sm:$0xff]
    %v96 = vld [vmem:[#allocation5 + $0x88] sm:$0xff]
    %v97 = vld [vmem:[#allocation5 + $0x90] sm:$0xff]
    %v98 = vld [vmem:[#allocation5 + $0x98] sm:$0xff]
    %v99 = vld [vmem:[#allocation5 + $0xa0] sm:$0xff]
    %v100 = vld [vmem:[#allocation5 + $0xa8] sm:$0xff]
    %v101 = vld [vmem:[#allocation5 + $0xb0] sm:$0xff]
    %v102 = vld [vmem:[#allocation5 + $0xb8] sm:$0xff]
    %v103 = vld [vmem:[#allocation5 + $0xc0] sm:$0xff]
    %v104 = vld [vmem:[#allocation5 + $0xc8] sm:$0xff]
    %v105 = vld [vmem:[#allocation5 + $0xd0] sm:$0xff]
    %v106 = vld [vmem:[#allocation5 + $0xd8] sm:$0xff]
    %v107 = vld [vmem:[#allocation5 + $0xe0] sm:$0xff]
    %v108 = vld [vmem:[#allocation5 + $0xe8] sm:$0xff]
    %v109 = vld [vmem:[#allocation5 + $0xf0] sm:$0xff]
    %v110 = vld [vmem:[#allocation5 + $0xf8] sm:$0xff]
    %v111 = vld [vmem:[#allocation5 + $0x100] sm:$0xff]
    %v112 = vld [vmem:[#allocation5 + $0x108] sm:$0xff]
    %v113 = vld [vmem:[#allocation5 + $0x110] sm:$0xff]
    %v114 = vld [vmem:[#allocation5 + $0x118] sm:$0xff]
    %v115 = vld [vmem:[#allocation5 + $0x120] sm:$0xff]
    %v116 = vld [vmem:[#allocation5 + $0x128] sm:$0xff]
    %v117 = vld [vmem:[#allocation5 + $0x130] sm:$0xff]
    %v118 = vld [vmem:[#allocation5 + $0x138] sm:$0xff]
    %v119 = vld [vmem:[#allocation5 + $0x140] sm:$0xff]
    %v120 = vld [vmem:[#allocation5 + $0x148] sm:$0xff]
    %v121 = vld [vmem:[#allocation5 + $0x150] sm:$0xff]
    %v122 = vld [vmem:[#allocation5 + $0x158] sm:$0xff]
    %v123 = vld [vmem:[#allocation5 + $0x160] sm:$0xff]
    %v124 = vld [vmem:[#allocation5 + $0x168] sm:$0xff]
    %v125 = vld [vmem:[#allocation5 + $0x170] sm:$0xff]
    %v126 = vld [vmem:[#allocation5 + $0x178] sm:$0xff]
    %v127 = vld [vmem:[#allocation5 + $0x180] sm:$0xff]
    %v128 = vld [vmem:[#allocation5 + $0x188] sm:$0xff]
    %v129 = vld [vmem:[#allocation5 + $0x190] sm:$0xff]
    %v130 = vld [vmem:[#allocation5 + $0x198] sm:$0xff]
    %v131 = vld [vmem:[#allocation5 + $0x1a0] sm:$0xff]
    %v132 = vld [vmem:[#allocation5 + $0x1a8] sm:$0xff]
    %v133 = vld [vmem:[#allocation5 + $0x1b0] sm:$0xff]
    %v134 = vld [vmem:[#allocation5 + $0x1b8] sm:$0xff]
    %v135 = vld [vmem:[#allocation5 + $0x1c0] sm:$0xff]
    %v136 = vld [vmem:[#allocation5 + $0x1c8] sm:$0xff]
    %v137 = vld [vmem:[#allocation5 + $0x1d0] sm:$0xff]
    %v138 = vld [vmem:[#allocation5 + $0x1d8] sm:$0xff]
    %v139 = vld [vmem:[#allocation5 + $0x1e0] sm:$0xff]
    %v140 = vld [vmem:[#allocation5 + $0x1e8] sm:$0xff]
    %v141 = vld [vmem:[#allocation5 + $0x1f0] sm:$0xff]
    %v142 = vld [vmem:[#allocation5 + $0x1f8] sm:$0xff]
    %v143 = vld [vmem:[#allocation5 + $0x200] sm:$0xff]
    %v144 = vld [vmem:[#allocation5 + $0x208] sm:$0xff]
    %v145 = vld [vmem:[#allocation5 + $0x210] sm:$0xff]
    %v146 = vld [vmem:[#allocation5 + $0x218] sm:$0xff]
    %v147 = vld [vmem:[#allocation5 + $0x220] sm:$0xff]
    %v148 = vld [vmem:[#allocation5 + $0x228] sm:$0xff]
    %v149 = vld [vmem:[#allocation5 + $0x230] sm:$0xff]
    %v150 = vld [vmem:[#allocation5 + $0x238] sm:$0xff]
    %v151 = vld [vmem:[#allocation5 + $0x240] sm:$0xff]
    %v152 = vld [vmem:[#allocation5 + $0x248] sm:$0xff]
    %v153 = vld [vmem:[#allocation5 + $0x250] sm:$0xff]
    %v154 = vld [vmem:[#allocation5 + $0x258] sm:$0xff]
    %v155 = vld [vmem:[#allocation5 + $0x260] sm:$0xff]
    %v156 = vld [vmem:[#allocation5 + $0x268] sm:$0xff]
    %v157 = vld [vmem:[#allocation5 + $0x270] sm:$0xff]
    %v158 = vld [vmem:[#allocation5 + $0x278] sm:$0xff]
    %v159 = vld [vmem:[#allocation5 + $0x280] sm:$0xff]
    %v160 = vld [vmem:[#allocation5 + $0x288] sm:$0xff]
    %v161 = vld [vmem:[#allocation5 + $0x290] sm:$0xff]
    %v162 = vld [vmem:[#allocation5 + $0x298] sm:$0xff]
    %v163 = vld [vmem:[#allocation5 + $0x2a0] sm:$0xff]
    %v164 = vld [vmem:[#allocation5 + $0x2a8] sm:$0xff]
    %v165 = vld [vmem:[#allocation5 + $0x2b0] sm:$0xff]
    %v166 = vld [vmem:[#allocation5 + $0x2b8] sm:$0xff]
    %v167 = vld [vmem:[#allocation5 + $0x2c0] sm:$0xff]
    %v168 = vld [vmem:[#allocation5 + $0x2c8] sm:$0xff]
    %v169 = vld [vmem:[#allocation5 + $0x2d0] sm:$0xff]
    %v170 = vld [vmem:[#allocation5 + $0x2d8] sm:$0xff]
    %v171 = vld [vmem:[#allocation5 + $0x2e0] sm:$0xff]
    %v172 = vld [vmem:[#allocation5 + $0x2e8] sm:$0xff]
    %v173 = vld [vmem:[#allocation5 + $0x2f0] sm:$0xff]
    %v174 = vld [vmem:[#allocation5 + $0x2f8] sm:$0xff]
    %v271 = vunpack.c.l.b16 %v79
    %v272 = vunpack.c.h.b16 %v79
    %v273 = vunpack.c.l.b16 %v80
    %v274 = vunpack.c.h.b16 %v80
    %v275 = vunpack.c.l.b16 %v81
    %v276 = vunpack.c.h.b16 %v81
    %v277 = vunpack.c.l.b16 %v82
    %v278 = vunpack.c.h.b16 %v82
    %v279 = vunpack.c.l.b16 %v83
    %v280 = vunpack.c.h.b16 %v83
    %v281 = vunpack.c.l.b16 %v84
    %v282 = vunpack.c.h.b16 %v84
    %v283 = vunpack.c.l.b16 %v85
    %v284 = vunpack.c.h.b16 %v85
    %v285 = vunpack.c.l.b16 %v86
    %v286 = vunpack.c.h.b16 %v86
    %v287 = vunpack.c.l.b16 %v87
    %v288 = vunpack.c.h.b16 %v87
    %v289 = vunpack.c.l.b16 %v88
    %v290 = vunpack.c.h.b16 %v88
    %v291 = vunpack.c.l.b16 %v89
    %v292 = vunpack.c.h.b16 %v89
    %v293 = vunpack.c.l.b16 %v90
    %v294 = vunpack.c.h.b16 %v90
    %v295 = vunpack.c.l.b16 %v91
    %v296 = vunpack.c.h.b16 %v91
    %v297 = vunpack.c.l.b16 %v92
    %v298 = vunpack.c.h.b16 %v92
    %v299 = vunpack.c.l.b16 %v93
    %v300 = vunpack.c.h.b16 %v93
    %v301 = vunpack.c.l.b16 %v94
    %v302 = vunpack.c.h.b16 %v94
    %v303 = vunpack.c.l.b16 %v95
    %v304 = vunpack.c.h.b16 %v95
    %v305 = vunpack.c.l.b16 %v96
    %v306 = vunpack.c.h.b16 %v96
    %v307 = vunpack.c.l.b16 %v97
    %v308 = vunpack.c.h.b16 %v97
    %v309 = vunpack.c.l.b16 %v98
    %v310 = vunpack.c.h.b16 %v98
    %v311 = vunpack.c.l.b16 %v99
    %v312 = vunpack.c.h.b16 %v99
    %v313 = vunpack.c.l.b16 %v100
    %v314 = vunpack.c.h.b16 %v100
    %v315 = vunpack.c.l.b16 %v101
    %v316 = vunpack.c.h.b16 %v101
    %v317 = vunpack.c.l.b16 %v102
    %v318 = vunpack.c.h.b16 %v102
    %v319 = vunpack.c.l.b16 %v103
    %v320 = vunpack.c.h.b16 %v103
    %v321 = vunpack.c.l.b16 %v104
    %v322 = vunpack.c.h.b16 %v104
    %v323 = vunpack.c.l.b16 %v105
    %v324 = vunpack.c.h.b16 %v105
    %v325 = vunpack.c.l.b16 %v106
    %v326 = vunpack.c.h.b16 %v106
    %v327 = vunpack.c.l.b16 %v107
    %v328 = vunpack.c.h.b16 %v107
    %v329 = vunpack.c.l.b16 %v108
    %v330 = vunpack.c.h.b16 %v108
    %v331 = vunpack.c.l.b16 %v109
    %v332 = vunpack.c.h.b16 %v109
    %v333 = vunpack.c.l.b16 %v110
    %v334 = vunpack.c.h.b16 %v110
    %v335 = vunpack.c.l.b16 %v111
    %v336 = vunpack.c.h.b16 %v111
    %v337 = vunpack.c.l.b16 %v112
    %v338 = vunpack.c.h.b16 %v112
    %v339 = vunpack.c.l.b16 %v113
    %v340 = vunpack.c.h.b16 %v113
    %v341 = vunpack.c.l.b16 %v114
    %v342 = vunpack.c.h.b16 %v114
    %v343 = vunpack.c.l.b16 %v115
    %v344 = vunpack.c.h.b16 %v115
    %v345 = vunpack.c.l.b16 %v116
    %v346 = vunpack.c.h.b16 %v116
    %v347 = vunpack.c.l.b16 %v117
    %v348 = vunpack.c.h.b16 %v117
    %v349 = vunpack.c.l.b16 %v118
    %v350 = vunpack.c.h.b16 %v118
    %v351 = vunpack.c.l.b16 %v119
    %v352 = vunpack.c.h.b16 %v119
    %v353 = vunpack.c.l.b16 %v120
    %v354 = vunpack.c.h.b16 %v120
    %v355 = vunpack.c.l.b16 %v121
    %v356 = vunpack.c.h.b16 %v121
    %v357 = vunpack.c.l.b16 %v122
    %v358 = vunpack.c.h.b16 %v122
    %v359 = vunpack.c.l.b16 %v123
    %v360 = vunpack.c.h.b16 %v123
    %v361 = vunpack.c.l.b16 %v124
    %v362 = vunpack.c.h.b16 %v124
    %v363 = vunpack.c.l.b16 %v125
    %v364 = vunpack.c.h.b16 %v125
    %v365 = vunpack.c.l.b16 %v126
    %v366 = vunpack.c.h.b16 %v126
    %v367 = vunpack.c.l.b16 %v127
    %v368 = vunpack.c.h.b16 %v127
    %v369 = vunpack.c.l.b16 %v128
    %v370 = vunpack.c.h.b16 %v128
    %v371 = vunpack.c.l.b16 %v129
    %v372 = vunpack.c.h.b16 %v129
    %v373 = vunpack.c.l.b16 %v130
    %v374 = vunpack.c.h.b16 %v130
    %v375 = vunpack.c.l.b16 %v131
    %v376 = vunpack.c.h.b16 %v131
    %v377 = vunpack.c.l.b16 %v132
    %v378 = vunpack.c.h.b16 %v132
    %v379 = vunpack.c.l.b16 %v133
    %v380 = vunpack.c.h.b16 %v133
    %v381 = vunpack.c.l.b16 %v134
    %v382 = vunpack.c.h.b16 %v134
    %v383 = vunpack.c.l.b16 %v135
    %v384 = vunpack.c.h.b16 %v135
    %v385 = vunpack.c.l.b16 %v136
    %v386 = vunpack.c.h.b16 %v136
    %v387 = vunpack.c.l.b16 %v137
    %v388 = vunpack.c.h.b16 %v137
    %v389 = vunpack.c.l.b16 %v138
    %v390 = vunpack.c.h.b16 %v138
    %v391 = vunpack.c.l.b16 %v139
    %v392 = vunpack.c.h.b16 %v139
    %v393 = vunpack.c.l.b16 %v140
    %v394 = vunpack.c.h.b16 %v140
    %v395 = vunpack.c.l.b16 %v141
    %v396 = vunpack.c.h.b16 %v141
    %v397 = vunpack.c.l.b16 %v142
    %v398 = vunpack.c.h.b16 %v142
    %v399 = vunpack.c.l.b16 %v143
    %v400 = vunpack.c.h.b16 %v143
    %v401 = vunpack.c.l.b16 %v144
    %v402 = vunpack.c.h.b16 %v144
    %v403 = vunpack.c.l.b16 %v145
    %v404 = vunpack.c.h.b16 %v145
    %v405 = vunpack.c.l.b16 %v146
    %v406 = vunpack.c.h.b16 %v146
    %v407 = vunpack.c.l.b16 %v147
    %v408 = vunpack.c.h.b16 %v147
    %v409 = vunpack.c.l.b16 %v148
    %v410 = vunpack.c.h.b16 %v148
    %v411 = vunpack.c.l.b16 %v149
    %v412 = vunpack.c.h.b16 %v149
    %v413 = vunpack.c.l.b16 %v150
    %v414 = vunpack.c.h.b16 %v150
    %v415 = vunpack.c.l.b16 %v151
    %v416 = vunpack.c.h.b16 %v151
    %v417 = vunpack.c.l.b16 %v152
    %v418 = vunpack.c.h.b16 %v152
    %v419 = vunpack.c.l.b16 %v153
    %v420 = vunpack.c.h.b16 %v153
    %v421 = vunpack.c.l.b16 %v154
    %v422 = vunpack.c.h.b16 %v154
    %v423 = vunpack.c.l.b16 %v155
    %v424 = vunpack.c.h.b16 %v155
    %v425 = vunpack.c.l.b16 %v156
    %v426 = vunpack.c.h.b16 %v156
    %v427 = vunpack.c.l.b16 %v157
    %v428 = vunpack.c.h.b16 %v157
    %v429 = vunpack.c.l.b16 %v158
    %v430 = vunpack.c.h.b16 %v158
    %v431 = vunpack.c.l.b16 %v159
    %v432 = vunpack.c.h.b16 %v159
    %v433 = vunpack.c.l.b16 %v160
    %v434 = vunpack.c.h.b16 %v160
    %v435 = vunpack.c.l.b16 %v161
    %v436 = vunpack.c.h.b16 %v161
    %v437 = vunpack.c.l.b16 %v162
    %v438 = vunpack.c.h.b16 %v162
    %v439 = vunpack.c.l.b16 %v163
    %v440 = vunpack.c.h.b16 %v163
    %v441 = vunpack.c.l.b16 %v164
    %v442 = vunpack.c.h.b16 %v164
    %v443 = vunpack.c.l.b16 %v165
    %v444 = vunpack.c.h.b16 %v165
    %v445 = vunpack.c.l.b16 %v166
    %v446 = vunpack.c.h.b16 %v166
    %v447 = vunpack.c.l.b16 %v167
    %v448 = vunpack.c.h.b16 %v167
    %v449 = vunpack.c.l.b16 %v168
    %v450 = vunpack.c.h.b16 %v168
    %v451 = vunpack.c.l.b16 %v169
    %v452 = vunpack.c.h.b16 %v169
    %v453 = vunpack.c.l.b16 %v170
    %v454 = vunpack.c.h.b16 %v170
    %v455 = vunpack.c.l.b16 %v171
    %v456 = vunpack.c.h.b16 %v171
    %v457 = vunpack.c.l.b16 %v172
    %v458 = vunpack.c.h.b16 %v172
    %v459 = vunpack.c.l.b16 %v173
    %v460 = vunpack.c.h.b16 %v173
    %v461 = vunpack.c.l.b16 %v174
    %v462 = vunpack.c.h.b16 %v174
    %v463 = vpack.c.b16 %v277, %v271
    %v464 = vpack.c.b16 %v278, %v272
    %v465 = vpack.c.b16 %v279, %v273
    %v466 = vpack.c.b16 %v280, %v274
    %v467 = vpack.c.b16 %v281, %v275
    %v468 = vpack.c.b16 %v282, %v276
    %v469 = vpack.c.b16 %v289, %v283
    %v470 = vpack.c.b16 %v290, %v284
    %v471 = vpack.c.b16 %v291, %v285
    %v472 = vpack.c.b16 %v292, %v286
    %v473 = vpack.c.b16 %v293, %v287
    %v474 = vpack.c.b16 %v294, %v288
    %v475 = vpack.c.b16 %v301, %v295
    %v476 = vpack.c.b16 %v302, %v296
    %v477 = vpack.c.b16 %v303, %v297
    %v478 = vpack.c.b16 %v304, %v298
    %v479 = vpack.c.b16 %v305, %v299
    %v480 = vpack.c.b16 %v306, %v300
    %v481 = vpack.c.b16 %v313, %v307
    %v482 = vpack.c.b16 %v314, %v308
    %v483 = vpack.c.b16 %v315, %v309
    %v484 = vpack.c.b16 %v316, %v310
    %v485 = vpack.c.b16 %v317, %v311
    %v486 = vpack.c.b16 %v318, %v312
    %v487 = vpack.c.b16 %v325, %v319
    %v488 = vpack.c.b16 %v326, %v320
    %v489 = vpack.c.b16 %v327, %v321
    %v490 = vpack.c.b16 %v328, %v322
    %v491 = vpack.c.b16 %v329, %v323
    %v492 = vpack.c.b16 %v330, %v324
    %v493 = vpack.c.b16 %v337, %v331
    %v494 = vpack.c.b16 %v338, %v332
    %v495 = vpack.c.b16 %v339, %v333
    %v496 = vpack.c.b16 %v340, %v334
    %v497 = vpack.c.b16 %v341, %v335
    %v498 = vpack.c.b16 %v342, %v336
    %v499 = vpack.c.b16 %v349, %v343
    %v500 = vpack.c.b16 %v350, %v344
    %v501 = vpack.c.b16 %v351, %v345
    %v502 = vpack.c.b16 %v352, %v346
    %v503 = vpack.c.b16 %v353, %v347
    %v504 = vpack.c.b16 %v354, %v348
    %v505 = vpack.c.b16 %v361, %v355
    %v506 = vpack.c.b16 %v362, %v356
    %v507 = vpack.c.b16 %v363, %v357
    %v508 = vpack.c.b16 %v364, %v358
    %v509 = vpack.c.b16 %v365, %v359
    %v510 = vpack.c.b16 %v366, %v360
    %v511 = vpack.c.b16 %v373, %v367
    %v512 = vpack.c.b16 %v374, %v368
    %v513 = vpack.c.b16 %v375, %v369
    %v514 = vpack.c.b16 %v376, %v370
    %v515 = vpack.c.b16 %v377, %v371
    %v516 = vpack.c.b16 %v378, %v372
    %v517 = vpack.c.b16 %v385, %v379
    %v518 = vpack.c.b16 %v386, %v380
    %v519 = vpack.c.b16 %v387, %v381
    %v520 = vpack.c.b16 %v388, %v382
    %v521 = vpack.c.b16 %v389, %v383
    %v522 = vpack.c.b16 %v390, %v384
    %v523 = vpack.c.b16 %v397, %v391
    %v524 = vpack.c.b16 %v398, %v392
    %v525 = vpack.c.b16 %v399, %v393
    %v526 = vpack.c.b16 %v400, %v394
    %v527 = vpack.c.b16 %v401, %v395
    %v528 = vpack.c.b16 %v402, %v396
    %v529 = vpack.c.b16 %v409, %v403
    %v530 = vpack.c.b16 %v410, %v404
    %v531 = vpack.c.b16 %v411, %v405
    %v532 = vpack.c.b16 %v412, %v406
    %v533 = vpack.c.b16 %v413, %v407
    %v534 = vpack.c.b16 %v414, %v408
    %v535 = vpack.c.b16 %v421, %v415
    %v536 = vpack.c.b16 %v422, %v416
    %v537 = vpack.c.b16 %v423, %v417
    %v538 = vpack.c.b16 %v424, %v418
    %v539 = vpack.c.b16 %v425, %v419
    %v540 = vpack.c.b16 %v426, %v420
    %v541 = vpack.c.b16 %v433, %v427
    %v542 = vpack.c.b16 %v434, %v428
    %v543 = vpack.c.b16 %v435, %v429
    %v544 = vpack.c.b16 %v436, %v430
    %v545 = vpack.c.b16 %v437, %v431
    %v546 = vpack.c.b16 %v438, %v432
    %v547 = vpack.c.b16 %v445, %v439
    %v548 = vpack.c.b16 %v446, %v440
    %v549 = vpack.c.b16 %v447, %v441
    %v550 = vpack.c.b16 %v448, %v442
    %v551 = vpack.c.b16 %v449, %v443
    %v552 = vpack.c.b16 %v450, %v444
    %v553 = vpack.c.b16 %v457, %v451
    %v554 = vpack.c.b16 %v458, %v452
    %v555 = vpack.c.b16 %v459, %v453
    %v556 = vpack.c.b16 %v460, %v454
    %v557 = vpack.c.b16 %v461, %v455
    %v558 = vpack.c.b16 %v462, %v456
    %655 = vmatprep.subr.bf16.mxu0 %v464
    %656 = vmatpush1.bf16.msra.mxu0 %v463
    %657 = vmatprep.subr.bf16.mxu0 %v470
    %658 = vmatpush1.bf16.msra.mxu0 %v469
    %659 = vmatprep.subr.bf16.mxu0 %v476
    %660 = vmatpush1.bf16.msra.mxu0 %v475
    %661 = vmatprep.subr.bf16.mxu0 %v482
    %662 = vmatpush1.bf16.msra.mxu0 %v481
    %663 = vmatprep.subr.bf16.mxu0 %v488
    %664 = vmatpush1.bf16.msra.mxu0 %v487
    %665 = vmatprep.subr.bf16.mxu0 %v494
    %666 = vmatpush1.bf16.msra.mxu0 %v493
    %667 = vmatprep.subr.bf16.mxu0 %v500
    %668 = vmatpush1.bf16.msra.mxu0 %v499
    %669 = vmatprep.subr.bf16.mxu0 %v506
    %670 = vmatpush1.bf16.msra.mxu0 %v505
    %671 = vmatprep.subr.bf16.mxu0 %v512
    %672 = vmatpush1.bf16.msra.mxu0 %v511
    %673 = vmatprep.subr.bf16.mxu0 %v518
    %674 = vmatpush1.bf16.msra.mxu0 %v517
    %675 = vmatprep.subr.bf16.mxu0 %v524
    %676 = vmatpush1.bf16.msra.mxu0 %v523
    %677 = vmatprep.subr.bf16.mxu0 %v530
    %678 = vmatpush1.bf16.msra.mxu0 %v529
    %679 = vmatprep.subr.bf16.mxu0 %v536
    %680 = vmatpush1.bf16.msra.mxu0 %v535
    %681 = vmatprep.subr.bf16.mxu0 %v542
    %682 = vmatpush1.bf16.msra.mxu0 %v541
    %683 = vmatprep.subr.bf16.mxu0 %v548
    %684 = vmatpush1.bf16.msra.mxu0 %v547
    %685 = vmatprep.subr.bf16.mxu0 %v554
    %686 = vmatpush1.bf16.msra.mxu0 %v553
    %687 = vmatprep.mubr.bf16.mxu0 0
    %688 = vmatmul.mubr.bf16.gmra.mrb[0].mxu0 0
    %v689 = vpop.f32.mrb[0].mxu0
    %v690 = vadd.f32 0.0, %v689
    %v691 = vpop.f32.mrb[0].mxu0
    %v692 = vadd.f32 0.0, %v691
    %v693 = vpop.f32.mrb[0].mxu0
    %v694 = vpop.f32.mrb[0].mxu0
    %695 = vdwg.mxu0
    %696 = vmatprep.subr.bf16.mxu0 %v466
    %697 = vmatpush1.bf16.msra.mxu0 %v465
    %698 = vmatprep.subr.bf16.mxu0 %v472
    %699 = vmatpush1.bf16.msra.mxu0 %v471
    %700 = vmatprep.subr.bf16.mxu0 %v478
    %701 = vmatpush1.bf16.msra.mxu0 %v477
    %702 = vmatprep.subr.bf16.mxu0 %v484
    %703 = vmatpush1.bf16.msra.mxu0 %v483
    %704 = vmatprep.subr.bf16.mxu0 %v490
    %705 = vmatpush1.bf16.msra.mxu0 %v489
    %706 = vmatprep.subr.bf16.mxu0 %v496
    %707 = vmatpush1.bf16.msra.mxu0 %v495
    %708 = vmatprep.subr.bf16.mxu0 %v502
    %709 = vmatpush1.bf16.msra.mxu0 %v501
    %710 = vmatprep.subr.bf16.mxu0 %v508
    %711 = vmatpush1.bf16.msra.mxu0 %v507
    %712 = vmatprep.subr.bf16.mxu0 %v514
    %713 = vmatpush1.bf16.msra.mxu0 %v513
    %714 = vmatprep.subr.bf16.mxu0 %v520
    %715 = vmatpush1.bf16.msra.mxu0 %v519
    %716 = vmatprep.subr.bf16.mxu0 %v526
    %717 = vmatpush1.bf16.msra.mxu0 %v525
    %718 = vmatprep.subr.bf16.mxu0 %v532
    %719 = vmatpush1.bf16.msra.mxu0 %v531
    %720 = vmatprep.subr.bf16.mxu0 %v538
    %721 = vmatpush1.bf16.msra.mxu0 %v537
    %722 = vmatprep.subr.bf16.mxu0 %v544
    %723 = vmatpush1.bf16.msra.mxu0 %v543
    %724 = vmatprep.subr.bf16.mxu0 %v550
    %725 = vmatpush1.bf16.msra.mxu0 %v549
    %726 = vmatprep.subr.bf16.mxu0 %v556
    %727 = vmatpush1.bf16.msra.mxu0 %v555
    %728 = vmatprep.mubr.bf16.mxu0 0
    %729 = vmatmul.mubr.bf16.gmra.mrb[0].mxu0 0
    %v730 = vpop.f32.mrb[0].mxu0
    %v731 = vadd.f32 0.0, %v730
    %v732 = vpop.f32.mrb[0].mxu0
    %v733 = vadd.f32 0.0, %v732
    %v734 = vpop.f32.mrb[0].mxu0
    %v735 = vpop.f32.mrb[0].mxu0
    %736 = vdwg.mxu0
    %737 = vmatprep.subr.bf16.mxu0 %v468
    %738 = vmatpush1.bf16.msra.mxu0 %v467
    %739 = vmatprep.subr.bf16.mxu0 %v474
    %740 = vmatpush1.bf16.msra.mxu0 %v473
    %741 = vmatprep.subr.bf16.mxu0 %v480
    %742 = vmatpush1.bf16.msra.mxu0 %v479
    %743 = vmatprep.subr.bf16.mxu0 %v486
    %744 = vmatpush1.bf16.msra.mxu0 %v485
    %745 = vmatprep.subr.bf16.mxu0 %v492
    %746 = vmatpush1.bf16.msra.mxu0 %v491
    %747 = vmatprep.subr.bf16.mxu0 %v498
    %748 = vmatpush1.bf16.msra.mxu0 %v497
    %749 = vmatprep.subr.bf16.mxu0 %v504
    %750 = vmatpush1.bf16.msra.mxu0 %v503
    %751 = vmatprep.subr.bf16.mxu0 %v510
    %752 = vmatpush1.bf16.msra.mxu0 %v509
    %753 = vmatprep.subr.bf16.mxu0 %v516
    %754 = vmatpush1.bf16.msra.mxu0 %v515
    %755 = vmatprep.subr.bf16.mxu0 %v522
    %756 = vmatpush1.bf16.msra.mxu0 %v521
    %757 = vmatprep.subr.bf16.mxu0 %v528
    %758 = vmatpush1.bf16.msra.mxu0 %v527
    %759 = vmatprep.subr.bf16.mxu0 %v534
    %760 = vmatpush1.bf16.msra.mxu0 %v533
    %761 = vmatprep.subr.bf16.mxu0 %v540
    %762 = vmatpush1.bf16.msra.mxu0 %v539
    %763 = vmatprep.subr.bf16.mxu0 %v546
    %764 = vmatpush1.bf16.msra.mxu0 %v545
    %765 = vmatprep.subr.bf16.mxu0 %v552
    %766 = vmatpush1.bf16.msra.mxu0 %v551
    %767 = vmatprep.subr.bf16.mxu0 %v558
    %768 = vmatpush1.bf16.msra.mxu0 %v557
    %769 = vmatprep.mubr.bf16.mxu0 0
    %770 = vmatmul.mubr.bf16.gmra.mrb[0].mxu0 0
    %v771 = vpop.f32.mrb[0].mxu0
    %v772 = vadd.f32 0.0, %v771
    %v773 = vpop.f32.mrb[0].mxu0
    %v774 = vadd.f32 0.0, %v773
    %v775 = vpop.f32.mrb[0].mxu0
    %v776 = vpop.f32.mrb[0].mxu0
    %777 = vdwg.mxu0
    %v779 = vlaneseq
    %v780 = vshrl.u32 %v779, 7
    %v781 = vsub.s32 0, %v780
    %v782 = vrot.slane %v72, %v781
    %v783 = vlaneseq
    %v784 = vshrl.u32 %v783, 7
    %v785 = vsub.s32 1, %v784
    %v786 = vrot.slane %v72, %v785
    %v787 = vlaneseq
    %v788 = vshrl.u32 %v787, 7
    %v789 = vsub.s32 2, %v788
    %v790 = vrot.slane %v72, %v789
    %v794 = vadd.f32 %v690, %v782
    %v795 = vadd.f32 %v692, %v786
    %v796 = vadd.f32 %v731, %v790
    %v798 = vlaneseq
    %v799 = vshrl.u32 %v798, 7
    %v800 = vsub.s32 0, %v799
    %v801 = vrot.slane %v76, %v800
    %v802 = vlaneseq
    %v803 = vshrl.u32 %v802, 7
    %v804 = vsub.s32 1, %v803
    %v805 = vrot.slane %v76, %v804
    %v806 = vlaneseq
    %v807 = vshrl.u32 %v806, 7
    %v808 = vsub.s32 2, %v807
    %v809 = vrot.slane %v76, %v808
    %v813 = vadd.f32 %v733, %v801
    %v814 = vadd.f32 %v772, %v805
    %v815 = vadd.f32 %v774, %v809
    %v816 = vld [vmem:[#allocation2] sm:$0xff]
    %v817 = vld [vmem:[#allocation2 + $0x8] sm:$0xff]
    %v818 = vld [vmem:[#allocation2 + $0x10] sm:$0xff]
    %v819 = vadd.f32 %v816, %v794
    %v820 = vadd.f32 %v817, %v795
    %v821 = vmul.f32 %v819, 0.5
    %v822 = vmul.f32 %v820, 0.5
    %v823 = vtanh.pop %v821
    %v824 = vtanh.pop %v822
    %v825 = vmul.f32 %v823, 0.5
    %v826 = vmul.f32 %v824, 0.5
    %v827 = vadd.f32 %v825, 0.5
    %v828 = vadd.f32 %v826, 0.5
    %v829 = vmul.f32 %v827, %v796
    %v830 = vadd.f32 %v818, %v829
    %v831 = vtanh.pop %v830
    %v832 = vsub.f32 1.0, %v828
    %v833 = vmul.f32 %v832, %v831
    %v834 = vmul.f32 %v828, 0.0
    %v835 = vadd.f32 %v833, %v834
    %v836 = vpack.c.bf16 %v835, %v835
    %v837 = vld [vmem:[#allocation7] sm:$0xff]
    %v838 = vld [vmem:[#allocation7 + $0x8] sm:$0xf]
    %v839 = vld [vmem:[#allocation7 + $0xc] sm:$0xff]
    %v840 = vld [vmem:[#allocation7 + $0x14] sm:$0xf]
    %v841 = vld [vmem:[#allocation7 + $0x18] sm:$0xff]
    %v842 = vld [vmem:[#allocation7 + $0x20] sm:$0xf]
    %v843 = vld [vmem:[#allocation7 + $0x24] sm:$0xff]
    %v844 = vld [vmem:[#allocation7 + $0x2c] sm:$0xf]
    %v845 = vld [vmem:[#allocation7 + $0x30] sm:$0xff]
    %v846 = vld [vmem:[#allocation7 + $0x38] sm:$0xf]
    %v847 = vld [vmem:[#allocation7 + $0x3c] sm:$0xff]
    %v848 = vld [vmem:[#allocation7 + $0x44] sm:$0xf]
    %v849 = vld [vmem:[#allocation7 + $0x48] sm:$0xff]
    %v850 = vld [vmem:[#allocation7 + $0x50] sm:$0xf]
    %v851 = vld [vmem:[#allocation7 + $0x54] sm:$0xff]
    %v852 = vld [vmem:[#allocation7 + $0x5c] sm:$0xf]
    %v853 = vld [vmem:[#allocation7 + $0x60] sm:$0xff]
    %v854 = vld [vmem:[#allocation7 + $0x68] sm:$0xf]
    %v855 = vld [vmem:[#allocation7 + $0x6c] sm:$0xff]
    %v856 = vld [vmem:[#allocation7 + $0x74] sm:$0xf]
    %v857 = vld [vmem:[#allocation7 + $0x78] sm:$0xff]
    %v858 = vld [vmem:[#allocation7 + $0x80] sm:$0xf]
    %v859 = vld [vmem:[#allocation7 + $0x84] sm:$0xff]
    %v860 = vld [vmem:[#allocation7 + $0x8c] sm:$0xf]
    %v861 = vld [vmem:[#allocation7 + $0x90] sm:$0xff]
    %v862 = vld [vmem:[#allocation7 + $0x98] sm:$0xf]
    %v863 = vld [vmem:[#allocation7 + $0x9c] sm:$0xff]
    %v864 = vld [vmem:[#allocation7 + $0xa4] sm:$0xf]
    %v865 = vld [vmem:[#allocation7 + $0xa8] sm:$0xff]
    %v866 = vld [vmem:[#allocation7 + $0xb0] sm:$0xf]
    %v867 = vld [vmem:[#allocation7 + $0xb4] sm:$0xff]
    %v868 = vld [vmem:[#allocation7 + $0xbc] sm:$0xf]
    %v870 = vlaneseq
    %v871 = vshrl.u32 %v870, 7
    %v872 = vsub.s32 0, %v871
    %v873 = vrot.slane %v74, %v872
    %v874 = vlaneseq
    %v875 = vshrl.u32 %v874, 7
    %v876 = vsub.s32 1, %v875
    %v877 = vrot.slane %v74, %v876
    %v878 = vlaneseq
    %v879 = vshrl.u32 %v878, 7
    %v880 = vsub.s32 2, %v879
    %v881 = vrot.slane %v74, %v880
    %v917 = vunpack.c.l.b16 %v837
    %v918 = vunpack.c.h.b16 %v837
    %v919 = vunpack.c.l.b16 %v838
    %v920 = vunpack.c.l.b16 %v839
    %v921 = vunpack.c.h.b16 %v839
    %v922 = vunpack.c.l.b16 %v840
    %v923 = vunpack.c.l.b16 %v841
    %v924 = vunpack.c.h.b16 %v841
    %v925 = vunpack.c.l.b16 %v842
    %v926 = vunpack.c.l.b16 %v843
    %v927 = vunpack.c.h.b16 %v843
    %v928 = vunpack.c.l.b16 %v844
    %v929 = vunpack.c.l.b16 %v845
    %v930 = vunpack.c.h.b16 %v845
    %v931 = vunpack.c.l.b16 %v846
    %v932 = vunpack.c.l.b16 %v847
    %v933 = vunpack.c.h.b16 %v847
    %v934 = vunpack.c.l.b16 %v848
    %v935 = vunpack.c.l.b16 %v849
    %v936 = vunpack.c.h.b16 %v849
    %v937 = vunpack.c.l.b16 %v850
    %v938 = vunpack.c.l.b16 %v851
    %v939 = vunpack.c.h.b16 %v851
    %v940 = vunpack.c.l.b16 %v852
    %v941 = vunpack.c.l.b16 %v853
    %v942 = vunpack.c.h.b16 %v853
    %v943 = vunpack.c.l.b16 %v854
    %v944 = vunpack.c.l.b16 %v855
    %v945 = vunpack.c.h.b16 %v855
    %v946 = vunpack.c.l.b16 %v856
    %v947 = vunpack.c.l.b16 %v857
    %v948 = vunpack.c.h.b16 %v857
    %v949 = vunpack.c.l.b16 %v858
    %v950 = vunpack.c.l.b16 %v859
    %v951 = vunpack.c.h.b16 %v859
    %v952 = vunpack.c.l.b16 %v860
    %v953 = vunpack.c.l.b16 %v861
    %v954 = vunpack.c.h.b16 %v861
    %v955 = vunpack.c.l.b16 %v862
    %v956 = vunpack.c.l.b16 %v863
    %v957 = vunpack.c.h.b16 %v863
    %v958 = vunpack.c.l.b16 %v864
    %v959 = vunpack.c.l.b16 %v865
    %v960 = vunpack.c.h.b16 %v865
    %v961 = vunpack.c.l.b16 %v866
    %v962 = vunpack.c.l.b16 %v867
    %v963 = vunpack.c.h.b16 %v867
    %v964 = vunpack.c.l.b16 %v868
    %v965 = vpack.c.b16 %v920, %v917
    %v966 = vpack.c.b16 %v921, %v918
    %v967 = vpack.c.b16 %v922, %v919
    %v968 = vpack.c.b16 %v926, %v923
    %v969 = vpack.c.b16 %v927, %v924
    %v970 = vpack.c.b16 %v928, %v925
    %v971 = vpack.c.b16 %v932, %v929
    %v972 = vpack.c.b16 %v933, %v930
    %v973 = vpack.c.b16 %v934, %v931
    %v974 = vpack.c.b16 %v938, %v935
    %v975 = vpack.c.b16 %v939, %v936
    %v976 = vpack.c.b16 %v940, %v937
    %v977 = vpack.c.b16 %v944, %v941
    %v978 = vpack.c.b16 %v945, %v942
    %v979 = vpack.c.b16 %v946, %v943
    %v980 = vpack.c.b16 %v950, %v947
    %v981 = vpack.c.b16 %v951, %v948
    %v982 = vpack.c.b16 %v952, %v949
    %v983 = vpack.c.b16 %v956, %v953
    %v984 = vpack.c.b16 %v957, %v954
    %v985 = vpack.c.b16 %v958, %v955
    %v986 = vpack.c.b16 %v962, %v959
    %v987 = vpack.c.b16 %v963, %v960
    %v988 = vpack.c.b16 %v964, %v961
    %1013 = vmatprep.subr.bf16.mxu0 %v966
    %1014 = vmatpush1.bf16.msra.mxu0 %v965
    %1015 = vmatprep.subr.bf16.mxu0 %v969
    %1016 = vmatpush1.bf16.msra.mxu0 %v968
    %1017 = vmatprep.subr.bf16.mxu0 %v972
    %1018 = vmatpush1.bf16.msra.mxu0 %v971
    %1019 = vmatprep.subr.bf16.mxu0 %v975
    %1020 = vmatpush1.bf16.msra.mxu0 %v974
    %1021 = vmatprep.subr.bf16.mxu0 %v978
    %1022 = vmatpush1.bf16.msra.mxu0 %v977
    %1023 = vmatprep.subr.bf16.mxu0 %v981
    %1024 = vmatpush1.bf16.msra.mxu0 %v980
    %1025 = vmatprep.subr.bf16.mxu0 %v984
    %1026 = vmatpush1.bf16.msra.mxu0 %v983
    %1027 = vmatprep.subr.bf16.mxu0 %v987
    %1028 = vmatpush1.bf16.msra.mxu0 %v986
    %1029 = vmatprep.subr.bf16.mxu0 0
    %1030 = vmatpush1.bf16.msra.mxu0 0
    %1031 = vmatprep.subr.bf16.mxu0 0
    %1032 = vmatpush1.bf16.msra.mxu0 0
    %1033 = vmatprep.subr.bf16.mxu0 0
    %1034 = vmatpush1.bf16.msra.mxu0 0
    %1035 = vmatprep.subr.bf16.mxu0 0
    %1036 = vmatpush1.bf16.msra.mxu0 0
    %1037 = vmatprep.subr.bf16.mxu0 0
    %1038 = vmatpush1.bf16.msra.mxu0 0
    %1039 = vmatprep.subr.bf16.mxu0 0
    %1040 = vmatpush1.bf16.msra.mxu0 0
    %1041 = vmatprep.subr.bf16.mxu0 0
    %1042 = vmatpush1.bf16.msra.mxu0 0
    %1043 = vmatprep.subr.bf16.mxu0 0
    %1044 = vmatpush1.bf16.msra.mxu0 0
    %1045 = vmatprep.mubr.bf16.mxu0 0
    %1046 = vmatmul.mubr.bf16.gmra.mrb[0].mxu0 %v836
    %v1047 = vpop.f32.mrb[0].mxu0
    %v1048 = vadd.f32 %v873, %v1047
    %v1049 = vpop.f32.mrb[0].mxu0
    %v1050 = vadd.f32 %v877, %v1049
    %v1051 = vpop.f32.mrb[0].mxu0
    %v1052 = vpop.f32.mrb[0].mxu0
    %1053 = vdwg.mxu0
    %1054 = vmatprep.subr.bf16.mxu0 0
    %1055 = vmatpush1.bf16.msra.mxu0 %v967
    %1056 = vmatprep.subr.bf16.mxu0 0
    %1057 = vmatpush1.bf16.msra.mxu0 %v970
    %1058 = vmatprep.subr.bf16.mxu0 0
    %1059 = vmatpush1.bf16.msra.mxu0 %v973
    %1060 = vmatprep.subr.bf16.mxu0 0
    %1061 = vmatpush1.bf16.msra.mxu0 %v976
    %1062 = vmatprep.subr.bf16.mxu0 0
    %1063 = vmatpush1.bf16.msra.mxu0 %v979
    %1064 = vmatprep.subr.bf16.mxu0 0
    %1065 = vmatpush1.bf16.msra.mxu0 %v982
    %1066 = vmatprep.subr.bf16.mxu0 0
    %1067 = vmatpush1.bf16.msra.mxu0 %v985
    %1068 = vmatprep.subr.bf16.mxu0 0
    %1069 = vmatpush1.bf16.msra.mxu0 %v988
    %1070 = vmatprep.subr.bf16.mxu0 0
    %1071 = vmatpush1.bf16.msra.mxu0 0
    %1072 = vmatprep.subr.bf16.mxu0 0
    %1073 = vmatpush1.bf16.msra.mxu0 0
    %1074 = vmatprep.subr.bf16.mxu0 0
    %1075 = vmatpush1.bf16.msra.mxu0 0
    %1076 = vmatprep.subr.bf16.mxu0 0
    %1077 = vmatpush1.bf16.msra.mxu0 0
    %1078 = vmatprep.subr.bf16.mxu0 0
    %1079 = vmatpush1.bf16.msra.mxu0 0
    %1080 = vmatprep.subr.bf16.mxu0 0
    %1081 = vmatpush1.bf16.msra.mxu0 0
    %1082 = vmatprep.subr.bf16.mxu0 0
    %1083 = vmatpush1.bf16.msra.mxu0 0
    %1084 = vmatprep.subr.bf16.mxu0 0
    %1085 = vmatpush1.bf16.msra.mxu0 0
    %1086 = vmatprep.mubr.bf16.mxu0 0
    %1087 = vmatmul.mubr.bf16.gmra.mrb[0].mxu0 %v836
    %v1088 = vpop.f32.mrb[0].mxu0
    %v1089 = vadd.f32 %v881, %v1088
    %v1090 = vpop.f32.mrb[0].mxu0
    %v1091 = vpop.f32.mrb[0].mxu0
    %v1092 = vpop.f32.mrb[0].mxu0
    %1093 = vdwg.mxu0
    %v1094 = vadd.f32 %v1048, %v813
    %v1095 = vadd.f32 %v1050, %v814
    %v1096 = vmul.f32 %v1094, 0.5
    %v1097 = vmul.f32 %v1095, 0.5
    %v1098 = vtanh.pop %v1096
    %v1099 = vtanh.pop %v1097
    %v1100 = vmul.f32 %v1098, 0.5
    %v1101 = vmul.f32 %v1099, 0.5
    %v1102 = vadd.f32 %v1100, 0.5
    %v1103 = vadd.f32 %v1101, 0.5
    %v1104 = vmul.f32 %v1102, %v815
    %v1105 = vadd.f32 %v1089, %v1104
    %v1106 = vtanh.pop %v1105
    %v1107 = vsub.f32 1.0, %v1103
    %v1108 = vmul.f32 %v1107, %v1106
    %v1109 = vmul.f32 %v1103, 0.0
    %v1110 = vadd.f32 %v1108, %v1109
    %v1111 = vpack.c.bf16 %v1110, %v1110
    %1112 = vmatprep.subr.bf16.mxu0 %v464
    %1113 = vmatpush1.bf16.msra.mxu0 %v463
    %1114 = vmatprep.subr.bf16.mxu0 %v470
    %1115 = vmatpush1.bf16.msra.mxu0 %v469
    %1116 = vmatprep.subr.bf16.mxu0 %v476
    %1117 = vmatpush1.bf16.msra.mxu0 %v475
    %1118 = vmatprep.subr.bf16.mxu0 %v482
    %1119 = vmatpush1.bf16.msra.mxu0 %v481
    %1120 = vmatprep.subr.bf16.mxu0 %v488
    %1121 = vmatpush1.bf16.msra.mxu0 %v487
    %1122 = vmatprep.subr.bf16.mxu0 %v494
    %1123 = vmatpush1.bf16.msra.mxu0 %v493
    %1124 = vmatprep.subr.bf16.mxu0 %v500
    %1125 = vmatpush1.bf16.msra.mxu0 %v499
    %1126 = vmatprep.subr.bf16.mxu0 %v506
    %1127 = vmatpush1.bf16.msra.mxu0 %v505
    %1128 = vmatprep.subr.bf16.mxu0 %v512
    %1129 = vmatpush1.bf16.msra.mxu0 %v511
    %1130 = vmatprep.subr.bf16.mxu0 %v518
    %1131 = vmatpush1.bf16.msra.mxu0 %v517
    %1132 = vmatprep.subr.bf16.mxu0 %v524
    %1133 = vmatpush1.bf16.msra.mxu0 %v523
    %1134 = vmatprep.subr.bf16.mxu0 %v530
    %1135 = vmatpush1.bf16.msra.mxu0 %v529
    %1136 = vmatprep.subr.bf16.mxu0 %v536
    %1137 = vmatpush1.bf16.msra.mxu0 %v535
    %1138 = vmatprep.subr.bf16.mxu0 %v542
    %1139 = vmatpush1.bf16.msra.mxu0 %v541
    %1140 = vmatprep.subr.bf16.mxu0 %v548
    %1141 = vmatpush1.bf16.msra.mxu0 %v547
    %1142 = vmatprep.subr.bf16.mxu0 %v554
    %1143 = vmatpush1.bf16.msra.mxu0 %v553
    %1144 = vmatprep.mubr.bf16.mxu0 %v1111
    %1145 = vmatmul.mubr.bf16.gmra.mrb[0].mxu0 %v836
    %v1146 = vpop.f32.mrb[0].mxu0
    %v1147 = vadd.f32 0.0, %v1146
    %v1148 = vpop.f32.mrb[0].mxu0
    %v1149 = vadd.f32 0.0, %v1148
    %v1150 = vpop.f32.mrb[0].mxu0
    %v1151 = vpop.f32.mrb[0].mxu0
    %1152 = vdwg.mxu0
    %1153 = vmatprep.subr.bf16.mxu0 %v466
    %1154 = vmatpush1.bf16.msra.mxu0 %v465
    %1155 = vmatprep.subr.bf16.mxu0 %v472
    %1156 = vmatpush1.bf16.msra.mxu0 %v471
    %1157 = vmatprep.subr.bf16.mxu0 %v478
    %1158 = vmatpush1.bf16.msra.mxu0 %v477
    %1159 = vmatprep.subr.bf16.mxu0 %v484
    %1160 = vmatpush1.bf16.msra.mxu0 %v483
    %1161 = vmatprep.subr.bf16.mxu0 %v490
    %1162 = vmatpush1.bf16.msra.mxu0 %v489
    %1163 = vmatprep.subr.bf16.mxu0 %v496
    %1164 = vmatpush1.bf16.msra.mxu0 %v495
    %1165 = vmatprep.subr.bf16.mxu0 %v502
    %1166 = vmatpush1.bf16.msra.mxu0 %v501
    %1167 = vmatprep.subr.bf16.mxu0 %v508
    %1168 = vmatpush1.bf16.msra.mxu0 %v507
    %1169 = vmatprep.subr.bf16.mxu0 %v514
    %1170 = vmatpush1.bf16.msra.mxu0 %v513
    %1171 = vmatprep.subr.bf16.mxu0 %v520
    %1172 = vmatpush1.bf16.msra.mxu0 %v519
    %1173 = vmatprep.subr.bf16.mxu0 %v526
    %1174 = vmatpush1.bf16.msra.mxu0 %v525
    %1175 = vmatprep.subr.bf16.mxu0 %v532
    %1176 = vmatpush1.bf16.msra.mxu0 %v531
    %1177 = vmatprep.subr.bf16.mxu0 %v538
    %1178 = vmatpush1.bf16.msra.mxu0 %v537
    %1179 = vmatprep.subr.bf16.mxu0 %v544
    %1180 = vmatpush1.bf16.msra.mxu0 %v543
    %1181 = vmatprep.subr.bf16.mxu0 %v550
    %1182 = vmatpush1.bf16.msra.mxu0 %v549
    %1183 = vmatprep.subr.bf16.mxu0 %v556
    %1184 = vmatpush1.bf16.msra.mxu0 %v555
    %1185 = vmatprep.mubr.bf16.mxu0 %v1111
    %1186 = vmatmul.mubr.bf16.gmra.mrb[0].mxu0 %v836
    %v1187 = vpop.f32.mrb[0].mxu0
    %v1188 = vadd.f32 0.0, %v1187
    %v1189 = vpop.f32.mrb[0].mxu0
    %v1190 = vadd.f32 0.0, %v1189
    %v1191 = vpop.f32.mrb[0].mxu0
    %v1192 = vpop.f32.mrb[0].mxu0
    %1193 = vdwg.mxu0
    %1194 = vmatprep.subr.bf16.mxu0 %v468
    %1195 = vmatpush1.bf16.msra.mxu0 %v467
    %1196 = vmatprep.subr.bf16.mxu0 %v474
    %1197 = vmatpush1.bf16.msra.mxu0 %v473
    %1198 = vmatprep.subr.bf16.mxu0 %v480
    %1199 = vmatpush1.bf16.msra.mxu0 %v479
    %1200 = vmatprep.subr.bf16.mxu0 %v486
    %1201 = vmatpush1.bf16.msra.mxu0 %v485
    %1202 = vmatprep.subr.bf16.mxu0 %v492
    %1203 = vmatpush1.bf16.msra.mxu0 %v491
    %1204 = vmatprep.subr.bf16.mxu0 %v498
    %1205 = vmatpush1.bf16.msra.mxu0 %v497
    %1206 = vmatprep.subr.bf16.mxu0 %v504
    %1207 = vmatpush1.bf16.msra.mxu0 %v503
    %1208 = vmatprep.subr.bf16.mxu0 %v510
    %1209 = vmatpush1.bf16.msra.mxu0 %v509
    %1210 = vmatprep.subr.bf16.mxu0 %v516
    %1211 = vmatpush1.bf16.msra.mxu0 %v515
    %1212 = vmatprep.subr.bf16.mxu0 %v522
    %1213 = vmatpush1.bf16.msra.mxu0 %v521
    %1214 = vmatprep.subr.bf16.mxu0 %v528
    %1215 = vmatpush1.bf16.msra.mxu0 %v527
    %1216 = vmatprep.subr.bf16.mxu0 %v534
    %1217 = vmatpush1.bf16.msra.mxu0 %v533
    %1218 = vmatprep.subr.bf16.mxu0 %v540
    %1219 = vmatpush1.bf16.msra.mxu0 %v539
    %1220 = vmatprep.subr.bf16.mxu0 %v546
    %1221 = vmatpush1.bf16.msra.mxu0 %v545
    %1222 = vmatprep.subr.bf16.mxu0 %v552
    %1223 = vmatpush1.bf16.msra.mxu0 %v551
    %1224 = vmatprep.subr.bf16.mxu0 %v558
    %1225 = vmatpush1.bf16.msra.mxu0 %v557
    %1226 = vmatprep.mubr.bf16.mxu0 %v1111
    %1227 = vmatmul.mubr.bf16.gmra.mrb[0].mxu0 %v836
    %v1228 = vpop.f32.mrb[0].mxu0
    %v1229 = vadd.f32 0.0, %v1228
    %v1230 = vpop.f32.mrb[0].mxu0
    %v1231 = vadd.f32 0.0, %v1230
    %v1232 = vpop.f32.mrb[0].mxu0
    %v1233 = vpop.f32.mrb[0].mxu0
    %1234 = vdwg.mxu0
    %v1235 = vadd.f32 %v1147, %v782
    %v1236 = vadd.f32 %v1149, %v786
    %v1237 = vadd.f32 %v1188, %v790
    %v1238 = vadd.f32 %v1190, %v801
    %v1239 = vadd.f32 %v1229, %v805
    %v1240 = vadd.f32 %v1231, %v809
    %s1241 = scalar_lea.vmem [#allocation2], 24
    %v1242 = vld [vmem:[%s1241] sm:$0xff]
    %v1243 = vld [vmem:[%s1241 + $0x8] sm:$0xff]
    %v1244 = vld [vmem:[%s1241 + $0x10] sm:$0xff]
    %v1245 = vadd.f32 %v1242, %v1235
    %v1246 = vadd.f32 %v1243, %v1236
    %v1247 = vmul.f32 %v1245, 0.5
    %v1248 = vmul.f32 %v1246, 0.5
    %v1249 = vtanh.pop %v1247
    %v1250 = vtanh.pop %v1248
    %v1251 = vmul.f32 %v1249, 0.5
    %v1252 = vmul.f32 %v1250, 0.5
    %v1253 = vadd.f32 %v1251, 0.5
    %v1254 = vadd.f32 %v1252, 0.5
    %v1255 = vmul.f32 %v1253, %v1237
    %v1256 = vadd.f32 %v1244, %v1255
    %v1257 = vtanh.pop %v1256
    %v1258 = vsub.f32 1.0, %v1254
    %v1259 = vmul.f32 %v1258, %v1257
    %v1260 = vmul.f32 %v1254, %v835
    %v1261 = vadd.f32 %v1259, %v1260
    %v1262 = vpack.c.bf16 %v1261, %v1261
    %1263 = vmatprep.subr.bf16.mxu0 %v966
    %1264 = vmatpush1.bf16.msra.mxu0 %v965
    %1265 = vmatprep.subr.bf16.mxu0 %v969
    %1266 = vmatpush1.bf16.msra.mxu0 %v968
    %1267 = vmatprep.subr.bf16.mxu0 %v972
    %1268 = vmatpush1.bf16.msra.mxu0 %v971
    %1269 = vmatprep.subr.bf16.mxu0 %v975
    %1270 = vmatpush1.bf16.msra.mxu0 %v974
    %1271 = vmatprep.subr.bf16.mxu0 %v978
    %1272 = vmatpush1.bf16.msra.mxu0 %v977
    %1273 = vmatprep.subr.bf16.mxu0 %v981
    %1274 = vmatpush1.bf16.msra.mxu0 %v980
    %1275 = vmatprep.subr.bf16.mxu0 %v984
    %1276 = vmatpush1.bf16.msra.mxu0 %v983
    %1277 = vmatprep.subr.bf16.mxu0 %v987
    %1278 = vmatpush1.bf16.msra.mxu0 %v986
    %1279 = vmatprep.subr.bf16.mxu0 0
    %1280 = vmatpush1.bf16.msra.mxu0 0
    %1281 = vmatprep.subr.bf16.mxu0 0
    %1282 = vmatpush1.bf16.msra.mxu0 0
    %1283 = vmatprep.subr.bf16.mxu0 0
    %1284 = vmatpush1.bf16.msra.mxu0 0
    %1285 = vmatprep.subr.bf16.mxu0 0
    %1286 = vmatpush1.bf16.msra.mxu0 0
    %1287 = vmatprep.subr.bf16.mxu0 0
    %1288 = vmatpush1.bf16.msra.mxu0 0
    %1289 = vmatprep.subr.bf16.mxu0 0
    %1290 = vmatpush1.bf16.msra.mxu0 0
    %1291 = vmatprep.subr.bf16.mxu0 0
    %1292 = vmatpush1.bf16.msra.mxu0 0
    %1293 = vmatprep.subr.bf16.mxu0 0
    %1294 = vmatpush1.bf16.msra.mxu0 0
    %1295 = vmatprep.mubr.bf16.mxu0 0
    %1296 = vmatmul.mubr.bf16.gmra.mrb[0].mxu0 %v1262
    %v1297 = vpop.f32.mrb[0].mxu0
    %v1298 = vadd.f32 %v873, %v1297
    %v1299 = vpop.f32.mrb[0].mxu0
    %v1300 = vadd.f32 %v877, %v1299
    %v1301 = vpop.f32.mrb[0].mxu0
    %v1302 = vpop.f32.mrb[0].mxu0
    %1303 = vdwg.mxu0
    %1304 = vmatprep.subr.bf16.mxu0 0
    %1305 = vmatpush1.bf16.msra.mxu0 %v967
    %1306 = vmatprep.subr.bf16.mxu0 0
    %1307 = vmatpush1.bf16.msra.mxu0 %v970
    %1308 = vmatprep.subr.bf16.mxu0 0
    %1309 = vmatpush1.bf16.msra.mxu0 %v973
    %1310 = vmatprep.subr.bf16.mxu0 0
    %1311 = vmatpush1.bf16.msra.mxu0 %v976
    %1312 = vmatprep.subr.bf16.mxu0 0
    %1313 = vmatpush1.bf16.msra.mxu0 %v979
    %1314 = vmatprep.subr.bf16.mxu0 0
    %1315 = vmatpush1.bf16.msra.mxu0 %v982
    %1316 = vmatprep.subr.bf16.mxu0 0
    %1317 = vmatpush1.bf16.msra.mxu0 %v985
    %1318 = vmatprep.subr.bf16.mxu0 0
    %1319 = vmatpush1.bf16.msra.mxu0 %v988
    %1320 = vmatprep.subr.bf16.mxu0 0
    %1321 = vmatpush1.bf16.msra.mxu0 0
    %1322 = vmatprep.subr.bf16.mxu0 0
    %1323 = vmatpush1.bf16.msra.mxu0 0
    %1324 = vmatprep.subr.bf16.mxu0 0
    %1325 = vmatpush1.bf16.msra.mxu0 0
    %1326 = vmatprep.subr.bf16.mxu0 0
    %1327 = vmatpush1.bf16.msra.mxu0 0
    %1328 = vmatprep.subr.bf16.mxu0 0
    %1329 = vmatpush1.bf16.msra.mxu0 0
    %1330 = vmatprep.subr.bf16.mxu0 0
    %1331 = vmatpush1.bf16.msra.mxu0 0
    %1332 = vmatprep.subr.bf16.mxu0 0
    %1333 = vmatpush1.bf16.msra.mxu0 0
    %1334 = vmatprep.subr.bf16.mxu0 0
    %1335 = vmatpush1.bf16.msra.mxu0 0
    %1336 = vmatprep.mubr.bf16.mxu0 0
    %1337 = vmatmul.mubr.bf16.gmra.mrb[0].mxu0 %v1262
    %v1338 = vpop.f32.mrb[0].mxu0
    %v1339 = vadd.f32 %v881, %v1338
    %v1340 = vpop.f32.mrb[0].mxu0
    %v1341 = vpop.f32.mrb[0].mxu0
    %v1342 = vpop.f32.mrb[0].mxu0
    %1343 = vdwg.mxu0
    %v1344 = vadd.f32 %v1298, %v1238
    %v1345 = vadd.f32 %v1300, %v1239
    %v1346 = vmul.f32 %v1344, 0.5
    %v1347 = vmul.f32 %v1345, 0.5
    %v1348 = vtanh.pop %v1346
    %v1349 = vtanh.pop %v1347
    %v1350 = vmul.f32 %v1348, 0.5
    %v1351 = vmul.f32 %v1349, 0.5
    %v1352 = vadd.f32 %v1350, 0.5
    %v1353 = vadd.f32 %v1351, 0.5
    %v1354 = vmul.f32 %v1352, %v1240
    %v1355 = vadd.f32 %v1339, %v1354
    %v1356 = vtanh.pop %v1355
    %v1357 = vsub.f32 1.0, %v1353
    %v1358 = vmul.f32 %v1357, %v1356
    %v1359 = vmul.f32 %v1353, %v1110
    %v1360 = vadd.f32 %v1358, %v1359
    %v1361 = vpack.c.bf16 %v1360, %v1360
    %1362 = vmatprep.subr.bf16.mxu0 %v464
    %1363 = vmatpush1.bf16.msra.mxu0 %v463
    %1364 = vmatprep.subr.bf16.mxu0 %v470
    %1365 = vmatpush1.bf16.msra.mxu0 %v469
    %1366 = vmatprep.subr.bf16.mxu0 %v476
    %1367 = vmatpush1.bf16.msra.mxu0 %v475
    %1368 = vmatprep.subr.bf16.mxu0 %v482
    %1369 = vmatpush1.bf16.msra.mxu0 %v481
    %1370 = vmatprep.subr.bf16.mxu0 %v488
    %1371 = vmatpush1.bf16.msra.mxu0 %v487
    %1372 = vmatprep.subr.bf16.mxu0 %v494
    %1373 = vmatpush1.bf16.msra.mxu0 %v493
    %1374 = vmatprep.subr.bf16.mxu0 %v500
    %1375 = vmatpush1.bf16.msra.mxu0 %v499
    %1376 = vmatprep.subr.bf16.mxu0 %v506
    %1377 = vmatpush1.bf16.msra.mxu0 %v505
    %1378 = vmatprep.subr.bf16.mxu0 %v512
    %1379 = vmatpush1.bf16.msra.mxu0 %v511
    %1380 = vmatprep.subr.bf16.mxu0 %v518
    %1381 = vmatpush1.bf16.msra.mxu0 %v517
    %1382 = vmatprep.subr.bf16.mxu0 %v524
    %1383 = vmatpush1.bf16.msra.mxu0 %v523
    %1384 = vmatprep.subr.bf16.mxu0 %v530
    %1385 = vmatpush1.bf16.msra.mxu0 %v529
    %1386 = vmatprep.subr.bf16.mxu0 %v536
    %1387 = vmatpush1.bf16.msra.mxu0 %v535
    %1388 = vmatprep.subr.bf16.mxu0 %v542
    %1389 = vmatpush1.bf16.msra.mxu0 %v541
    %1390 = vmatprep.subr.bf16.mxu0 %v548
    %1391 = vmatpush1.bf16.msra.mxu0 %v547
    %1392 = vmatprep.subr.bf16.mxu0 %v554
    %1393 = vmatpush1.bf16.msra.mxu0 %v553
    %1394 = vmatprep.mubr.bf16.mxu0 %v1361
    %1395 = vmatmul.mubr.bf16.gmra.mrb[0].mxu0 %v1262
    %v1396 = vpop.f32.mrb[0].mxu0
    %v1397 = vadd.f32 0.0, %v1396
    %v1398 = vpop.f32.mrb[0].mxu0
    %v1399 = vadd.f32 0.0, %v1398
    %v1400 = vpop.f32.mrb[0].mxu0
    %v1401 = vpop.f32.mrb[0].mxu0
    %1402 = vdwg.mxu0
    %1403 = vmatprep.subr.bf16.mxu0 %v466
    %1404 = vmatpush1.bf16.msra.mxu0 %v465
    %1405 = vmatprep.subr.bf16.mxu0 %v472
    %1406 = vmatpush1.bf16.msra.mxu0 %v471
    %1407 = vmatprep.subr.bf16.mxu0 %v478
    %1408 = vmatpush1.bf16.msra.mxu0 %v477
    %1409 = vmatprep.subr.bf16.mxu0 %v484
    %1410 = vmatpush1.bf16.msra.mxu0 %v483
    %1411 = vmatprep.subr.bf16.mxu0 %v490
    %1412 = vmatpush1.bf16.msra.mxu0 %v489
    %1413 = vmatprep.subr.bf16.mxu0 %v496
    %1414 = vmatpush1.bf16.msra.mxu0 %v495
    %1415 = vmatprep.subr.bf16.mxu0 %v502
    %1416 = vmatpush1.bf16.msra.mxu0 %v501
    %1417 = vmatprep.subr.bf16.mxu0 %v508
    %1418 = vmatpush1.bf16.msra.mxu0 %v507
    %1419 = vmatprep.subr.bf16.mxu0 %v514
    %1420 = vmatpush1.bf16.msra.mxu0 %v513
    %1421 = vmatprep.subr.bf16.mxu0 %v520
    %1422 = vmatpush1.bf16.msra.mxu0 %v519
    %1423 = vmatprep.subr.bf16.mxu0 %v526
    %1424 = vmatpush1.bf16.msra.mxu0 %v525
    %1425 = vmatprep.subr.bf16.mxu0 %v532
    %1426 = vmatpush1.bf16.msra.mxu0 %v531
    %1427 = vmatprep.subr.bf16.mxu0 %v538
    %1428 = vmatpush1.bf16.msra.mxu0 %v537
    %1429 = vmatprep.subr.bf16.mxu0 %v544
    %1430 = vmatpush1.bf16.msra.mxu0 %v543
    %1431 = vmatprep.subr.bf16.mxu0 %v550
    %1432 = vmatpush1.bf16.msra.mxu0 %v549
    %1433 = vmatprep.subr.bf16.mxu0 %v556
    %1434 = vmatpush1.bf16.msra.mxu0 %v555
    %1435 = vmatprep.mubr.bf16.mxu0 %v1361
    %1436 = vmatmul.mubr.bf16.gmra.mrb[0].mxu0 %v1262
    %v1437 = vpop.f32.mrb[0].mxu0
    %v1438 = vadd.f32 0.0, %v1437
    %v1439 = vpop.f32.mrb[0].mxu0
    %v1440 = vadd.f32 0.0, %v1439
    %v1441 = vpop.f32.mrb[0].mxu0
    %v1442 = vpop.f32.mrb[0].mxu0
    %1443 = vdwg.mxu0
    %1444 = vmatprep.subr.bf16.mxu0 %v468
    %1445 = vmatpush1.bf16.msra.mxu0 %v467
    %1446 = vmatprep.subr.bf16.mxu0 %v474
    %1447 = vmatpush1.bf16.msra.mxu0 %v473
    %1448 = vmatprep.subr.bf16.mxu0 %v480
    %1449 = vmatpush1.bf16.msra.mxu0 %v479
    %1450 = vmatprep.subr.bf16.mxu0 %v486
    %1451 = vmatpush1.bf16.msra.mxu0 %v485
    %1452 = vmatprep.subr.bf16.mxu0 %v492
    %1453 = vmatpush1.bf16.msra.mxu0 %v491
    %1454 = vmatprep.subr.bf16.mxu0 %v498
    %1455 = vmatpush1.bf16.msra.mxu0 %v497
    %1456 = vmatprep.subr.bf16.mxu0 %v504
    %1457 = vmatpush1.bf16.msra.mxu0 %v503
    %1458 = vmatprep.subr.bf16.mxu0 %v510
    %1459 = vmatpush1.bf16.msra.mxu0 %v509
    %1460 = vmatprep.subr.bf16.mxu0 %v516
    %1461 = vmatpush1.bf16.msra.mxu0 %v515
    %1462 = vmatprep.subr.bf16.mxu0 %v522
    %1463 = vmatpush1.bf16.msra.mxu0 %v521
    %1464 = vmatprep.subr.bf16.mxu0 %v528
    %1465 = vmatpush1.bf16.msra.mxu0 %v527
    %1466 = vmatprep.subr.bf16.mxu0 %v534
    %1467 = vmatpush1.bf16.msra.mxu0 %v533
    %1468 = vmatprep.subr.bf16.mxu0 %v540
    %1469 = vmatpush1.bf16.msra.mxu0 %v539
    %1470 = vmatprep.subr.bf16.mxu0 %v546
    %1471 = vmatpush1.bf16.msra.mxu0 %v545
    %1472 = vmatprep.subr.bf16.mxu0 %v552
    %1473 = vmatpush1.bf16.msra.mxu0 %v551
    %1474 = vmatprep.subr.bf16.mxu0 %v558
    %1475 = vmatpush1.bf16.msra.mxu0 %v557
    %1476 = vmatprep.mubr.bf16.mxu0 %v1361
    %1477 = vmatmul.mubr.bf16.gmra.mrb[0].mxu0 %v1262
    %v1478 = vpop.f32.mrb[0].mxu0
    %v1479 = vadd.f32 0.0, %v1478
    %v1480 = vpop.f32.mrb[0].mxu0
    %v1481 = vadd.f32 0.0, %v1480
    %v1482 = vpop.f32.mrb[0].mxu0
    %v1483 = vpop.f32.mrb[0].mxu0
    %1484 = vdwg.mxu0
    %v1485 = vadd.f32 %v1397, %v782
    %v1486 = vadd.f32 %v1399, %v786
    %v1487 = vadd.f32 %v1438, %v790
    %v1488 = vadd.f32 %v1440, %v801
    %v1489 = vadd.f32 %v1479, %v805
    %v1490 = vadd.f32 %v1481, %v809
    %s1491 = scalar_lea.vmem [#allocation2], 48
    %v1492 = vld [vmem:[%s1491] sm:$0xff]
    %v1493 = vld [vmem:[%s1491 + $0x8] sm:$0xff]
    %v1494 = vld [vmem:[%s1491 + $0x10] sm:$0xff]
    %v1495 = vadd.f32 %v1492, %v1485
    %v1496 = vadd.f32 %v1493, %v1486
    %v1497 = vmul.f32 %v1495, 0.5
    %v1498 = vmul.f32 %v1496, 0.5
    %v1499 = vtanh.pop %v1497
    %v1500 = vtanh.pop %v1498
    %v1501 = vmul.f32 %v1499, 0.5
    %v1502 = vmul.f32 %v1500, 0.5
    %v1503 = vadd.f32 %v1501, 0.5
    %v1504 = vadd.f32 %v1502, 0.5
    %v1505 = vmul.f32 %v1503, %v1487
    %v1506 = vadd.f32 %v1494, %v1505
    %v1507 = vtanh.pop %v1506
    %v1508 = vsub.f32 1.0, %v1504
    %v1509 = vmul.f32 %v1508, %v1507
    %v1510 = vmul.f32 %v1504, %v1261
    %v1511 = vadd.f32 %v1509, %v1510
    %v1512 = vpack.c.bf16 %v1511, %v1511
    %1513 = vmatprep.subr.bf16.mxu0 %v966
    %1514 = vmatpush1.bf16.msra.mxu0 %v965
    %1515 = vmatprep.subr.bf16.mxu0 %v969
    %1516 = vmatpush1.bf16.msra.mxu0 %v968
    %1517 = vmatprep.subr.bf16.mxu0 %v972
    %1518 = vmatpush1.bf16.msra.mxu0 %v971
    %1519 = vmatprep.subr.bf16.mxu0 %v975
    %1520 = vmatpush1.bf16.msra.mxu0 %v974
    %1521 = vmatprep.subr.bf16.mxu0 %v978
    %1522 = vmatpush1.bf16.msra.mxu0 %v977
    %1523 = vmatprep.subr.bf16.mxu0 %v981
    %1524 = vmatpush1.bf16.msra.mxu0 %v980
    %1525 = vmatprep.subr.bf16.mxu0 %v984
    %1526 = vmatpush1.bf16.msra.mxu0 %v983
    %1527 = vmatprep.subr.bf16.mxu0 %v987
    %1528 = vmatpush1.bf16.msra.mxu0 %v986
    %1529 = vmatprep.subr.bf16.mxu0 0
    %1530 = vmatpush1.bf16.msra.mxu0 0
    %1531 = vmatprep.subr.bf16.mxu0 0
    %1532 = vmatpush1.bf16.msra.mxu0 0
    %1533 = vmatprep.subr.bf16.mxu0 0
    %1534 = vmatpush1.bf16.msra.mxu0 0
    %1535 = vmatprep.subr.bf16.mxu0 0
    %1536 = vmatpush1.bf16.msra.mxu0 0
    %1537 = vmatprep.subr.bf16.mxu0 0
    %1538 = vmatpush1.bf16.msra.mxu0 0
    %1539 = vmatprep.subr.bf16.mxu0 0
    %1540 = vmatpush1.bf16.msra.mxu0 0
    %1541 = vmatprep.subr.bf16.mxu0 0
    %1542 = vmatpush1.bf16.msra.mxu0 0
    %1543 = vmatprep.subr.bf16.mxu0 0
    %1544 = vmatpush1.bf16.msra.mxu0 0
    %1545 = vmatprep.mubr.bf16.mxu0 0
    %1546 = vmatmul.mubr.bf16.gmra.mrb[0].mxu0 %v1512
    %v1547 = vpop.f32.mrb[0].mxu0
    %v1548 = vadd.f32 %v873, %v1547
    %v1549 = vpop.f32.mrb[0].mxu0
    %v1550 = vadd.f32 %v877, %v1549
    %v1551 = vpop.f32.mrb[0].mxu0
    %v1552 = vpop.f32.mrb[0].mxu0
    %1553 = vdwg.mxu0
    %1554 = vmatprep.subr.bf16.mxu0 0
    %1555 = vmatpush1.bf16.msra.mxu0 %v967
    %1556 = vmatprep.subr.bf16.mxu0 0
    %1557 = vmatpush1.bf16.msra.mxu0 %v970
    %1558 = vmatprep.subr.bf16.mxu0 0
    %1559 = vmatpush1.bf16.msra.mxu0 %v973
    %1560 = vmatprep.subr.bf16.mxu0 0
    %1561 = vmatpush1.bf16.msra.mxu0 %v976
    %1562 = vmatprep.subr.bf16.mxu0 0
    %1563 = vmatpush1.bf16.msra.mxu0 %v979
    %1564 = vmatprep.subr.bf16.mxu0 0
    %1565 = vmatpush1.bf16.msra.mxu0 %v982
    %1566 = vmatprep.subr.bf16.mxu0 0
    %1567 = vmatpush1.bf16.msra.mxu0 %v985
    %1568 = vmatprep.subr.bf16.mxu0 0
    %1569 = vmatpush1.bf16.msra.mxu0 %v988
    %1570 = vmatprep.subr.bf16.mxu0 0
    %1571 = vmatpush1.bf16.msra.mxu0 0
    %1572 = vmatprep.subr.bf16.mxu0 0
    %1573 = vmatpush1.bf16.msra.mxu0 0
    %1574 = vmatprep.subr.bf16.mxu0 0
    %1575 = vmatpush1.bf16.msra.mxu0 0
    %1576 = vmatprep.subr.bf16.mxu0 0
    %1577 = vmatpush1.bf16.msra.mxu0 0
    %1578 = vmatprep.subr.bf16.mxu0 0
    %1579 = vmatpush1.bf16.msra.mxu0 0
    %1580 = vmatprep.subr.bf16.mxu0 0
    %1581 = vmatpush1.bf16.msra.mxu0 0
    %1582 = vmatprep.subr.bf16.mxu0 0
    %1583 = vmatpush1.bf16.msra.mxu0 0
    %1584 = vmatprep.subr.bf16.mxu0 0
    %1585 = vmatpush1.bf16.msra.mxu0 0
    %1586 = vmatprep.mubr.bf16.mxu0 0
    %1587 = vmatmul.mubr.bf16.gmra.mrb[0].mxu0 %v1512
    %v1588 = vpop.f32.mrb[0].mxu0
    %v1589 = vadd.f32 %v881, %v1588
    %v1590 = vpop.f32.mrb[0].mxu0
    %v1591 = vpop.f32.mrb[0].mxu0
    %v1592 = vpop.f32.mrb[0].mxu0
    %1593 = vdwg.mxu0
    %v1594 = vadd.f32 %v1548, %v1488
    %v1595 = vadd.f32 %v1550, %v1489
    %v1596 = vmul.f32 %v1594, 0.5
    %v1597 = vmul.f32 %v1595, 0.5
    %v1598 = vtanh.pop %v1596
    %v1599 = vtanh.pop %v1597
    %v1600 = vmul.f32 %v1598, 0.5
    %v1601 = vmul.f32 %v1599, 0.5
    %v1602 = vadd.f32 %v1600, 0.5
    %v1603 = vadd.f32 %v1601, 0.5
    %v1604 = vmul.f32 %v1602, %v1490
    %v1605 = vadd.f32 %v1589, %v1604
    %v1606 = vtanh.pop %v1605
    %v1607 = vsub.f32 1.0, %v1603
    %v1608 = vmul.f32 %v1607, %v1606
    %v1609 = vmul.f32 %v1603, %v1360
    %v1610 = vadd.f32 %v1608, %v1609
    %v1611 = vpack.c.bf16 %v1610, %v1610
    %1612 = vmatprep.subr.bf16.mxu0 %v464
    %1613 = vmatpush1.bf16.msra.mxu0 %v463
    %1614 = vmatprep.subr.bf16.mxu0 %v470
    %1615 = vmatpush1.bf16.msra.mxu0 %v469
    %1616 = vmatprep.subr.bf16.mxu0 %v476
    %1617 = vmatpush1.bf16.msra.mxu0 %v475
    %1618 = vmatprep.subr.bf16.mxu0 %v482
    %1619 = vmatpush1.bf16.msra.mxu0 %v481
    %1620 = vmatprep.subr.bf16.mxu0 %v488
    %1621 = vmatpush1.bf16.msra.mxu0 %v487
    %1622 = vmatprep.subr.bf16.mxu0 %v494
    %1623 = vmatpush1.bf16.msra.mxu0 %v493
    %1624 = vmatprep.subr.bf16.mxu0 %v500
    %1625 = vmatpush1.bf16.msra.mxu0 %v499
    %1626 = vmatprep.subr.bf16.mxu0 %v506
    %1627 = vmatpush1.bf16.msra.mxu0 %v505
    %1628 = vmatprep.subr.bf16.mxu0 %v512
    %1629 = vmatpush1.bf16.msra.mxu0 %v511
    %1630 = vmatprep.subr.bf16.mxu0 %v518
    %1631 = vmatpush1.bf16.msra.mxu0 %v517
    %1632 = vmatprep.subr.bf16.mxu0 %v524
    %1633 = vmatpush1.bf16.msra.mxu0 %v523
    %1634 = vmatprep.subr.bf16.mxu0 %v530
    %1635 = vmatpush1.bf16.msra.mxu0 %v529
    %1636 = vmatprep.subr.bf16.mxu0 %v536
    %1637 = vmatpush1.bf16.msra.mxu0 %v535
    %1638 = vmatprep.subr.bf16.mxu0 %v542
    %1639 = vmatpush1.bf16.msra.mxu0 %v541
    %1640 = vmatprep.subr.bf16.mxu0 %v548
    %1641 = vmatpush1.bf16.msra.mxu0 %v547
    %1642 = vmatprep.subr.bf16.mxu0 %v554
    %1643 = vmatpush1.bf16.msra.mxu0 %v553
    %1644 = vmatprep.mubr.bf16.mxu0 %v1611
    %1645 = vmatmul.mubr.bf16.gmra.mrb[0].mxu0 %v1512
    %v1646 = vpop.f32.mrb[0].mxu0
    %v1647 = vadd.f32 0.0, %v1646
    %v1648 = vpop.f32.mrb[0].mxu0
    %v1649 = vadd.f32 0.0, %v1648
    %v1650 = vpop.f32.mrb[0].mxu0
    %v1651 = vpop.f32.mrb[0].mxu0
    %1652 = vdwg.mxu0
    %1653 = vmatprep.subr.bf16.mxu0 %v466
    %1654 = vmatpush1.bf16.msra.mxu0 %v465
    %1655 = vmatprep.subr.bf16.mxu0 %v472
    %1656 = vmatpush1.bf16.msra.mxu0 %v471
    %1657 = vmatprep.subr.bf16.mxu0 %v478
    %1658 = vmatpush1.bf16.msra.mxu0 %v477
    %1659 = vmatprep.subr.bf16.mxu0 %v484
    %1660 = vmatpush1.bf16.msra.mxu0 %v483
    %1661 = vmatprep.subr.bf16.mxu0 %v490
    %1662 = vmatpush1.bf16.msra.mxu0 %v489
    %1663 = vmatprep.subr.bf16.mxu0 %v496
    %1664 = vmatpush1.bf16.msra.mxu0 %v495
    %1665 = vmatprep.subr.bf16.mxu0 %v502
    %1666 = vmatpush1.bf16.msra.mxu0 %v501
    %1667 = vmatprep.subr.bf16.mxu0 %v508
    %1668 = vmatpush1.bf16.msra.mxu0 %v507
    %1669 = vmatprep.subr.bf16.mxu0 %v514
    %1670 = vmatpush1.bf16.msra.mxu0 %v513
    %1671 = vmatprep.subr.bf16.mxu0 %v520
    %1672 = vmatpush1.bf16.msra.mxu0 %v519
    %1673 = vmatprep.subr.bf16.mxu0 %v526
    %1674 = vmatpush1.bf16.msra.mxu0 %v525
    %1675 = vmatprep.subr.bf16.mxu0 %v532
    %1676 = vmatpush1.bf16.msra.mxu0 %v531
    %1677 = vmatprep.subr.bf16.mxu0 %v538
    %1678 = vmatpush1.bf16.msra.mxu0 %v537
    %1679 = vmatprep.subr.bf16.mxu0 %v544
    %1680 = vmatpush1.bf16.msra.mxu0 %v543
    %1681 = vmatprep.subr.bf16.mxu0 %v550
    %1682 = vmatpush1.bf16.msra.mxu0 %v549
    %1683 = vmatprep.subr.bf16.mxu0 %v556
    %1684 = vmatpush1.bf16.msra.mxu0 %v555
    %1685 = vmatprep.mubr.bf16.mxu0 %v1611
    %1686 = vmatmul.mubr.bf16.gmra.mrb[0].mxu0 %v1512
    %v1687 = vpop.f32.mrb[0].mxu0
    %v1688 = vadd.f32 0.0, %v1687
    %v1689 = vpop.f32.mrb[0].mxu0
    %v1690 = vadd.f32 0.0, %v1689
    %v1691 = vpop.f32.mrb[0].mxu0
    %v1692 = vpop.f32.mrb[0].mxu0
    %1693 = vdwg.mxu0
    %1694 = vmatprep.subr.bf16.mxu0 %v468
    %1695 = vmatpush1.bf16.msra.mxu0 %v467
    %1696 = vmatprep.subr.bf16.mxu0 %v474
    %1697 = vmatpush1.bf16.msra.mxu0 %v473
    %1698 = vmatprep.subr.bf16.mxu0 %v480
    %1699 = vmatpush1.bf16.msra.mxu0 %v479
    %1700 = vmatprep.subr.bf16.mxu0 %v486
    %1701 = vmatpush1.bf16.msra.mxu0 %v485
    %1702 = vmatprep.subr.bf16.mxu0 %v492
    %1703 = vmatpush1.bf16.msra.mxu0 %v491
    %1704 = vmatprep.subr.bf16.mxu0 %v498
    %1705 = vmatpush1.bf16.msra.mxu0 %v497
    %1706 = vmatprep.subr.bf16.mxu0 %v504
    %1707 = vmatpush1.bf16.msra.mxu0 %v503
    %1708 = vmatprep.subr.bf16.mxu0 %v510
    %1709 = vmatpush1.bf16.msra.mxu0 %v509
    %1710 = vmatprep.subr.bf16.mxu0 %v516
    %1711 = vmatpush1.bf16.msra.mxu0 %v515
    %1712 = vmatprep.subr.bf16.mxu0 %v522
    %1713 = vmatpush1.bf16.msra.mxu0 %v521
    %1714 = vmatprep.subr.bf16.mxu0 %v528
    %1715 = vmatpush1.bf16.msra.mxu0 %v527
    %1716 = vmatprep.subr.bf16.mxu0 %v534
    %1717 = vmatpush1.bf16.msra.mxu0 %v533
    %1718 = vmatprep.subr.bf16.mxu0 %v540
    %1719 = vmatpush1.bf16.msra.mxu0 %v539
    %1720 = vmatprep.subr.bf16.mxu0 %v546
    %1721 = vmatpush1.bf16.msra.mxu0 %v545
    %1722 = vmatprep.subr.bf16.mxu0 %v552
    %1723 = vmatpush1.bf16.msra.mxu0 %v551
    %1724 = vmatprep.subr.bf16.mxu0 %v558
    %1725 = vmatpush1.bf16.msra.mxu0 %v557
    %1726 = vmatprep.mubr.bf16.mxu0 %v1611
    %1727 = vmatmul.mubr.bf16.gmra.mrb[0].mxu0 %v1512
    %v1728 = vpop.f32.mrb[0].mxu0
    %v1729 = vadd.f32 0.0, %v1728
    %v1730 = vpop.f32.mrb[0].mxu0
    %v1731 = vadd.f32 0.0, %v1730
    %v1732 = vpop.f32.mrb[0].mxu0
    %v1733 = vpop.f32.mrb[0].mxu0
    %1734 = vdwg.mxu0
    %v1735 = vadd.f32 %v1647, %v782
    %v1736 = vadd.f32 %v1649, %v786
    %v1737 = vadd.f32 %v1688, %v790
    %v1738 = vadd.f32 %v1690, %v801
    %v1739 = vadd.f32 %v1729, %v805
    %v1740 = vadd.f32 %v1731, %v809
    %s1741 = scalar_lea.vmem [#allocation2], 72
    %v1742 = vld [vmem:[%s1741] sm:$0xff]
    %v1743 = vld [vmem:[%s1741 + $0x8] sm:$0xff]
    %v1744 = vld [vmem:[%s1741 + $0x10] sm:$0xff]
    %v1745 = vadd.f32 %v1742, %v1735
    %v1746 = vadd.f32 %v1743, %v1736
    %v1747 = vmul.f32 %v1745, 0.5
    %v1748 = vmul.f32 %v1746, 0.5
    %v1749 = vtanh.pop %v1747
    %v1750 = vtanh.pop %v1748
    %v1751 = vmul.f32 %v1749, 0.5
    %v1752 = vmul.f32 %v1750, 0.5
    %v1753 = vadd.f32 %v1751, 0.5
    %v1754 = vadd.f32 %v1752, 0.5
    %v1755 = vmul.f32 %v1753, %v1737
    %v1756 = vadd.f32 %v1744, %v1755
    %v1757 = vtanh.pop %v1756
    %v1758 = vsub.f32 1.0, %v1754
    %v1759 = vmul.f32 %v1758, %v1757
    %v1760 = vmul.f32 %v1754, %v1511
    %v1761 = vadd.f32 %v1759, %v1760
    %v1762 = vpack.c.bf16 %v1761, %v1761
    %1763 = vmatprep.subr.bf16.mxu0 %v966
    %1764 = vmatpush1.bf16.msra.mxu0 %v965
    %1765 = vmatprep.subr.bf16.mxu0 %v969
    %1766 = vmatpush1.bf16.msra.mxu0 %v968
    %1767 = vmatprep.subr.bf16.mxu0 %v972
    %1768 = vmatpush1.bf16.msra.mxu0 %v971
    %1769 = vmatprep.subr.bf16.mxu0 %v975
    %1770 = vmatpush1.bf16.msra.mxu0 %v974
    %1771 = vmatprep.subr.bf16.mxu0 %v978
    %1772 = vmatpush1.bf16.msra.mxu0 %v977
    %1773 = vmatprep.subr.bf16.mxu0 %v981
    %1774 = vmatpush1.bf16.msra.mxu0 %v980
    %1775 = vmatprep.subr.bf16.mxu0 %v984
    %1776 = vmatpush1.bf16.msra.mxu0 %v983
    %1777 = vmatprep.subr.bf16.mxu0 %v987
    %1778 = vmatpush1.bf16.msra.mxu0 %v986
    %1779 = vmatprep.subr.bf16.mxu0 0
    %1780 = vmatpush1.bf16.msra.mxu0 0
    %1781 = vmatprep.subr.bf16.mxu0 0
    %1782 = vmatpush1.bf16.msra.mxu0 0
    %1783 = vmatprep.subr.bf16.mxu0 0
    %1784 = vmatpush1.bf16.msra.mxu0 0
    %1785 = vmatprep.subr.bf16.mxu0 0
    %1786 = vmatpush1.bf16.msra.mxu0 0
    %1787 = vmatprep.subr.bf16.mxu0 0
    %1788 = vmatpush1.bf16.msra.mxu0 0
    %1789 = vmatprep.subr.bf16.mxu0 0
    %1790 = vmatpush1.bf16.msra.mxu0 0
    %1791 = vmatprep.subr.bf16.mxu0 0
    %1792 = vmatpush1.bf16.msra.mxu0 0
    %1793 = vmatprep.subr.bf16.mxu0 0
    %1794 = vmatpush1.bf16.msra.mxu0 0
    %1795 = vmatprep.mubr.bf16.mxu0 0
    %1796 = vmatmul.mubr.bf16.gmra.mrb[0].mxu0 %v1762
    %v1797 = vpop.f32.mrb[0].mxu0
    %v1798 = vadd.f32 %v873, %v1797
    %v1799 = vpop.f32.mrb[0].mxu0
    %v1800 = vadd.f32 %v877, %v1799
    %v1801 = vpop.f32.mrb[0].mxu0
    %v1802 = vpop.f32.mrb[0].mxu0
    %1803 = vdwg.mxu0
    %1804 = vmatprep.subr.bf16.mxu0 0
    %1805 = vmatpush1.bf16.msra.mxu0 %v967
    %1806 = vmatprep.subr.bf16.mxu0 0
    %1807 = vmatpush1.bf16.msra.mxu0 %v970
    %1808 = vmatprep.subr.bf16.mxu0 0
    %1809 = vmatpush1.bf16.msra.mxu0 %v973
    %1810 = vmatprep.subr.bf16.mxu0 0
    %1811 = vmatpush1.bf16.msra.mxu0 %v976
    %1812 = vmatprep.subr.bf16.mxu0 0
    %1813 = vmatpush1.bf16.msra.mxu0 %v979
    %1814 = vmatprep.subr.bf16.mxu0 0
    %1815 = vmatpush1.bf16.msra.mxu0 %v982
    %1816 = vmatprep.subr.bf16.mxu0 0
    %1817 = vmatpush1.bf16.msra.mxu0 %v985
    %1818 = vmatprep.subr.bf16.mxu0 0
    %1819 = vmatpush1.bf16.msra.mxu0 %v988
    %1820 = vmatprep.subr.bf16.mxu0 0
    %1821 = vmatpush1.bf16.msra.mxu0 0
    %1822 = vmatprep.subr.bf16.mxu0 0
    %1823 = vmatpush1.bf16.msra.mxu0 0
    %1824 = vmatprep.subr.bf16.mxu0 0
    %1825 = vmatpush1.bf16.msra.mxu0 0
    %1826 = vmatprep.subr.bf16.mxu0 0
    %1827 = vmatpush1.bf16.msra.mxu0 0
    %1828 = vmatprep.subr.bf16.mxu0 0
    %1829 = vmatpush1.bf16.msra.mxu0 0
    %1830 = vmatprep.subr.bf16.mxu0 0
    %1831 = vmatpush1.bf16.msra.mxu0 0
    %1832 = vmatprep.subr.bf16.mxu0 0
    %1833 = vmatpush1.bf16.msra.mxu0 0
    %1834 = vmatprep.subr.bf16.mxu0 0
    %1835 = vmatpush1.bf16.msra.mxu0 0
    %1836 = vmatprep.mubr.bf16.mxu0 0
    %1837 = vmatmul.mubr.bf16.gmra.mrb[0].mxu0 %v1762
    %v1838 = vpop.f32.mrb[0].mxu0
    %v1839 = vadd.f32 %v881, %v1838
    %v1840 = vpop.f32.mrb[0].mxu0
    %v1841 = vpop.f32.mrb[0].mxu0
    %v1842 = vpop.f32.mrb[0].mxu0
    %1843 = vdwg.mxu0
    %v1844 = vadd.f32 %v1798, %v1738
    %v1845 = vadd.f32 %v1800, %v1739
    %v1846 = vmul.f32 %v1844, 0.5
    %v1847 = vmul.f32 %v1845, 0.5
    %v1848 = vtanh.pop %v1846
    %v1849 = vtanh.pop %v1847
    %v1850 = vmul.f32 %v1848, 0.5
    %v1851 = vmul.f32 %v1849, 0.5
    %v1852 = vadd.f32 %v1850, 0.5
    %v1853 = vadd.f32 %v1851, 0.5
    %v1854 = vmul.f32 %v1852, %v1740
    %v1855 = vadd.f32 %v1839, %v1854
    %v1856 = vtanh.pop %v1855
    %v1857 = vsub.f32 1.0, %v1853
    %v1858 = vmul.f32 %v1857, %v1856
    %v1859 = vmul.f32 %v1853, %v1610
    %v1860 = vadd.f32 %v1858, %v1859
    %v1861 = vpack.c.bf16 %v1860, %v1860
    %1862 = vmatprep.subr.bf16.mxu0 %v464
    %1863 = vmatpush1.bf16.msra.mxu0 %v463
    %1864 = vmatprep.subr.bf16.mxu0 %v470
    %1865 = vmatpush1.bf16.msra.mxu0 %v469
    %1866 = vmatprep.subr.bf16.mxu0 %v476
    %1867 = vmatpush1.bf16.msra.mxu0 %v475
    %1868 = vmatprep.subr.bf16.mxu0 %v482
    %1869 = vmatpush1.bf16.msra.mxu0 %v481
    %1870 = vmatprep.subr.bf16.mxu0 %v488
    %1871 = vmatpush1.bf16.msra.mxu0 %v487
    %1872 = vmatprep.subr.bf16.mxu0 %v494
    %1873 = vmatpush1.bf16.msra.mxu0 %v493
    %1874 = vmatprep.subr.bf16.mxu0 %v500
    %1875 = vmatpush1.bf16.msra.mxu0 %v499
    %1876 = vmatprep.subr.bf16.mxu0 %v506
    %1877 = vmatpush1.bf16.msra.mxu0 %v505
    %1878 = vmatprep.subr.bf16.mxu0 %v512
    %1879 = vmatpush1.bf16.msra.mxu0 %v511
    %1880 = vmatprep.subr.bf16.mxu0 %v518
    %1881 = vmatpush1.bf16.msra.mxu0 %v517
    %1882 = vmatprep.subr.bf16.mxu0 %v524
    %1883 = vmatpush1.bf16.msra.mxu0 %v523
    %1884 = vmatprep.subr.bf16.mxu0 %v530
    %1885 = vmatpush1.bf16.msra.mxu0 %v529
    %1886 = vmatprep.subr.bf16.mxu0 %v536
    %1887 = vmatpush1.bf16.msra.mxu0 %v535
    %1888 = vmatprep.subr.bf16.mxu0 %v542
    %1889 = vmatpush1.bf16.msra.mxu0 %v541
    %1890 = vmatprep.subr.bf16.mxu0 %v548
    %1891 = vmatpush1.bf16.msra.mxu0 %v547
    %1892 = vmatprep.subr.bf16.mxu0 %v554
    %1893 = vmatpush1.bf16.msra.mxu0 %v553
    %1894 = vmatprep.mubr.bf16.mxu0 %v1861
    %1895 = vmatmul.mubr.bf16.gmra.mrb[0].mxu0 %v1762
    %v1896 = vpop.f32.mrb[0].mxu0
    %v1897 = vadd.f32 0.0, %v1896
    %v1898 = vpop.f32.mrb[0].mxu0
    %v1899 = vadd.f32 0.0, %v1898
    %v1900 = vpop.f32.mrb[0].mxu0
    %v1901 = vpop.f32.mrb[0].mxu0
    %1902 = vdwg.mxu0
    %1903 = vmatprep.subr.bf16.mxu0 %v466
    %1904 = vmatpush1.bf16.msra.mxu0 %v465
    %1905 = vmatprep.subr.bf16.mxu0 %v472
    %1906 = vmatpush1.bf16.msra.mxu0 %v471
    %1907 = vmatprep.subr.bf16.mxu0 %v478
    %1908 = vmatpush1.bf16.msra.mxu0 %v477
    %1909 = vmatprep.subr.bf16.mxu0 %v484
    %1910 = vmatpush1.bf16.msra.mxu0 %v483
    %1911 = vmatprep.subr.bf16.mxu0 %v490
    %1912 = vmatpush1.bf16.msra.mxu0 %v489
    %1913 = vmatprep.subr.bf16.mxu0 %v496
    %1914 = vmatpush1.bf16.msra.mxu0 %v495
    %1915 = vmatprep.subr.bf16.mxu0 %v502
    %1916 = vmatpush1.bf16.msra.mxu0 %v501
    %1917 = vmatprep.subr.bf16.mxu0 %v508
    %1918 = vmatpush1.bf16.msra.mxu0 %v507
    %1919 = vmatprep.subr.bf16.mxu0 %v514
    %1920 = vmatpush1.bf16.msra.mxu0 %v513
    %1921 = vmatprep.subr.bf16.mxu0 %v520
    %1922 = vmatpush1.bf16.msra.mxu0 %v519
    %1923 = vmatprep.subr.bf16.mxu0 %v526
    %1924 = vmatpush1.bf16.msra.mxu0 %v525
    %1925 = vmatprep.subr.bf16.mxu0 %v532
    %1926 = vmatpush1.bf16.msra.mxu0 %v531
    %1927 = vmatprep.subr.bf16.mxu0 %v538
    %1928 = vmatpush1.bf16.msra.mxu0 %v537
    %1929 = vmatprep.subr.bf16.mxu0 %v544
    %1930 = vmatpush1.bf16.msra.mxu0 %v543
    %1931 = vmatprep.subr.bf16.mxu0 %v550
    %1932 = vmatpush1.bf16.msra.mxu0 %v549
    %1933 = vmatprep.subr.bf16.mxu0 %v556
    %1934 = vmatpush1.bf16.msra.mxu0 %v555
    %1935 = vmatprep.mubr.bf16.mxu0 %v1861
    %1936 = vmatmul.mubr.bf16.gmra.mrb[0].mxu0 %v1762
    %v1937 = vpop.f32.mrb[0].mxu0
    %v1938 = vadd.f32 0.0, %v1937
    %v1939 = vpop.f32.mrb[0].mxu0
    %v1940 = vadd.f32 0.0, %v1939
    %v1941 = vpop.f32.mrb[0].mxu0
    %v1942 = vpop.f32.mrb[0].mxu0
    %1943 = vdwg.mxu0
    %1944 = vmatprep.subr.bf16.mxu0 %v468
    %1945 = vmatpush1.bf16.msra.mxu0 %v467
    %1946 = vmatprep.subr.bf16.mxu0 %v474
    %1947 = vmatpush1.bf16.msra.mxu0 %v473
    %1948 = vmatprep.subr.bf16.mxu0 %v480
    %1949 = vmatpush1.bf16.msra.mxu0 %v479
    %1950 = vmatprep.subr.bf16.mxu0 %v486
    %1951 = vmatpush1.bf16.msra.mxu0 %v485
    %1952 = vmatprep.subr.bf16.mxu0 %v492
    %1953 = vmatpush1.bf16.msra.mxu0 %v491
    %1954 = vmatprep.subr.bf16.mxu0 %v498
    %1955 = vmatpush1.bf16.msra.mxu0 %v497
    %1956 = vmatprep.subr.bf16.mxu0 %v504
    %1957 = vmatpush1.bf16.msra.mxu0 %v503
    %1958 = vmatprep.subr.bf16.mxu0 %v510
    %1959 = vmatpush1.bf16.msra.mxu0 %v509
    %1960 = vmatprep.subr.bf16.mxu0 %v516
    %1961 = vmatpush1.bf16.msra.mxu0 %v515
    %1962 = vmatprep.subr.bf16.mxu0 %v522
    %1963 = vmatpush1.bf16.msra.mxu0 %v521
    %1964 = vmatprep.subr.bf16.mxu0 %v528
    %1965 = vmatpush1.bf16.msra.mxu0 %v527
    %1966 = vmatprep.subr.bf16.mxu0 %v534
    %1967 = vmatpush1.bf16.msra.mxu0 %v533
    %1968 = vmatprep.subr.bf16.mxu0 %v540
    %1969 = vmatpush1.bf16.msra.mxu0 %v539
    %1970 = vmatprep.subr.bf16.mxu0 %v546
    %1971 = vmatpush1.bf16.msra.mxu0 %v545
    %1972 = vmatprep.subr.bf16.mxu0 %v552
    %1973 = vmatpush1.bf16.msra.mxu0 %v551
    %1974 = vmatprep.subr.bf16.mxu0 %v558
    %1975 = vmatpush1.bf16.msra.mxu0 %v557
    %1976 = vmatprep.mubr.bf16.mxu0 %v1861
    %1977 = vmatmul.mubr.bf16.gmra.mrb[0].mxu0 %v1762
    %v1978 = vpop.f32.mrb[0].mxu0
    %v1979 = vadd.f32 0.0, %v1978
    %v1980 = vpop.f32.mrb[0].mxu0
    %v1981 = vadd.f32 0.0, %v1980
    %v1982 = vpop.f32.mrb[0].mxu0
    %v1983 = vpop.f32.mrb[0].mxu0
    %1984 = vdwg.mxu0
    %v1985 = vadd.f32 %v1897, %v782
    %v1986 = vadd.f32 %v1899, %v786
    %v1987 = vadd.f32 %v1938, %v790
    %v1988 = vadd.f32 %v1940, %v801
    %v1989 = vadd.f32 %v1979, %v805
    %v1990 = vadd.f32 %v1981, %v809
    %s1991 = scalar_lea.vmem [#allocation2], 96
    %v1992 = vld [vmem:[%s1991] sm:$0xff]
    %v1993 = vld [vmem:[%s1991 + $0x8] sm:$0xff]
    %v1994 = vld [vmem:[%s1991 + $0x10] sm:$0xff]
    %v1995 = vadd.f32 %v1992, %v1985
    %v1996 = vadd.f32 %v1993, %v1986
    %v1997 = vmul.f32 %v1995, 0.5
    %v1998 = vmul.f32 %v1996, 0.5
    %v1999 = vtanh.pop %v1997
    %v2000 = vtanh.pop %v1998
    %v2001 = vmul.f32 %v1999, 0.5
    %v2002 = vmul.f32 %v2000, 0.5
    %v2003 = vadd.f32 %v2001, 0.5
    %v2004 = vadd.f32 %v2002, 0.5
    %v2005 = vmul.f32 %v2003, %v1987
    %v2006 = vadd.f32 %v1994, %v2005
    %v2007 = vtanh.pop %v2006
    %v2008 = vsub.f32 1.0, %v2004
    %v2009 = vmul.f32 %v2008, %v2007
    %v2010 = vmul.f32 %v2004, %v1761
    %v2011 = vadd.f32 %v2009, %v2010
    %v2012 = vpack.c.bf16 %v2011, %v2011
    %2013 = vmatprep.subr.bf16.mxu0 %v966
    %2014 = vmatpush1.bf16.msra.mxu0 %v965
    %2015 = vmatprep.subr.bf16.mxu0 %v969
    %2016 = vmatpush1.bf16.msra.mxu0 %v968
    %2017 = vmatprep.subr.bf16.mxu0 %v972
    %2018 = vmatpush1.bf16.msra.mxu0 %v971
    %2019 = vmatprep.subr.bf16.mxu0 %v975
    %2020 = vmatpush1.bf16.msra.mxu0 %v974
    %2021 = vmatprep.subr.bf16.mxu0 %v978
    %2022 = vmatpush1.bf16.msra.mxu0 %v977
    %2023 = vmatprep.subr.bf16.mxu0 %v981
    %2024 = vmatpush1.bf16.msra.mxu0 %v980
    %2025 = vmatprep.subr.bf16.mxu0 %v984
    %2026 = vmatpush1.bf16.msra.mxu0 %v983
    %2027 = vmatprep.subr.bf16.mxu0 %v987
    %2028 = vmatpush1.bf16.msra.mxu0 %v986
    %2029 = vmatprep.subr.bf16.mxu0 0
    %2030 = vmatpush1.bf16.msra.mxu0 0
    %2031 = vmatprep.subr.bf16.mxu0 0
    %2032 = vmatpush1.bf16.msra.mxu0 0
    %2033 = vmatprep.subr.bf16.mxu0 0
    %2034 = vmatpush1.bf16.msra.mxu0 0
    %2035 = vmatprep.subr.bf16.mxu0 0
    %2036 = vmatpush1.bf16.msra.mxu0 0
    %2037 = vmatprep.subr.bf16.mxu0 0
    %2038 = vmatpush1.bf16.msra.mxu0 0
    %2039 = vmatprep.subr.bf16.mxu0 0
    %2040 = vmatpush1.bf16.msra.mxu0 0
    %2041 = vmatprep.subr.bf16.mxu0 0
    %2042 = vmatpush1.bf16.msra.mxu0 0
    %2043 = vmatprep.subr.bf16.mxu0 0
    %2044 = vmatpush1.bf16.msra.mxu0 0
    %2045 = vmatprep.mubr.bf16.mxu0 0
    %2046 = vmatmul.mubr.bf16.gmra.mrb[0].mxu0 %v2012
    %v2047 = vpop.f32.mrb[0].mxu0
    %v2048 = vadd.f32 %v873, %v2047
    %v2049 = vpop.f32.mrb[0].mxu0
    %v2050 = vadd.f32 %v877, %v2049
    %v2051 = vpop.f32.mrb[0].mxu0
    %v2052 = vpop.f32.mrb[0].mxu0
    %2053 = vdwg.mxu0
    %2054 = vmatprep.subr.bf16.mxu0 0
    %2055 = vmatpush1.bf16.msra.mxu0 %v967
    %2056 = vmatprep.subr.bf16.mxu0 0
    %2057 = vmatpush1.bf16.msra.mxu0 %v970
    %2058 = vmatprep.subr.bf16.mxu0 0
    %2059 = vmatpush1.bf16.msra.mxu0 %v973
    %2060 = vmatprep.subr.bf16.mxu0 0
    %2061 = vmatpush1.bf16.msra.mxu0 %v976
    %2062 = vmatprep.subr.bf16.mxu0 0
    %2063 = vmatpush1.bf16.msra.mxu0 %v979
    %2064 = vmatprep.subr.bf16.mxu0 0
    %2065 = vmatpush1.bf16.msra.mxu0 %v982
    %2066 = vmatprep.subr.bf16.mxu0 0
    %2067 = vmatpush1.bf16.msra.mxu0 %v985
    %2068 = vmatprep.subr.bf16.mxu0 0
    %2069 = vmatpush1.bf16.msra.mxu0 %v988
    %2070 = vmatprep.subr.bf16.mxu0 0
    %2071 = vmatpush1.bf16.msra.mxu0 0
    %2072 = vmatprep.subr.bf16.mxu0 0
    %2073 = vmatpush1.bf16.msra.mxu0 0
    %2074 = vmatprep.subr.bf16.mxu0 0
    %2075 = vmatpush1.bf16.msra.mxu0 0
    %2076 = vmatprep.subr.bf16.mxu0 0
    %2077 = vmatpush1.bf16.msra.mxu0 0
    %2078 = vmatprep.subr.bf16.mxu0 0
    %2079 = vmatpush1.bf16.msra.mxu0 0
    %2080 = vmatprep.subr.bf16.mxu0 0
    %2081 = vmatpush1.bf16.msra.mxu0 0
    %2082 = vmatprep.subr.bf16.mxu0 0
    %2083 = vmatpush1.bf16.msra.mxu0 0
    %2084 = vmatprep.subr.bf16.mxu0 0
    %2085 = vmatpush1.bf16.msra.mxu0 0
    %2086 = vmatprep.mubr.bf16.mxu0 0
    %2087 = vmatmul.mubr.bf16.gmra.mrb[0].mxu0 %v2012
    %v2088 = vpop.f32.mrb[0].mxu0
    %v2089 = vadd.f32 %v881, %v2088
    %v2090 = vpop.f32.mrb[0].mxu0
    %v2091 = vpop.f32.mrb[0].mxu0
    %v2092 = vpop.f32.mrb[0].mxu0
    %2093 = vdwg.mxu0
    %v2094 = vadd.f32 %v2048, %v1988
    %v2095 = vadd.f32 %v2050, %v1989
    %v2096 = vmul.f32 %v2094, 0.5
    %v2097 = vmul.f32 %v2095, 0.5
    %v2098 = vtanh.pop %v2096
    %v2099 = vtanh.pop %v2097
    %v2100 = vmul.f32 %v2098, 0.5
    %v2101 = vmul.f32 %v2099, 0.5
    %v2102 = vadd.f32 %v2100, 0.5
    %v2103 = vadd.f32 %v2101, 0.5
    %v2104 = vmul.f32 %v2102, %v1990
    %v2105 = vadd.f32 %v2089, %v2104
    %v2106 = vtanh.pop %v2105
    %v2107 = vsub.f32 1.0, %v2103
    %v2108 = vmul.f32 %v2107, %v2106
    %v2109 = vmul.f32 %v2103, %v1860
    %v2110 = vadd.f32 %v2108, %v2109
    %v2111 = vpack.c.bf16 %v2110, %v2110
    %2112 = vmatprep.subr.bf16.mxu0 %v464
    %2113 = vmatpush1.bf16.msra.mxu0 %v463
    %2114 = vmatprep.subr.bf16.mxu0 %v470
    %2115 = vmatpush1.bf16.msra.mxu0 %v469
    %2116 = vmatprep.subr.bf16.mxu0 %v476
    %2117 = vmatpush1.bf16.msra.mxu0 %v475
    %2118 = vmatprep.subr.bf16.mxu0 %v482
    %2119 = vmatpush1.bf16.msra.mxu0 %v481
    %2120 = vmatprep.subr.bf16.mxu0 %v488
    %2121 = vmatpush1.bf16.msra.mxu0 %v487
    %2122 = vmatprep.subr.bf16.mxu0 %v494
    %2123 = vmatpush1.bf16.msra.mxu0 %v493
    %2124 = vmatprep.subr.bf16.mxu0 %v500
    %2125 = vmatpush1.bf16.msra.mxu0 %v499
    %2126 = vmatprep.subr.bf16.mxu0 %v506
    %2127 = vmatpush1.bf16.msra.mxu0 %v505
    %2128 = vmatprep.subr.bf16.mxu0 %v512
    %2129 = vmatpush1.bf16.msra.mxu0 %v511
    %2130 = vmatprep.subr.bf16.mxu0 %v518
    %2131 = vmatpush1.bf16.msra.mxu0 %v517
    %2132 = vmatprep.subr.bf16.mxu0 %v524
    %2133 = vmatpush1.bf16.msra.mxu0 %v523
    %2134 = vmatprep.subr.bf16.mxu0 %v530
    %2135 = vmatpush1.bf16.msra.mxu0 %v529
    %2136 = vmatprep.subr.bf16.mxu0 %v536
    %2137 = vmatpush1.bf16.msra.mxu0 %v535
    %2138 = vmatprep.subr.bf16.mxu0 %v542
    %2139 = vmatpush1.bf16.msra.mxu0 %v541
    %2140 = vmatprep.subr.bf16.mxu0 %v548
    %2141 = vmatpush1.bf16.msra.mxu0 %v547
    %2142 = vmatprep.subr.bf16.mxu0 %v554
    %2143 = vmatpush1.bf16.msra.mxu0 %v553
    %2144 = vmatprep.mubr.bf16.mxu0 %v2111
    %2145 = vmatmul.mubr.bf16.gmra.mrb[0].mxu0 %v2012
    %v2146 = vpop.f32.mrb[0].mxu0
    %v2147 = vadd.f32 0.0, %v2146
    %v2148 = vpop.f32.mrb[0].mxu0
    %v2149 = vadd.f32 0.0, %v2148
    %v2150 = vpop.f32.mrb[0].mxu0
    %v2151 = vpop.f32.mrb[0].mxu0
    %2152 = vdwg.mxu0
    %2153 = vmatprep.subr.bf16.mxu0 %v466
    %2154 = vmatpush1.bf16.msra.mxu0 %v465
    %2155 = vmatprep.subr.bf16.mxu0 %v472
    %2156 = vmatpush1.bf16.msra.mxu0 %v471
    %2157 = vmatprep.subr.bf16.mxu0 %v478
    %2158 = vmatpush1.bf16.msra.mxu0 %v477
    %2159 = vmatprep.subr.bf16.mxu0 %v484
    %2160 = vmatpush1.bf16.msra.mxu0 %v483
    %2161 = vmatprep.subr.bf16.mxu0 %v490
    %2162 = vmatpush1.bf16.msra.mxu0 %v489
    %2163 = vmatprep.subr.bf16.mxu0 %v496
    %2164 = vmatpush1.bf16.msra.mxu0 %v495
    %2165 = vmatprep.subr.bf16.mxu0 %v502
    %2166 = vmatpush1.bf16.msra.mxu0 %v501
    %2167 = vmatprep.subr.bf16.mxu0 %v508
    %2168 = vmatpush1.bf16.msra.mxu0 %v507
    %2169 = vmatprep.subr.bf16.mxu0 %v514
    %2170 = vmatpush1.bf16.msra.mxu0 %v513
    %2171 = vmatprep.subr.bf16.mxu0 %v520
    %2172 = vmatpush1.bf16.msra.mxu0 %v519
    %2173 = vmatprep.subr.bf16.mxu0 %v526
    %2174 = vmatpush1.bf16.msra.mxu0 %v525
    %2175 = vmatprep.subr.bf16.mxu0 %v532
    %2176 = vmatpush1.bf16.msra.mxu0 %v531
    %2177 = vmatprep.subr.bf16.mxu0 %v538
    %2178 = vmatpush1.bf16.msra.mxu0 %v537
    %2179 = vmatprep.subr.bf16.mxu0 %v544
    %2180 = vmatpush1.bf16.msra.mxu0 %v543
    %2181 = vmatprep.subr.bf16.mxu0 %v550
    %2182 = vmatpush1.bf16.msra.mxu0 %v549
    %2183 = vmatprep.subr.bf16.mxu0 %v556
    %2184 = vmatpush1.bf16.msra.mxu0 %v555
    %2185 = vmatprep.mubr.bf16.mxu0 %v2111
    %2186 = vmatmul.mubr.bf16.gmra.mrb[0].mxu0 %v2012
    %v2187 = vpop.f32.mrb[0].mxu0
    %v2188 = vadd.f32 0.0, %v2187
    %v2189 = vpop.f32.mrb[0].mxu0
    %v2190 = vadd.f32 0.0, %v2189
    %v2191 = vpop.f32.mrb[0].mxu0
    %v2192 = vpop.f32.mrb[0].mxu0
    %2193 = vdwg.mxu0
    %2194 = vmatprep.subr.bf16.mxu0 %v468
    %2195 = vmatpush1.bf16.msra.mxu0 %v467
    %2196 = vmatprep.subr.bf16.mxu0 %v474
    %2197 = vmatpush1.bf16.msra.mxu0 %v473
    %2198 = vmatprep.subr.bf16.mxu0 %v480
    %2199 = vmatpush1.bf16.msra.mxu0 %v479
    %2200 = vmatprep.subr.bf16.mxu0 %v486
    %2201 = vmatpush1.bf16.msra.mxu0 %v485
    %2202 = vmatprep.subr.bf16.mxu0 %v492
    %2203 = vmatpush1.bf16.msra.mxu0 %v491
    %2204 = vmatprep.subr.bf16.mxu0 %v498
    %2205 = vmatpush1.bf16.msra.mxu0 %v497
    %2206 = vmatprep.subr.bf16.mxu0 %v504
    %2207 = vmatpush1.bf16.msra.mxu0 %v503
    %2208 = vmatprep.subr.bf16.mxu0 %v510
    %2209 = vmatpush1.bf16.msra.mxu0 %v509
    %2210 = vmatprep.subr.bf16.mxu0 %v516
    %2211 = vmatpush1.bf16.msra.mxu0 %v515
    %2212 = vmatprep.subr.bf16.mxu0 %v522
    %2213 = vmatpush1.bf16.msra.mxu0 %v521
    %2214 = vmatprep.subr.bf16.mxu0 %v528
    %2215 = vmatpush1.bf16.msra.mxu0 %v527
    %2216 = vmatprep.subr.bf16.mxu0 %v534
    %2217 = vmatpush1.bf16.msra.mxu0 %v533
    %2218 = vmatprep.subr.bf16.mxu0 %v540
    %2219 = vmatpush1.bf16.msra.mxu0 %v539
    %2220 = vmatprep.subr.bf16.mxu0 %v546
    %2221 = vmatpush1.bf16.msra.mxu0 %v545
    %2222 = vmatprep.subr.bf16.mxu0 %v552
    %2223 = vmatpush1.bf16.msra.mxu0 %v551
    %2224 = vmatprep.subr.bf16.mxu0 %v558
    %2225 = vmatpush1.bf16.msra.mxu0 %v557
    %2226 = vmatprep.mubr.bf16.mxu0 %v2111
    %2227 = vmatmul.mubr.bf16.gmra.mrb[0].mxu0 %v2012
    %v2228 = vpop.f32.mrb[0].mxu0
    %v2229 = vadd.f32 0.0, %v2228
    %v2230 = vpop.f32.mrb[0].mxu0
    %v2231 = vadd.f32 0.0, %v2230
    %v2232 = vpop.f32.mrb[0].mxu0
    %v2233 = vpop.f32.mrb[0].mxu0
    %2234 = vdwg.mxu0
    %v2235 = vadd.f32 %v2147, %v782
    %v2236 = vadd.f32 %v2149, %v786
    %v2237 = vadd.f32 %v2188, %v790
    %v2238 = vadd.f32 %v2190, %v801
    %v2239 = vadd.f32 %v2229, %v805
    %v2240 = vadd.f32 %v2231, %v809
    %s2241 = scalar_lea.vmem [#allocation2], 120
    %v2242 = vld [vmem:[%s2241] sm:$0xff]
    %v2243 = vld [vmem:[%s2241 + $0x8] sm:$0xff]
    %v2244 = vld [vmem:[%s2241 + $0x10] sm:$0xff]
    %v2245 = vadd.f32 %v2242, %v2235
    %v2246 = vadd.f32 %v2243, %v2236
    %v2247 = vmul.f32 %v2245, 0.5
    %v2248 = vmul.f32 %v2246, 0.5
    %v2249 = vtanh.pop %v2247
    %v2250 = vtanh.pop %v2248
    %v2251 = vmul.f32 %v2249, 0.5
    %v2252 = vmul.f32 %v2250, 0.5
    %v2253 = vadd.f32 %v2251, 0.5
    %v2254 = vadd.f32 %v2252, 0.5
    %v2255 = vmul.f32 %v2253, %v2237
    %v2256 = vadd.f32 %v2244, %v2255
    %v2257 = vtanh.pop %v2256
    %v2258 = vsub.f32 1.0, %v2254
    %v2259 = vmul.f32 %v2258, %v2257
    %v2260 = vmul.f32 %v2254, %v2011
    %v2261 = vadd.f32 %v2259, %v2260
    %v2262 = vpack.c.bf16 %v2261, %v2261
    %2263 = vmatprep.subr.bf16.mxu0 %v966
    %2264 = vmatpush1.bf16.msra.mxu0 %v965
    %2265 = vmatprep.subr.bf16.mxu0 %v969
    %2266 = vmatpush1.bf16.msra.mxu0 %v968
    %2267 = vmatprep.subr.bf16.mxu0 %v972
    %2268 = vmatpush1.bf16.msra.mxu0 %v971
    %2269 = vmatprep.subr.bf16.mxu0 %v975
    %2270 = vmatpush1.bf16.msra.mxu0 %v974
    %2271 = vmatprep.subr.bf16.mxu0 %v978
    %2272 = vmatpush1.bf16.msra.mxu0 %v977
    %2273 = vmatprep.subr.bf16.mxu0 %v981
    %2274 = vmatpush1.bf16.msra.mxu0 %v980
    %2275 = vmatprep.subr.bf16.mxu0 %v984
    %2276 = vmatpush1.bf16.msra.mxu0 %v983
    %2277 = vmatprep.subr.bf16.mxu0 %v987
    %2278 = vmatpush1.bf16.msra.mxu0 %v986
    %2279 = vmatprep.subr.bf16.mxu0 0
    %2280 = vmatpush1.bf16.msra.mxu0 0
    %2281 = vmatprep.subr.bf16.mxu0 0
    %2282 = vmatpush1.bf16.msra.mxu0 0
    %2283 = vmatprep.subr.bf16.mxu0 0
    %2284 = vmatpush1.bf16.msra.mxu0 0
    %2285 = vmatprep.subr.bf16.mxu0 0
    %2286 = vmatpush1.bf16.msra.mxu0 0
    %2287 = vmatprep.subr.bf16.mxu0 0
    %2288 = vmatpush1.bf16.msra.mxu0 0
    %2289 = vmatprep.subr.bf16.mxu0 0
    %2290 = vmatpush1.bf16.msra.mxu0 0
    %2291 = vmatprep.subr.bf16.mxu0 0
    %2292 = vmatpush1.bf16.msra.mxu0 0
    %2293 = vmatprep.subr.bf16.mxu0 0
    %2294 = vmatpush1.bf16.msra.mxu0 0
    %2295 = vmatprep.mubr.bf16.mxu0 0
    %2296 = vmatmul.mubr.bf16.gmra.mrb[0].mxu0 %v2262
    %v2297 = vpop.f32.mrb[0].mxu0
    %v2298 = vadd.f32 %v873, %v2297
    %v2299 = vpop.f32.mrb[0].mxu0
    %v2300 = vadd.f32 %v877, %v2299
    %v2301 = vpop.f32.mrb[0].mxu0
    %v2302 = vpop.f32.mrb[0].mxu0
    %2303 = vdwg.mxu0
    %2304 = vmatprep.subr.bf16.mxu0 0
    %2305 = vmatpush1.bf16.msra.mxu0 %v967
    %2306 = vmatprep.subr.bf16.mxu0 0
    %2307 = vmatpush1.bf16.msra.mxu0 %v970
    %2308 = vmatprep.subr.bf16.mxu0 0
    %2309 = vmatpush1.bf16.msra.mxu0 %v973
    %2310 = vmatprep.subr.bf16.mxu0 0
    %2311 = vmatpush1.bf16.msra.mxu0 %v976
    %2312 = vmatprep.subr.bf16.mxu0 0
    %2313 = vmatpush1.bf16.msra.mxu0 %v979
    %2314 = vmatprep.subr.bf16.mxu0 0
    %2315 = vmatpush1.bf16.msra.mxu0 %v982
    %2316 = vmatprep.subr.bf16.mxu0 0
    %2317 = vmatpush1.bf16.msra.mxu0 %v985
    %2318 = vmatprep.subr.bf16.mxu0 0
    %2319 = vmatpush1.bf16.msra.mxu0 %v988
    %2320 = vmatprep.subr.bf16.mxu0 0
    %2321 = vmatpush1.bf16.msra.mxu0 0
    %2322 = vmatprep.subr.bf16.mxu0 0
    %2323 = vmatpush1.bf16.msra.mxu0 0
    %2324 = vmatprep.subr.bf16.mxu0 0
    %2325 = vmatpush1.bf16.msra.mxu0 0
    %2326 = vmatprep.subr.bf16.mxu0 0
    %2327 = vmatpush1.bf16.msra.mxu0 0
    %2328 = vmatprep.subr.bf16.mxu0 0
    %2329 = vmatpush1.bf16.msra.mxu0 0
    %2330 = vmatprep.subr.bf16.mxu0 0
    %2331 = vmatpush1.bf16.msra.mxu0 0
    %2332 = vmatprep.subr.bf16.mxu0 0
    %2333 = vmatpush1.bf16.msra.mxu0 0
    %2334 = vmatprep.subr.bf16.mxu0 0
    %2335 = vmatpush1.bf16.msra.mxu0 0
    %2336 = vmatprep.mubr.bf16.mxu0 0
    %2337 = vmatmul.mubr.bf16.gmra.mrb[0].mxu0 %v2262
    %v2338 = vpop.f32.mrb[0].mxu0
    %v2339 = vadd.f32 %v881, %v2338
    %v2340 = vpop.f32.mrb[0].mxu0
    %v2341 = vpop.f32.mrb[0].mxu0
    %v2342 = vpop.f32.mrb[0].mxu0
    %2343 = vdwg.mxu0
    %v2344 = vadd.f32 %v2298, %v2238
    %v2345 = vadd.f32 %v2300, %v2239
    %v2346 = vmul.f32 %v2344, 0.5
    %v2347 = vmul.f32 %v2345, 0.5
    %v2348 = vtanh.pop %v2346
    %v2349 = vtanh.pop %v2347
    %v2350 = vmul.f32 %v2348, 0.5
    %v2351 = vmul.f32 %v2349, 0.5
    %v2352 = vadd.f32 %v2350, 0.5
    %v2353 = vadd.f32 %v2351, 0.5
    %v2354 = vmul.f32 %v2352, %v2240
    %v2355 = vadd.f32 %v2339, %v2354
    %v2356 = vtanh.pop %v2355
    %v2357 = vsub.f32 1.0, %v2353
    %v2358 = vmul.f32 %v2357, %v2356
    %v2359 = vmul.f32 %v2353, %v2110
    %v2360 = vadd.f32 %v2358, %v2359
    %v2361 = vpack.c.bf16 %v2360, %v2360
    %2362 = vmatprep.subr.bf16.mxu0 %v464
    %2363 = vmatpush1.bf16.msra.mxu0 %v463
    %2364 = vmatprep.subr.bf16.mxu0 %v470
    %2365 = vmatpush1.bf16.msra.mxu0 %v469
    %2366 = vmatprep.subr.bf16.mxu0 %v476
    %2367 = vmatpush1.bf16.msra.mxu0 %v475
    %2368 = vmatprep.subr.bf16.mxu0 %v482
    %2369 = vmatpush1.bf16.msra.mxu0 %v481
    %2370 = vmatprep.subr.bf16.mxu0 %v488
    %2371 = vmatpush1.bf16.msra.mxu0 %v487
    %2372 = vmatprep.subr.bf16.mxu0 %v494
    %2373 = vmatpush1.bf16.msra.mxu0 %v493
    %2374 = vmatprep.subr.bf16.mxu0 %v500
    %2375 = vmatpush1.bf16.msra.mxu0 %v499
    %2376 = vmatprep.subr.bf16.mxu0 %v506
    %2377 = vmatpush1.bf16.msra.mxu0 %v505
    %2378 = vmatprep.subr.bf16.mxu0 %v512
    %2379 = vmatpush1.bf16.msra.mxu0 %v511
    %2380 = vmatprep.subr.bf16.mxu0 %v518
    %2381 = vmatpush1.bf16.msra.mxu0 %v517
    %2382 = vmatprep.subr.bf16.mxu0 %v524
    %2383 = vmatpush1.bf16.msra.mxu0 %v523
    %2384 = vmatprep.subr.bf16.mxu0 %v530
    %2385 = vmatpush1.bf16.msra.mxu0 %v529
    %2386 = vmatprep.subr.bf16.mxu0 %v536
    %2387 = vmatpush1.bf16.msra.mxu0 %v535
    %2388 = vmatprep.subr.bf16.mxu0 %v542
    %2389 = vmatpush1.bf16.msra.mxu0 %v541
    %2390 = vmatprep.subr.bf16.mxu0 %v548
    %2391 = vmatpush1.bf16.msra.mxu0 %v547
    %2392 = vmatprep.subr.bf16.mxu0 %v554
    %2393 = vmatpush1.bf16.msra.mxu0 %v553
    %2394 = vmatprep.mubr.bf16.mxu0 %v2361
    %2395 = vmatmul.mubr.bf16.gmra.mrb[0].mxu0 %v2262
    %v2396 = vpop.f32.mrb[0].mxu0
    %v2397 = vadd.f32 0.0, %v2396
    %v2398 = vpop.f32.mrb[0].mxu0
    %v2399 = vadd.f32 0.0, %v2398
    %v2400 = vpop.f32.mrb[0].mxu0
    %v2401 = vpop.f32.mrb[0].mxu0
    %2402 = vdwg.mxu0
    %2403 = vmatprep.subr.bf16.mxu0 %v466
    %2404 = vmatpush1.bf16.msra.mxu0 %v465
    %2405 = vmatprep.subr.bf16.mxu0 %v472
    %2406 = vmatpush1.bf16.msra.mxu0 %v471
    %2407 = vmatprep.subr.bf16.mxu0 %v478
    %2408 = vmatpush1.bf16.msra.mxu0 %v477
    %2409 = vmatprep.subr.bf16.mxu0 %v484
    %2410 = vmatpush1.bf16.msra.mxu0 %v483
    %2411 = vmatprep.subr.bf16.mxu0 %v490
    %2412 = vmatpush1.bf16.msra.mxu0 %v489
    %2413 = vmatprep.subr.bf16.mxu0 %v496
    %2414 = vmatpush1.bf16.msra.mxu0 %v495
    %2415 = vmatprep.subr.bf16.mxu0 %v502
    %2416 = vmatpush1.bf16.msra.mxu0 %v501
    %2417 = vmatprep.subr.bf16.mxu0 %v508
    %2418 = vmatpush1.bf16.msra.mxu0 %v507
    %2419 = vmatprep.subr.bf16.mxu0 %v514
    %2420 = vmatpush1.bf16.msra.mxu0 %v513
    %2421 = vmatprep.subr.bf16.mxu0 %v520
    %2422 = vmatpush1.bf16.msra.mxu0 %v519
    %2423 = vmatprep.subr.bf16.mxu0 %v526
    %2424 = vmatpush1.bf16.msra.mxu0 %v525
    %2425 = vmatprep.subr.bf16.mxu0 %v532
    %2426 = vmatpush1.bf16.msra.mxu0 %v531
    %2427 = vmatprep.subr.bf16.mxu0 %v538
    %2428 = vmatpush1.bf16.msra.mxu0 %v537
    %2429 = vmatprep.subr.bf16.mxu0 %v544
    %2430 = vmatpush1.bf16.msra.mxu0 %v543
    %2431 = vmatprep.subr.bf16.mxu0 %v550
    %2432 = vmatpush1.bf16.msra.mxu0 %v549
    %2433 = vmatprep.subr.bf16.mxu0 %v556
    %2434 = vmatpush1.bf16.msra.mxu0 %v555
    %2435 = vmatprep.mubr.bf16.mxu0 %v2361
    %2436 = vmatmul.mubr.bf16.gmra.mrb[0].mxu0 %v2262
    %v2437 = vpop.f32.mrb[0].mxu0
    %v2438 = vadd.f32 0.0, %v2437
    %v2439 = vpop.f32.mrb[0].mxu0
    %v2440 = vadd.f32 0.0, %v2439
    %v2441 = vpop.f32.mrb[0].mxu0
    %v2442 = vpop.f32.mrb[0].mxu0
    %2443 = vdwg.mxu0
    %2444 = vmatprep.subr.bf16.mxu0 %v468
    %2445 = vmatpush1.bf16.msra.mxu0 %v467
    %2446 = vmatprep.subr.bf16.mxu0 %v474
    %2447 = vmatpush1.bf16.msra.mxu0 %v473
    %2448 = vmatprep.subr.bf16.mxu0 %v480
    %2449 = vmatpush1.bf16.msra.mxu0 %v479
    %2450 = vmatprep.subr.bf16.mxu0 %v486
    %2451 = vmatpush1.bf16.msra.mxu0 %v485
    %2452 = vmatprep.subr.bf16.mxu0 %v492
    %2453 = vmatpush1.bf16.msra.mxu0 %v491
    %2454 = vmatprep.subr.bf16.mxu0 %v498
    %2455 = vmatpush1.bf16.msra.mxu0 %v497
    %2456 = vmatprep.subr.bf16.mxu0 %v504
    %2457 = vmatpush1.bf16.msra.mxu0 %v503
    %2458 = vmatprep.subr.bf16.mxu0 %v510
    %2459 = vmatpush1.bf16.msra.mxu0 %v509
    %2460 = vmatprep.subr.bf16.mxu0 %v516
    %2461 = vmatpush1.bf16.msra.mxu0 %v515
    %2462 = vmatprep.subr.bf16.mxu0 %v522
    %2463 = vmatpush1.bf16.msra.mxu0 %v521
    %2464 = vmatprep.subr.bf16.mxu0 %v528
    %2465 = vmatpush1.bf16.msra.mxu0 %v527
    %2466 = vmatprep.subr.bf16.mxu0 %v534
    %2467 = vmatpush1.bf16.msra.mxu0 %v533
    %2468 = vmatprep.subr.bf16.mxu0 %v540
    %2469 = vmatpush1.bf16.msra.mxu0 %v539
    %2470 = vmatprep.subr.bf16.mxu0 %v546
    %2471 = vmatpush1.bf16.msra.mxu0 %v545
    %2472 = vmatprep.subr.bf16.mxu0 %v552
    %2473 = vmatpush1.bf16.msra.mxu0 %v551
    %2474 = vmatprep.subr.bf16.mxu0 %v558
    %2475 = vmatpush1.bf16.msra.mxu0 %v557
    %2476 = vmatprep.mubr.bf16.mxu0 %v2361
    %2477 = vmatmul.mubr.bf16.gmra.mrb[0].mxu0 %v2262
    %v2478 = vpop.f32.mrb[0].mxu0
    %v2479 = vadd.f32 0.0, %v2478
    %v2480 = vpop.f32.mrb[0].mxu0
    %v2481 = vadd.f32 0.0, %v2480
    %v2482 = vpop.f32.mrb[0].mxu0
    %v2483 = vpop.f32.mrb[0].mxu0
    %2484 = vdwg.mxu0
    %v2485 = vadd.f32 %v2397, %v782
    %v2486 = vadd.f32 %v2399, %v786
    %v2487 = vadd.f32 %v2438, %v790
    %v2488 = vadd.f32 %v2440, %v801
    %v2489 = vadd.f32 %v2479, %v805
    %v2490 = vadd.f32 %v2481, %v809
    %s2491 = scalar_lea.vmem [#allocation2], 144
    %v2492 = vld [vmem:[%s2491] sm:$0xff]
    %v2493 = vld [vmem:[%s2491 + $0x8] sm:$0xff]
    %v2494 = vld [vmem:[%s2491 + $0x10] sm:$0xff]
    %v2495 = vadd.f32 %v2492, %v2485
    %v2496 = vadd.f32 %v2493, %v2486
    %v2497 = vmul.f32 %v2495, 0.5
    %v2498 = vmul.f32 %v2496, 0.5
    %v2499 = vtanh.pop %v2497
    %v2500 = vtanh.pop %v2498
    %v2501 = vmul.f32 %v2499, 0.5
    %v2502 = vmul.f32 %v2500, 0.5
    %v2503 = vadd.f32 %v2501, 0.5
    %v2504 = vadd.f32 %v2502, 0.5
    %v2505 = vmul.f32 %v2503, %v2487
    %v2506 = vadd.f32 %v2494, %v2505
    %v2507 = vtanh.pop %v2506
    %v2508 = vsub.f32 1.0, %v2504
    %v2509 = vmul.f32 %v2508, %v2507
    %v2510 = vmul.f32 %v2504, %v2261
    %v2511 = vadd.f32 %v2509, %v2510
    %v2512 = vpack.c.bf16 %v2511, %v2511
    %2513 = vmatprep.subr.bf16.mxu0 %v966
    %2514 = vmatpush1.bf16.msra.mxu0 %v965
    %2515 = vmatprep.subr.bf16.mxu0 %v969
    %2516 = vmatpush1.bf16.msra.mxu0 %v968
    %2517 = vmatprep.subr.bf16.mxu0 %v972
    %2518 = vmatpush1.bf16.msra.mxu0 %v971
    %2519 = vmatprep.subr.bf16.mxu0 %v975
    %2520 = vmatpush1.bf16.msra.mxu0 %v974
    %2521 = vmatprep.subr.bf16.mxu0 %v978
    %2522 = vmatpush1.bf16.msra.mxu0 %v977
    %2523 = vmatprep.subr.bf16.mxu0 %v981
    %2524 = vmatpush1.bf16.msra.mxu0 %v980
    %2525 = vmatprep.subr.bf16.mxu0 %v984
    %2526 = vmatpush1.bf16.msra.mxu0 %v983
    %2527 = vmatprep.subr.bf16.mxu0 %v987
    %2528 = vmatpush1.bf16.msra.mxu0 %v986
    %2529 = vmatprep.subr.bf16.mxu0 0
    %2530 = vmatpush1.bf16.msra.mxu0 0
    %2531 = vmatprep.subr.bf16.mxu0 0
    %2532 = vmatpush1.bf16.msra.mxu0 0
    %2533 = vmatprep.subr.bf16.mxu0 0
    %2534 = vmatpush1.bf16.msra.mxu0 0
    %2535 = vmatprep.subr.bf16.mxu0 0
    %2536 = vmatpush1.bf16.msra.mxu0 0
    %2537 = vmatprep.subr.bf16.mxu0 0
    %2538 = vmatpush1.bf16.msra.mxu0 0
    %2539 = vmatprep.subr.bf16.mxu0 0
    %2540 = vmatpush1.bf16.msra.mxu0 0
    %2541 = vmatprep.subr.bf16.mxu0 0
    %2542 = vmatpush1.bf16.msra.mxu0 0
    %2543 = vmatprep.subr.bf16.mxu0 0
    %2544 = vmatpush1.bf16.msra.mxu0 0
    %2545 = vmatprep.mubr.bf16.mxu0 0
    %2546 = vmatmul.mubr.bf16.gmra.mrb[0].mxu0 %v2512
    %v2547 = vpop.f32.mrb[0].mxu0
    %v2548 = vadd.f32 %v873, %v2547
    %v2549 = vpop.f32.mrb[0].mxu0
    %v2550 = vadd.f32 %v877, %v2549
    %v2551 = vpop.f32.mrb[0].mxu0
    %v2552 = vpop.f32.mrb[0].mxu0
    %2553 = vdwg.mxu0
    %2554 = vmatprep.subr.bf16.mxu0 0
    %2555 = vmatpush1.bf16.msra.mxu0 %v967
    %2556 = vmatprep.subr.bf16.mxu0 0
    %2557 = vmatpush1.bf16.msra.mxu0 %v970
    %2558 = vmatprep.subr.bf16.mxu0 0
    %2559 = vmatpush1.bf16.msra.mxu0 %v973
    %2560 = vmatprep.subr.bf16.mxu0 0
    %2561 = vmatpush1.bf16.msra.mxu0 %v976
    %2562 = vmatprep.subr.bf16.mxu0 0
    %2563 = vmatpush1.bf16.msra.mxu0 %v979
    %2564 = vmatprep.subr.bf16.mxu0 0
    %2565 = vmatpush1.bf16.msra.mxu0 %v982
    %2566 = vmatprep.subr.bf16.mxu0 0
    %2567 = vmatpush1.bf16.msra.mxu0 %v985
    %2568 = vmatprep.subr.bf16.mxu0 0
    %2569 = vmatpush1.bf16.msra.mxu0 %v988
    %2570 = vmatprep.subr.bf16.mxu0 0
    %2571 = vmatpush1.bf16.msra.mxu0 0
    %2572 = vmatprep.subr.bf16.mxu0 0
    %2573 = vmatpush1.bf16.msra.mxu0 0
    %2574 = vmatprep.subr.bf16.mxu0 0
    %2575 = vmatpush1.bf16.msra.mxu0 0
    %2576 = vmatprep.subr.bf16.mxu0 0
    %2577 = vmatpush1.bf16.msra.mxu0 0
    %2578 = vmatprep.subr.bf16.mxu0 0
    %2579 = vmatpush1.bf16.msra.mxu0 0
    %2580 = vmatprep.subr.bf16.mxu0 0
    %2581 = vmatpush1.bf16.msra.mxu0 0
    %2582 = vmatprep.subr.bf16.mxu0 0
    %2583 = vmatpush1.bf16.msra.mxu0 0
    %2584 = vmatprep.subr.bf16.mxu0 0
    %2585 = vmatpush1.bf16.msra.mxu0 0
    %2586 = vmatprep.mubr.bf16.mxu0 0
    %2587 = vmatmul.mubr.bf16.gmra.mrb[0].mxu0 %v2512
    %v2588 = vpop.f32.mrb[0].mxu0
    %v2589 = vadd.f32 %v881, %v2588
    %v2590 = vpop.f32.mrb[0].mxu0
    %v2591 = vpop.f32.mrb[0].mxu0
    %v2592 = vpop.f32.mrb[0].mxu0
    %2593 = vdwg.mxu0
    %v2594 = vadd.f32 %v2548, %v2488
    %v2595 = vadd.f32 %v2550, %v2489
    %v2596 = vmul.f32 %v2594, 0.5
    %v2597 = vmul.f32 %v2595, 0.5
    %v2598 = vtanh.pop %v2596
    %v2599 = vtanh.pop %v2597
    %v2600 = vmul.f32 %v2598, 0.5
    %v2601 = vmul.f32 %v2599, 0.5
    %v2602 = vadd.f32 %v2600, 0.5
    %v2603 = vadd.f32 %v2601, 0.5
    %v2604 = vmul.f32 %v2602, %v2490
    %v2605 = vadd.f32 %v2589, %v2604
    %v2606 = vtanh.pop %v2605
    %v2607 = vsub.f32 1.0, %v2603
    %v2608 = vmul.f32 %v2607, %v2606
    %v2609 = vmul.f32 %v2603, %v2360
    %v2610 = vadd.f32 %v2608, %v2609
    %v2611 = vpack.c.bf16 %v2610, %v2610
    %2612 = vmatprep.subr.bf16.mxu0 %v464
    %2613 = vmatpush1.bf16.msra.mxu0 %v463
    %2614 = vmatprep.subr.bf16.mxu0 %v470
    %2615 = vmatpush1.bf16.msra.mxu0 %v469
    %2616 = vmatprep.subr.bf16.mxu0 %v476
    %2617 = vmatpush1.bf16.msra.mxu0 %v475
    %2618 = vmatprep.subr.bf16.mxu0 %v482
    %2619 = vmatpush1.bf16.msra.mxu0 %v481
    %2620 = vmatprep.subr.bf16.mxu0 %v488
    %2621 = vmatpush1.bf16.msra.mxu0 %v487
    %2622 = vmatprep.subr.bf16.mxu0 %v494
    %2623 = vmatpush1.bf16.msra.mxu0 %v493
    %2624 = vmatprep.subr.bf16.mxu0 %v500
    %2625 = vmatpush1.bf16.msra.mxu0 %v499
    %2626 = vmatprep.subr.bf16.mxu0 %v506
    %2627 = vmatpush1.bf16.msra.mxu0 %v505
    %2628 = vmatprep.subr.bf16.mxu0 %v512
    %2629 = vmatpush1.bf16.msra.mxu0 %v511
    %2630 = vmatprep.subr.bf16.mxu0 %v518
    %2631 = vmatpush1.bf16.msra.mxu0 %v517
    %2632 = vmatprep.subr.bf16.mxu0 %v524
    %2633 = vmatpush1.bf16.msra.mxu0 %v523
    %2634 = vmatprep.subr.bf16.mxu0 %v530
    %2635 = vmatpush1.bf16.msra.mxu0 %v529
    %2636 = vmatprep.subr.bf16.mxu0 %v536
    %2637 = vmatpush1.bf16.msra.mxu0 %v535
    %2638 = vmatprep.subr.bf16.mxu0 %v542
    %2639 = vmatpush1.bf16.msra.mxu0 %v541
    %2640 = vmatprep.subr.bf16.mxu0 %v548
    %2641 = vmatpush1.bf16.msra.mxu0 %v547
    %2642 = vmatprep.subr.bf16.mxu0 %v554
    %2643 = vmatpush1.bf16.msra.mxu0 %v553
    %2644 = vmatprep.mubr.bf16.mxu0 %v2611
    %2645 = vmatmul.mubr.bf16.gmra.mrb[0].mxu0 %v2512
    %v2646 = vpop.f32.mrb[0].mxu0
    %v2647 = vadd.f32 0.0, %v2646
    %v2648 = vpop.f32.mrb[0].mxu0
    %v2649 = vadd.f32 0.0, %v2648
    %v2650 = vpop.f32.mrb[0].mxu0
    %v2651 = vpop.f32.mrb[0].mxu0
    %2652 = vdwg.mxu0
    %2653 = vmatprep.subr.bf16.mxu0 %v466
    %2654 = vmatpush1.bf16.msra.mxu0 %v465
    %2655 = vmatprep.subr.bf16.mxu0 %v472
    %2656 = vmatpush1.bf16.msra.mxu0 %v471
    %2657 = vmatprep.subr.bf16.mxu0 %v478
    %2658 = vmatpush1.bf16.msra.mxu0 %v477
    %2659 = vmatprep.subr.bf16.mxu0 %v484
    %2660 = vmatpush1.bf16.msra.mxu0 %v483
    %2661 = vmatprep.subr.bf16.mxu0 %v490
    %2662 = vmatpush1.bf16.msra.mxu0 %v489
    %2663 = vmatprep.subr.bf16.mxu0 %v496
    %2664 = vmatpush1.bf16.msra.mxu0 %v495
    %2665 = vmatprep.subr.bf16.mxu0 %v502
    %2666 = vmatpush1.bf16.msra.mxu0 %v501
    %2667 = vmatprep.subr.bf16.mxu0 %v508
    %2668 = vmatpush1.bf16.msra.mxu0 %v507
    %2669 = vmatprep.subr.bf16.mxu0 %v514
    %2670 = vmatpush1.bf16.msra.mxu0 %v513
    %2671 = vmatprep.subr.bf16.mxu0 %v520
    %2672 = vmatpush1.bf16.msra.mxu0 %v519
    %2673 = vmatprep.subr.bf16.mxu0 %v526
    %2674 = vmatpush1.bf16.msra.mxu0 %v525
    %2675 = vmatprep.subr.bf16.mxu0 %v532
    %2676 = vmatpush1.bf16.msra.mxu0 %v531
    %2677 = vmatprep.subr.bf16.mxu0 %v538
    %2678 = vmatpush1.bf16.msra.mxu0 %v537
    %2679 = vmatprep.subr.bf16.mxu0 %v544
    %2680 = vmatpush1.bf16.msra.mxu0 %v543
    %2681 = vmatprep.subr.bf16.mxu0 %v550
    %2682 = vmatpush1.bf16.msra.mxu0 %v549
    %2683 = vmatprep.subr.bf16.mxu0 %v556
    %2684 = vmatpush1.bf16.msra.mxu0 %v555
    %2685 = vmatprep.mubr.bf16.mxu0 %v2611
    %2686 = vmatmul.mubr.bf16.gmra.mrb[0].mxu0 %v2512
    %v2687 = vpop.f32.mrb[0].mxu0
    %v2688 = vadd.f32 0.0, %v2687
    %v2689 = vpop.f32.mrb[0].mxu0
    %v2690 = vadd.f32 0.0, %v2689
    %v2691 = vpop.f32.mrb[0].mxu0
    %v2692 = vpop.f32.mrb[0].mxu0
    %2693 = vdwg.mxu0
    %2694 = vmatprep.subr.bf16.mxu0 %v468
    %2695 = vmatpush1.bf16.msra.mxu0 %v467
    %2696 = vmatprep.subr.bf16.mxu0 %v474
    %2697 = vmatpush1.bf16.msra.mxu0 %v473
    %2698 = vmatprep.subr.bf16.mxu0 %v480
    %2699 = vmatpush1.bf16.msra.mxu0 %v479
    %2700 = vmatprep.subr.bf16.mxu0 %v486
    %2701 = vmatpush1.bf16.msra.mxu0 %v485
    %2702 = vmatprep.subr.bf16.mxu0 %v492
    %2703 = vmatpush1.bf16.msra.mxu0 %v491
    %2704 = vmatprep.subr.bf16.mxu0 %v498
    %2705 = vmatpush1.bf16.msra.mxu0 %v497
    %2706 = vmatprep.subr.bf16.mxu0 %v504
    %2707 = vmatpush1.bf16.msra.mxu0 %v503
    %2708 = vmatprep.subr.bf16.mxu0 %v510
    %2709 = vmatpush1.bf16.msra.mxu0 %v509
    %2710 = vmatprep.subr.bf16.mxu0 %v516
    %2711 = vmatpush1.bf16.msra.mxu0 %v515
    %2712 = vmatprep.subr.bf16.mxu0 %v522
    %2713 = vmatpush1.bf16.msra.mxu0 %v521
    %2714 = vmatprep.subr.bf16.mxu0 %v528
    %2715 = vmatpush1.bf16.msra.mxu0 %v527
    %2716 = vmatprep.subr.bf16.mxu0 %v534
    %2717 = vmatpush1.bf16.msra.mxu0 %v533
    %2718 = vmatprep.subr.bf16.mxu0 %v540
    %2719 = vmatpush1.bf16.msra.mxu0 %v539
    %2720 = vmatprep.subr.bf16.mxu0 %v546
    %2721 = vmatpush1.bf16.msra.mxu0 %v545
    %2722 = vmatprep.subr.bf16.mxu0 %v552
    %2723 = vmatpush1.bf16.msra.mxu0 %v551
    %2724 = vmatprep.subr.bf16.mxu0 %v558
    %2725 = vmatpush1.bf16.msra.mxu0 %v557
    %2726 = vmatprep.mubr.bf16.mxu0 %v2611
    %2727 = vmatmul.mubr.bf16.gmra.mrb[0].mxu0 %v2512
    %v2728 = vpop.f32.mrb[0].mxu0
    %v2729 = vadd.f32 0.0, %v2728
    %v2730 = vpop.f32.mrb[0].mxu0
    %v2731 = vadd.f32 0.0, %v2730
    %v2732 = vpop.f32.mrb[0].mxu0
    %v2733 = vpop.f32.mrb[0].mxu0
    %2734 = vdwg.mxu0
    %v2735 = vadd.f32 %v2647, %v782
    %v2736 = vadd.f32 %v2649, %v786
    %v2737 = vadd.f32 %v2688, %v790
    %v2738 = vadd.f32 %v2690, %v801
    %v2739 = vadd.f32 %v2729, %v805
    %v2740 = vadd.f32 %v2731, %v809
    %s2741 = scalar_lea.vmem [#allocation2], 168
    %v2742 = vld [vmem:[%s2741] sm:$0xff]
    %v2743 = vld [vmem:[%s2741 + $0x8] sm:$0xff]
    %v2744 = vld [vmem:[%s2741 + $0x10] sm:$0xff]
    %v2745 = vadd.f32 %v2742, %v2735
    %v2746 = vadd.f32 %v2743, %v2736
    %v2747 = vmul.f32 %v2745, 0.5
    %v2748 = vmul.f32 %v2746, 0.5
    %v2749 = vtanh.pop %v2747
    %v2750 = vtanh.pop %v2748
    %v2751 = vmul.f32 %v2749, 0.5
    %v2752 = vmul.f32 %v2750, 0.5
    %v2753 = vadd.f32 %v2751, 0.5
    %v2754 = vadd.f32 %v2752, 0.5
    %v2755 = vmul.f32 %v2753, %v2737
    %v2756 = vadd.f32 %v2744, %v2755
    %v2757 = vtanh.pop %v2756
    %v2758 = vsub.f32 1.0, %v2754
    %v2759 = vmul.f32 %v2758, %v2757
    %v2760 = vmul.f32 %v2754, %v2511
    %v2761 = vadd.f32 %v2759, %v2760
    %v2762 = vpack.c.bf16 %v2761, %v2761
    %2763 = vmatprep.subr.bf16.mxu0 %v966
    %2764 = vmatpush1.bf16.msra.mxu0 %v965
    %2765 = vmatprep.subr.bf16.mxu0 %v969
    %2766 = vmatpush1.bf16.msra.mxu0 %v968
    %2767 = vmatprep.subr.bf16.mxu0 %v972
    %2768 = vmatpush1.bf16.msra.mxu0 %v971
    %2769 = vmatprep.subr.bf16.mxu0 %v975
    %2770 = vmatpush1.bf16.msra.mxu0 %v974
    %2771 = vmatprep.subr.bf16.mxu0 %v978
    %2772 = vmatpush1.bf16.msra.mxu0 %v977
    %2773 = vmatprep.subr.bf16.mxu0 %v981
    %2774 = vmatpush1.bf16.msra.mxu0 %v980
    %2775 = vmatprep.subr.bf16.mxu0 %v984
    %2776 = vmatpush1.bf16.msra.mxu0 %v983
    %2777 = vmatprep.subr.bf16.mxu0 %v987
    %2778 = vmatpush1.bf16.msra.mxu0 %v986
    %2779 = vmatprep.subr.bf16.mxu0 0
    %2780 = vmatpush1.bf16.msra.mxu0 0
    %2781 = vmatprep.subr.bf16.mxu0 0
    %2782 = vmatpush1.bf16.msra.mxu0 0
    %2783 = vmatprep.subr.bf16.mxu0 0
    %2784 = vmatpush1.bf16.msra.mxu0 0
    %2785 = vmatprep.subr.bf16.mxu0 0
    %2786 = vmatpush1.bf16.msra.mxu0 0
    %2787 = vmatprep.subr.bf16.mxu0 0
    %2788 = vmatpush1.bf16.msra.mxu0 0
    %2789 = vmatprep.subr.bf16.mxu0 0
    %2790 = vmatpush1.bf16.msra.mxu0 0
    %2791 = vmatprep.subr.bf16.mxu0 0
    %2792 = vmatpush1.bf16.msra.mxu0 0
    %2793 = vmatprep.subr.bf16.mxu0 0
    %2794 = vmatpush1.bf16.msra.mxu0 0
    %2795 = vmatprep.mubr.bf16.mxu0 0
    %2796 = vmatmul.mubr.bf16.gmra.mrb[0].mxu0 %v2762
    %v2797 = vpop.f32.mrb[0].mxu0
    %v2798 = vadd.f32 %v873, %v2797
    %v2799 = vpop.f32.mrb[0].mxu0
    %v2800 = vadd.f32 %v877, %v2799
    %v2801 = vpop.f32.mrb[0].mxu0
    %v2802 = vpop.f32.mrb[0].mxu0
    %2803 = vdwg.mxu0
    %2804 = vmatprep.subr.bf16.mxu0 0
    %2805 = vmatpush1.bf16.msra.mxu0 %v967
    %2806 = vmatprep.subr.bf16.mxu0 0
    %2807 = vmatpush1.bf16.msra.mxu0 %v970
    %2808 = vmatprep.subr.bf16.mxu0 0
    %2809 = vmatpush1.bf16.msra.mxu0 %v973
    %2810 = vmatprep.subr.bf16.mxu0 0
    %2811 = vmatpush1.bf16.msra.mxu0 %v976
    %2812 = vmatprep.subr.bf16.mxu0 0
    %2813 = vmatpush1.bf16.msra.mxu0 %v979
    %2814 = vmatprep.subr.bf16.mxu0 0
    %2815 = vmatpush1.bf16.msra.mxu0 %v982
    %2816 = vmatprep.subr.bf16.mxu0 0
    %2817 = vmatpush1.bf16.msra.mxu0 %v985
    %2818 = vmatprep.subr.bf16.mxu0 0
    %2819 = vmatpush1.bf16.msra.mxu0 %v988
    %2820 = vmatprep.subr.bf16.mxu0 0
    %2821 = vmatpush1.bf16.msra.mxu0 0
    %2822 = vmatprep.subr.bf16.mxu0 0
    %2823 = vmatpush1.bf16.msra.mxu0 0
    %2824 = vmatprep.subr.bf16.mxu0 0
    %2825 = vmatpush1.bf16.msra.mxu0 0
    %2826 = vmatprep.subr.bf16.mxu0 0
    %2827 = vmatpush1.bf16.msra.mxu0 0
    %2828 = vmatprep.subr.bf16.mxu0 0
    %2829 = vmatpush1.bf16.msra.mxu0 0
    %2830 = vmatprep.subr.bf16.mxu0 0
    %2831 = vmatpush1.bf16.msra.mxu0 0
    %2832 = vmatprep.subr.bf16.mxu0 0
    %2833 = vmatpush1.bf16.msra.mxu0 0
    %2834 = vmatprep.subr.bf16.mxu0 0
    %2835 = vmatpush1.bf16.msra.mxu0 0
    %2836 = vmatprep.mubr.bf16.mxu0 0
    %2837 = vmatmul.mubr.bf16.gmra.mrb[0].mxu0 %v2762
    %v2838 = vpop.f32.mrb[0].mxu0
    %v2839 = vadd.f32 %v881, %v2838
    %v2840 = vpop.f32.mrb[0].mxu0
    %v2841 = vpop.f32.mrb[0].mxu0
    %v2842 = vpop.f32.mrb[0].mxu0
    %2843 = vdwg.mxu0
    %v2844 = vadd.f32 %v2798, %v2738
    %v2845 = vadd.f32 %v2800, %v2739
    %v2846 = vmul.f32 %v2844, 0.5
    %v2847 = vmul.f32 %v2845, 0.5
    %v2848 = vtanh.pop %v2846
    %v2849 = vtanh.pop %v2847
    %v2850 = vmul.f32 %v2848, 0.5
    %v2851 = vmul.f32 %v2849, 0.5
    %v2852 = vadd.f32 %v2850, 0.5
    %v2853 = vadd.f32 %v2851, 0.5
    %v2854 = vmul.f32 %v2852, %v2740
    %v2855 = vadd.f32 %v2839, %v2854
    %v2856 = vtanh.pop %v2855
    %v2857 = vsub.f32 1.0, %v2853
    %v2858 = vmul.f32 %v2857, %v2856
    %v2859 = vmul.f32 %v2853, %v2610
    %v2860 = vadd.f32 %v2858, %v2859
    %v2861 = vlaneseq
    %v2862 = vshrl.u32 %v2861, 7
    %v2863 = vsub.s32 0, %v2862
    %v2864 = vrot.slane %v77, %v2863
    %v2865 = vmul.f32 %v2860, %v2864
    %2866 = vadd.xlane.f32.xlu0 %v2865
    %v2867 = vpop.xlane.xlu0 %2866
    %v2868 = vlaneseq
    %v2869 = vshrl.u32 %v2868, 7
    %v2870 = vsub.s32 0, %v2869
    %v2871 = vrot.slane %v78, %v2870
    %v2872 = vadd.f32 %v2867, %v2871
    %2874 = vset.pattern.permute.xlu0 0
    %2875 = vperm.xlu0 %2874, %v2872
    %v2876 = vpop.permute.xlu0 %2875
    %2878 = vst [vmem:[#allocation10] sm:$0xff] %v2876
    // Predicated region
    $region34: #{tpu_custom_call.1} parent=1 // pred_check
      _
    $region35: #{tpu_custom_call.1} parent=1 // pred_check_branch
      %2880 = sbr.rel (0) target = $region37
    $region36: #{tpu_custom_call.1} parent=1 // pred_region
      %s2882 = ssub.s32 128, 128
      %2883 = vsyncadd [#allocation4], %s2882
      %s2885 = sshll.u32 [#allocation10], 4
      %s2886 = int_to_ptr.vmem [resolvable:$true] %s2885
      %2888 = dma.vmem_to_hbm [thread:$0]  %s2886, 128, %s4, [#allocation4]
    $region37: #{tpu_custom_call.1} parent=1 // pred_fallthru
      _
    // Predicated region
    $region38: #{tpu_custom_call.1} parent=1 // pred_check
      _
    $region39: #{tpu_custom_call.1} parent=1 // pred_check_branch
      %2890 = sbr.rel (0) target = $region41
    $region40: #{tpu_custom_call.1} parent=1 // pred_region
      %2891 = dma.done [#allocation4], 128
    $region41: #{tpu_custom_call.1} parent=1 // pred_fallthru
      _
    %2892 = vsyncpa [#allocation3], 1
    %2893 = vsyncpa [#allocation6], 1
    %2894 = vsyncpa [#allocation9], 1
    %2895 = vsyncpa [#allocation4], 1

</llo_original>
